<compile_context>
chip_gen: v7x
topology: tpu7x:2x2x1
jax: 0.10.0
libtpu: 0.0.40
codegen_flags: <defaults>
</compile_context>

<pallas_src>
import functools
from math import sqrt

import jax
import jax.numpy as jnp
from jax.experimental import pallas as pl
from jax.experimental.pallas import tpu as pltpu


def _round_up(x, m):
    return (x + m - 1) // m * m


def _vmem_budget_bytes():
    """~3/4 of physical VMEM for this chip generation (headroom for compiler scratch)."""
    cap = 64 * 1024 * 1024
    try:
        info = pltpu.get_tpu_info()
        cap = int(getattr(info, "vmem_capacity_bytes", cap))
    except Exception:
        pass
    return (cap * 3) // 4


def _choose_row_tile(H1, W1p, Wp_pad, Cin, Cout, M, act_bytes, use_concat, budget):
    """Largest multiple-of-8 output-row tile whose per-step working set fits the budget."""
    th = _round_up(H1, 8)

    def footprint(t):
        in_blk = 2 * (t + M - 1) * Wp_pad * Cin * act_bytes          # double-buffered input slab
        out_blk = 2 * t * W1p * 4 * Cout * act_bytes                 # double-buffered output tile
        wgt = M * M * Cin * 4 * Cout * act_bytes + 16 * Cout         # resident weight + bias
        acc = t * W1p * 4 * Cout * 4                                 # f32 dot result
        tmp = t * W1p * (M * M if use_concat else 1) * Cin * act_bytes  # im2col / tap slab
        return in_blk + out_blk + wgt + acc + tmp

    while th > 8 and footprint(th) > budget:
        th -= 8
    return max(th, 8)


def _fused_upsample_kernel(x_ref, w_ref, b_ref, o_ref, *, M, TH, W1p, Cin, use_concat):
    # x_ref : (TH + M - 1, Wp_pad, Cin)  input row slab incl. (M-1)-row/col halo
    # w_ref : (M*M*Cin, 4*Cout)          phase-packed, pre-flipped fused weight (resident)
    # b_ref : (1, 4*Cout)                f32 bias tiled over the 4 output phases (resident)
    # o_ref : (TH*W1p, 4*Cout)           all 4 upsample phases for TH output rows, lane-dense
    x = x_ref[...]
    rows = TH * W1p
    taps = [(mp, nn) for mp in range(M) for nn in range(M)]

    if use_concat:
        # Small Cin: concatenate the M*M taps on the lane axis -> one deep MXU contraction.
        lhs = jnp.concatenate(
            [x[mp:mp + TH, nn:nn + W1p, :] for (mp, nn) in taps], axis=-1
        ).reshape(rows, M * M * Cin)
        acc = jnp.dot(lhs, w_ref[...], preferred_element_type=jnp.float32)
    else:
        # Large Cin: accumulate M*M partial dots in f32 -- no M*M x patch materialization.
        acc = None
        for t, (mp, nn) in enumerate(taps):
            slab = x[mp:mp + TH, nn:nn + W1p, :].reshape(rows, Cin)
            part = jnp.dot(slab, w_ref[t * Cin:(t + 1) * Cin, :],
                           preferred_element_type=jnp.float32)
            acc = part if acc is None else acc + part

    # Single-pass bias add + cast + store (keeps the v5e store slot single-pass).
    o_ref[...] = (acc + b_ref[...]).astype(o_ref.dtype)


def fused_upsample(x_nchw, weight, bias, multiplier, pad, *,
                   compute_dtype=jnp.bfloat16, use_concat=None):
    """x_nchw: (N, Cin, H, W).  weight: (Cin, Cout, k, k) (conv_transpose layout).  bias: (Cout,)."""
    Cin, Cout, k, _ = weight.shape
    K = k + 1
    assert K % 2 == 0, "kernel_size must be odd so K = kernel_size + 1 is even"
    M = K // 2

    N, C, H, W = x_nchw.shape
    assert C == Cin
    if use_concat is None:
        use_concat = Cin < 64       # deep contraction only needed for small Cin layers

    # --- weight fusion (tiny tensors, wrapper glue) -------------------------------
    w = weight.astype(jnp.float32) * multiplier
    w = jnp.pad(w, ((0, 0), (0, 0), (1, 1), (1, 1)))
    w = (w[:, :, 1:, 1:] + w[:, :, :-1, 1:] + w[:, :, 1:, :-1] + w[:, :, :-1, :-1]) * 0.25
    # w: (Cin, Cout, K, K)

    # Phase/flip packing:
    #   Wmat[(m', n', i), (ry, rx, o)] = w[i, o, ry + 2*(M-1-m'), rx + 2*(M-1-n')]
    sel = jnp.arange(2)[None, :] + 2 * (M - 1 - jnp.arange(M))[:, None]       # (M, 2): [m', r]
    w_sel = w[:, :, sel[:, :, None, None], sel[None, None, :, :]]             # (Cin,Cout,M,2,M,2)
    w_mat = jnp.transpose(w_sel, (2, 4, 0, 3, 5, 1)).reshape(M * M * Cin, 4 * Cout)
    w_mat = w_mat.astype(compute_dtype)
    # TODO(synk): on v7x, optionally pre-quantize the static per-layer w_mat to fp8 with a
    # per-output-channel scale folded into the post-dot bias for ~2x MXU throughput.
    b4 = jnp.tile(bias.astype(jnp.float32), 4).reshape(1, 4 * Cout)

    # --- tiling geometry ---------------------------------------------------------
    H1, W1 = H + M - 1, W + M - 1
    W1p = _round_up(W1, 8)               # 8-aligned row width -> free (TH,W1p,C)->(TH*W1p,C) view
    Wp_pad = W1p + M - 1
    act_bytes = jnp.dtype(compute_dtype).itemsize
    budget = _vmem_budget_bytes()
    TH = _choose_row_tile(H1, W1p, Wp_pad, Cin, Cout, M, act_bytes, use_concat, budget)
    nT = -(-H1 // TH)
    H1pad = nT * TH
    Hp_pad = H1pad + M - 1

    # --- activation layout: NHWC + zero pad + pre-split row tiles with (M-1)-row halo
    x = jnp.transpose(x_nchw.astype(compute_dtype), (0, 2, 3, 1))             # NHWC, bf16 fast path
    x = jnp.pad(x, ((0, 0),
                    (M - 1, Hp_pad - H - (M - 1)),
                    (M - 1, Wp_pad - W - (M - 1)),
                    (0, 0)))
    x_tiles = jnp.stack([x[:, j * TH:j * TH + TH + M - 1] for j in range(nT)], axis=1)
    # x_tiles: (N, nT, TH + M - 1, Wp_pad, Cin)

    kernel = functools.partial(_fused_upsample_kernel, M=M, TH=TH, W1p=W1p,
                               Cin=Cin, use_concat=use_concat)

    def run(single_buffer_resident):
        res = {"pipeline_mode": pl.Buffered(1)} if single_buffer_resident else {}
        return pl.pallas_call(
            kernel,
            out_shape=jax.ShapeDtypeStruct((N, nT, TH * W1p, 4 * Cout), compute_dtype),
            grid=(N, nT),
            in_specs=[
                pl.BlockSpec((None, None, TH + M - 1, Wp_pad, Cin),
                             lambda n, j: (n, j, 0, 0, 0)),                    # halo'd row slab
                pl.BlockSpec((M * M * Cin, 4 * Cout), lambda n, j: (0, 0), **res),  # resident W
                pl.BlockSpec((1, 4 * Cout), lambda n, j: (0, 0), **res),            # resident b
            ],
            out_specs=pl.BlockSpec((None, None, TH * W1p, 4 * Cout),
                                   lambda n, j: (n, j, 0, 0)),
            compiler_params=pltpu.CompilerParams(
                dimension_semantics=("parallel", "parallel"),   # both TCs busy on v7x even at N=1
                vmem_limit_bytes=int(budget),
            ),
        )(x_tiles, w_mat, b4)

    try:
        out2d = run(True)     # single-buffer the grid-resident weight/bias blocks
    except Exception:
        out2d = run(False)    # fallback: default double-buffering (same semantics)

    # --- depth-to-space (interleave the 4 phases) + crop + back to NCHW ----------
    out = out2d.reshape(N, H1pad, W1p, 2, 2, Cout)
    out = jnp.transpose(out, (0, 1, 3, 2, 4, 5)).reshape(N, 2 * H1pad, 2 * W1p, Cout)
    out = out[:, pad:2 * H1 - pad, pad:2 * W1 - pad, :]
    return jnp.transpose(out, (0, 3, 1, 2)).astype(x_nchw.dtype)


class FusedUpsample:
    """JAX/Pallas port of the PyTorch FusedUpsample module (StyleGAN)."""

    def __init__(self, in_channel, out_channel, kernel_size, padding=0, *, key,
                 compute_dtype=jnp.bfloat16):
        self.weight = jax.random.normal(
            key, (in_channel, out_channel, kernel_size, kernel_size), jnp.float32
        )
        self.bias = jnp.zeros((out_channel,), jnp.float32)
        self.multiplier = sqrt(2 / (in_channel * kernel_size * kernel_size))
        self.pad = padding
        self.compute_dtype = compute_dtype

    def __call__(self, x_nchw):
        return fused_upsample(x_nchw, self.weight, self.bias, self.multiplier, self.pad,
                              compute_dtype=self.compute_dtype)


def _reference(x_nchw, weight, bias, multiplier, pad):
    """Pure-JAX reference mirroring the PyTorch forward exactly."""
    w = weight * multiplier
    w = jnp.pad(w, ((0, 0), (0, 0), (1, 1), (1, 1)))
    w = (w[:, :, 1:, 1:] + w[:, :, :-1, 1:] + w[:, :, 1:, :-1] + w[:, :, :-1, :-1]) * 0.25
    K = w.shape[-1]
    # conv_transpose2d(x, w, stride=2, padding=p) ==
    #   conv(dilate_2(x), flip(w) with in/out channels swapped, padding = K-1-p)
    w_conv = jnp.transpose(w[:, :, ::-1, ::-1], (1, 0, 2, 3))                 # (Cout, Cin, K, K)
    out = jax.lax.conv_general_dilated(
        x_nchw, w_conv,
        window_strides=(1, 1),
        padding=[(K - 1 - pad, K - 1 - pad)] * 2,
        lhs_dilation=(2, 2),
        dimension_numbers=("NCHW", "OIHW", "NCHW"),
        precision=jax.lax.Precision.HIGHEST,
    )
    return out + bias[None, :, None, None]


if __name__ == "__main__":
    key = jax.random.PRNGKey(0)
    k_w, k_b, k_x = jax.random.split(key, 3)

    N, Cin, Cout, H, W = 2, 4, 8, 16, 16
    kernel_size, padding = 3, 1

    mod = FusedUpsample(Cin, Cout, kernel_size, padding=padding, key=k_w)
    mod.bias = 0.1 * jax.random.normal(k_b, (Cout,), jnp.float32)   # exercise the bias path
    x = jax.random.normal(k_x, (N, Cin, H, W), jnp.float32)

    ref = _reference(x, mod.weight, mod.bias, mod.multiplier, mod.pad)
    expected = (N, Cout, 2 * H + 2 - 2 * padding, 2 * W + 2 - 2 * padding)
    assert ref.shape == expected, ref.shape

    # 1) Exact-math path (f32 MXU) with the fat im2col-concat body (small-Cin path).
    out_f32 = jax.block_until_ready(
        fused_upsample(x, mod.weight, mod.bias, mod.multiplier, mod.pad,
                       compute_dtype=jnp.float32))
    assert out_f32.shape == expected, out_f32.shape
    err = float(jnp.max(jnp.abs(out_f32 - ref)))
    assert jnp.allclose(out_f32, ref, atol=2e-4, rtol=2e-4), err

    # 2) Exact-math check of the accumulated partial-dot body (used for Cin >= 64).
    out_pd = jax.block_until_ready(
        fused_upsample(x, mod.weight, mod.bias, mod.multiplier, mod.pad,
                       compute_dtype=jnp.float32, use_concat=False))
    err = float(jnp.max(jnp.abs(out_pd - ref)))
    assert jnp.allclose(out_pd, ref, atol=2e-4, rtol=2e-4), err

    # 3) Default fast path: bf16 activations/weights on the MXU, f32 accumulation.
    out_bf16 = jax.block_until_ready(mod(x))
    assert out_bf16.shape == expected, out_bf16.shape
    err = float(jnp.max(jnp.abs(out_bf16 - ref)))
    assert jnp.allclose(out_bf16, ref, atol=5e-2, rtol=5e-2), err

    print("KERNEL_OK")
</pallas_src>

<mosaic_0001>
module attributes {stable_mosaic.version = 11 : i64} {
  func.func @_fused_upsample_kernel(%arg0: i32, %arg1: i32, %arg2: memref<1x1x25x25x4xf32, #tpu.memory_space<vmem>>, %arg3: memref<16x32xf32, #tpu.memory_space<vmem>>, %arg4: memref<1x32xf32, #tpu.memory_space<vmem>>, %arg5: memref<1x1x576x32xf32, #tpu.memory_space<vmem>>) attributes {dimension_semantics = [#tpu.dimension_semantics<parallel>, #tpu.dimension_semantics<parallel>], iteration_bounds = array<i64: 2, 1>, scalar_prefetch = 0 : i64, scratch_operands = 0 : i64, tpu.core_type = #tpu.core_type<tc>, window_params = [{transform_indices = @transform_0, window_bounds = array<i64: 1, 1, 25, 25, 4>}, {pipeline_mode = #tpu.pipeline_mode<synchronous>, transform_indices = @transform_1, window_bounds = array<i64: 16, 32>}, {pipeline_mode = #tpu.pipeline_mode<synchronous>, transform_indices = @transform_2, window_bounds = array<i64: 1, 32>}, {transform_indices = @transform_3, window_bounds = array<i64: 1, 1, 576, 32>}]} {
    %c0 = arith.constant 0 : index
    %c0_0 = arith.constant 0 : index
    %c0_1 = arith.constant 0 : index
    %c0_2 = arith.constant 0 : index
    %c0_3 = arith.constant 0 : index
    %0 = vector.load %arg2[%c0, %c0_0, %c0_1, %c0_2, %c0_3] : memref<1x1x25x25x4xf32, #tpu.memory_space<vmem>>, vector<1x1x25x25x4xf32>
    %1 = vector.shape_cast %0 : vector<1x1x25x25x4xf32> to vector<25x25x4xf32>
    %2 = vector.extract_strided_slice %1 {offsets = [0, 0, 0], sizes = [24, 24, 4], strides = [1, 1, 1]} : vector<25x25x4xf32> to vector<24x24x4xf32>
    %3 = vector.extract_strided_slice %1 {offsets = [0, 1, 0], sizes = [24, 24, 4], strides = [1, 1, 1]} : vector<25x25x4xf32> to vector<24x24x4xf32>
    %4 = vector.extract_strided_slice %1 {offsets = [1, 0, 0], sizes = [24, 24, 4], strides = [1, 1, 1]} : vector<25x25x4xf32> to vector<24x24x4xf32>
    %5 = vector.extract_strided_slice %1 {offsets = [1, 1, 0], sizes = [24, 24, 4], strides = [1, 1, 1]} : vector<25x25x4xf32> to vector<24x24x4xf32>
    %6 = tpu.concatenate %2, %3, %4, %5 in 2 : vector<24x24x4xf32>, vector<24x24x4xf32>, vector<24x24x4xf32>, vector<24x24x4xf32> -> vector<24x24x16xf32>
    %7 = vector.shape_cast %6 : vector<24x24x16xf32> to vector<576x16xf32>
    %c0_4 = arith.constant 0 : index
    %c0_5 = arith.constant 0 : index
    %8 = vector.load %arg3[%c0_4, %c0_5] : memref<16x32xf32, #tpu.memory_space<vmem>>, vector<16x32xf32>
    %cst = arith.constant dense<0.000000e+00> : vector<576x32xf32>
    %9 = tpu.matmul %7, %8, %cst {dimension_numbers = #tpu.dot_dimension_numbers<[1], [0], [0], [1], [0, 0, 1, 1], [], []>} : vector<576x16xf32>, vector<16x32xf32>, vector<576x32xf32> -> vector<576x32xf32>
    %c0_6 = arith.constant 0 : index
    %c0_7 = arith.constant 0 : index
    %10 = vector.load %arg4[%c0_6, %c0_7] : memref<1x32xf32, #tpu.memory_space<vmem>>, vector<1x32xf32>
    %11 = vector.broadcast %10 : vector<1x32xf32> to vector<576x32xf32>
    %12 = arith.addf %9, %11 : vector<576x32xf32>
    %c0_8 = arith.constant 0 : index
    %c0_9 = arith.constant 0 : index
    %c0_10 = arith.constant 0 : index
    %c0_11 = arith.constant 0 : index
    %13 = vector.load %arg5[%c0_8, %c0_9, %c0_10, %c0_11] : memref<1x1x576x32xf32, #tpu.memory_space<vmem>>, vector<1x1x576x32xf32>
    %14 = vector.shape_cast %13 : vector<1x1x576x32xf32> to vector<576x32xf32>
    %15 = vector.shape_cast %12 : vector<576x32xf32> to vector<1x1x576x32xf32>
    tpu.vector_store %arg5[%c0_8, %c0_9, %c0_10, %c0_11], %15 {strides = array<i32>} : memref<1x1x576x32xf32, #tpu.memory_space<vmem>>, vector<1x1x576x32xf32>,
    return
  }
  func.func @transform_0(%arg0: i32, %arg1: i32) -> (i32, i32, i32, i32, i32) {
    %c0_i32 = arith.constant 0 : i32
    %c0_i32_0 = arith.constant 0 : i32
    %c0_i32_1 = arith.constant 0 : i32
    %c0_i32_2 = arith.constant 0 : i32
    return %arg0, %arg1, %c0_i32, %c0_i32_0, %c0_i32_1 : i32, i32, i32, i32, i32
  }
  func.func @transform_1(%arg0: i32, %arg1: i32) -> (i32, i32) {
    %c0_i32 = arith.constant 0 : i32
    %c0_i32_0 = arith.constant 0 : i32
    %c0_i32_1 = arith.constant 0 : i32
    return %c0_i32, %c0_i32_0 : i32, i32
  }
  func.func @transform_2(%arg0: i32, %arg1: i32) -> (i32, i32) {
    %c0_i32 = arith.constant 0 : i32
    %c0_i32_0 = arith.constant 0 : i32
    %c0_i32_1 = arith.constant 0 : i32
    return %c0_i32, %c0_i32_0 : i32, i32
  }
  func.func @transform_3(%arg0: i32, %arg1: i32) -> (i32, i32, i32, i32) {
    %c0_i32 = arith.constant 0 : i32
    %c0_i32_0 = arith.constant 0 : i32
    %c0_i32_1 = arith.constant 0 : i32
    return %arg0, %arg1, %c0_i32, %c0_i32_0 : i32, i32, i32, i32
  }
}

module attributes {stable_mosaic.version = 11 : i64} {
  func.func @_fused_upsample_kernel(%arg0: i32, %arg1: i32, %arg2: memref<1x1x25x25x4xf32, #tpu.memory_space<vmem>>, %arg3: memref<16x32xf32, #tpu.memory_space<vmem>>, %arg4: memref<1x32xf32, #tpu.memory_space<vmem>>, %arg5: memref<1x1x576x32xf32, #tpu.memory_space<vmem>>) attributes {dimension_semantics = [#tpu.dimension_semantics<parallel>, #tpu.dimension_semantics<parallel>], iteration_bounds = array<i64: 2, 1>, scalar_prefetch = 0 : i64, scratch_operands = 0 : i64, tpu.core_type = #tpu.core_type<tc>, window_params = [{transform_indices = @transform_0, window_bounds = array<i64: 1, 1, 25, 25, 4>}, {pipeline_mode = #tpu.pipeline_mode<synchronous>, transform_indices = @transform_1, window_bounds = array<i64: 16, 32>}, {pipeline_mode = #tpu.pipeline_mode<synchronous>, transform_indices = @transform_2, window_bounds = array<i64: 1, 32>}, {transform_indices = @transform_3, window_bounds = array<i64: 1, 1, 576, 32>}]} {
    %c0 = arith.constant 0 : index
    %c0_0 = arith.constant 0 : index
    %c0_1 = arith.constant 0 : index
    %c0_2 = arith.constant 0 : index
    %c0_3 = arith.constant 0 : index
    %0 = vector.load %arg2[%c0, %c0_0, %c0_1, %c0_2, %c0_3] : memref<1x1x25x25x4xf32, #tpu.memory_space<vmem>>, vector<1x1x25x25x4xf32>
    %1 = vector.shape_cast %0 : vector<1x1x25x25x4xf32> to vector<25x25x4xf32>
    %2 = vector.extract_strided_slice %1 {offsets = [0, 0, 0], sizes = [24, 24, 4], strides = [1, 1, 1]} : vector<25x25x4xf32> to vector<24x24x4xf32>
    %3 = vector.extract_strided_slice %1 {offsets = [0, 1, 0], sizes = [24, 24, 4], strides = [1, 1, 1]} : vector<25x25x4xf32> to vector<24x24x4xf32>
    %4 = vector.extract_strided_slice %1 {offsets = [1, 0, 0], sizes = [24, 24, 4], strides = [1, 1, 1]} : vector<25x25x4xf32> to vector<24x24x4xf32>
    %5 = vector.extract_strided_slice %1 {offsets = [1, 1, 0], sizes = [24, 24, 4], strides = [1, 1, 1]} : vector<25x25x4xf32> to vector<24x24x4xf32>
    %6 = tpu.concatenate %2, %3, %4, %5 in 2 : vector<24x24x4xf32>, vector<24x24x4xf32>, vector<24x24x4xf32>, vector<24x24x4xf32> -> vector<24x24x16xf32>
    %7 = vector.shape_cast %6 : vector<24x24x16xf32> to vector<576x16xf32>
    %c0_4 = arith.constant 0 : index
    %c0_5 = arith.constant 0 : index
    %8 = vector.load %arg3[%c0_4, %c0_5] : memref<16x32xf32, #tpu.memory_space<vmem>>, vector<16x32xf32>
    %cst = arith.constant dense<0.000000e+00> : vector<576x32xf32>
    %9 = tpu.matmul %7, %8, %cst {dimension_numbers = #tpu.dot_dimension_numbers<[1], [0], [0], [1], [0, 0, 1, 1], [], []>} : vector<576x16xf32>, vector<16x32xf32>, vector<576x32xf32> -> vector<576x32xf32>
    %c0_6 = arith.constant 0 : index
    %c0_7 = arith.constant 0 : index
    %10 = vector.load %arg4[%c0_6, %c0_7] : memref<1x32xf32, #tpu.memory_space<vmem>>, vector<1x32xf32>
    %11 = vector.broadcast %10 : vector<1x32xf32> to vector<576x32xf32>
    %12 = arith.addf %9, %11 : vector<576x32xf32>
    %c0_8 = arith.constant 0 : index
    %c0_9 = arith.constant 0 : index
    %c0_10 = arith.constant 0 : index
    %c0_11 = arith.constant 0 : index
    %13 = vector.load %arg5[%c0_8, %c0_9, %c0_10, %c0_11] : memref<1x1x576x32xf32, #tpu.memory_space<vmem>>, vector<1x1x576x32xf32>
    %14 = vector.shape_cast %13 : vector<1x1x576x32xf32> to vector<576x32xf32>
    %15 = vector.shape_cast %12 : vector<576x32xf32> to vector<1x1x576x32xf32>
    tpu.vector_store %arg5[%c0_8, %c0_9, %c0_10, %c0_11], %15 {strides = array<i32>} : memref<1x1x576x32xf32, #tpu.memory_space<vmem>>, vector<1x1x576x32xf32>,
    return
  }
  func.func @transform_0(%arg0: i32, %arg1: i32) -> (i32, i32, i32, i32, i32) {
    %c0_i32 = arith.constant 0 : i32
    %c0_i32_0 = arith.constant 0 : i32
    %c0_i32_1 = arith.constant 0 : i32
    %c0_i32_2 = arith.constant 0 : i32
    return %arg0, %arg1, %c0_i32, %c0_i32_0, %c0_i32_1 : i32, i32, i32, i32, i32
  }
  func.func @transform_1(%arg0: i32, %arg1: i32) -> (i32, i32) {
    %c0_i32 = arith.constant 0 : i32
    %c0_i32_0 = arith.constant 0 : i32
    %c0_i32_1 = arith.constant 0 : i32
    return %c0_i32, %c0_i32_0 : i32, i32
  }
  func.func @transform_2(%arg0: i32, %arg1: i32) -> (i32, i32) {
    %c0_i32 = arith.constant 0 : i32
    %c0_i32_0 = arith.constant 0 : i32
    %c0_i32_1 = arith.constant 0 : i32
    return %c0_i32, %c0_i32_0 : i32, i32
  }
  func.func @transform_3(%arg0: i32, %arg1: i32) -> (i32, i32, i32, i32) {
    %c0_i32 = arith.constant 0 : i32
    %c0_i32_0 = arith.constant 0 : i32
    %c0_i32_1 = arith.constant 0 : i32
    return %arg0, %arg1, %c0_i32, %c0_i32_0 : i32, i32, i32, i32
  }
}

</mosaic_0001>

<llo_original>
// kernel: tpu_custom_call.1
$region0: #{tpu_custom_call.1}
  #allocation0 [shape = 'u32[]', space=smem, size = 0x4, offset = 0x4, fixed_abs, tag = 'smem constant byte address 0x4 - core index']
  #allocation1 [shape = 'u32[144,128]{1,0:T(1,128)}', space=vmem, size = 0x12000, scoped, tag = 'internal scratch']
  %s0 = inlined_call_operand.vmem [shape: f32[2,1,25,25,4], index: 0, kind: input, shape index: {}]
  %s1 = inlined_call_operand.vmem [shape: f32[16,32], index: 1, kind: input, shape index: {}]
  %s2 = inlined_call_operand.vmem [shape: f32[1,32], index: 2, kind: input, shape index: {}]
  %s3 = inlined_call_operand.vmem [shape: f32[2,1,576,32], index: 3, kind: output, shape index: {}]
  %s4 = sld [smem:[#allocation0]]
  $region45: #{tpu_custom_call.1} parent=0
    _
  %s6 = ssub.s32 1, %s4
  %s7 = scalar_select 0, %s6, %s4
  loop: start=0, step=1, limit=4
  $region2: #{tpu_custom_call.1} parent=0 // loop_pre_header
    _
  $region3: #{tpu_custom_call.1} parent=0 // loop_header
    %s9 = sphi 0, %s13
    %p10 = scmp.ge.s32.totalorder %s9, 4
    %s16 = sphi 0, %s28
    %s17 = sphi 0, %s24
    %s18 = sphi 0, %s16
    %s19 = sphi 0, %s17
    %s20 = sphi 0, %s18
    %s21 = sphi 0, %s19
    %s33 = sphi 0, %s35
    %s36 = sphi 0, %s33
    %s37 = sphi 0, %s36
    %s53 = sphi 0, %s37
    %s57 = sphi 0, %s57
    %s59 = sphi 0, %s57
    %s60 = sphi 0, %s59
    %s74 = sphi 0, %s60
    %s78 = sphi 0, %s78
    %s80 = sphi 0, %s78
    %s81 = sphi 0, %s80
    %s95 = sphi 0, %s81
    %s103 = sphi 0, %s105
    %s106 = sphi 0, %s103
    %s107 = sphi 0, %s106
    %s123 = sphi 0, %s107
  $region4: #{tpu_custom_call.1} parent=0 // loop_header_branch
    %12 = sbr.rel (%p10) target = $region8
  $region5: #{tpu_custom_call.1} parent=0 // loop_body
    %s14 = ssub.s32 %s9, 1
    %s15 = ssub.s32 %s9, 2
    %s22 = sadd.s32 1, %s17
    %p23 = scmp.ge.s32.totalorder %s22, 1
    %s24 = scalar_select %p23, 0, %s22
    %s25 = sadd.s32 1, %s16
    %s26 = scalar_select %p23, %s25, %s16
    %p27 = scmp.ge.s32.totalorder %s26, 2
    %s28 = scalar_select %p27, 0, %s26
    %s29 = ssub.s32 %s16, %s28
    %s30 = ssub.s32 %s17, %s24
    %s31 = sor.u32 %s29, %s30
    %p32 = scmp.eq.s32.totalorder %s31, 0
    %s34 = sadd.s32 %s33, 1
    %s35 = scalar_select %p32, %s33, %s34
    %p38 = pneg %p32
    %p39 = scmp.eq.s32.totalorder %s9, 1
    %p40 = por %p38, %p39
    %p41 = scmp.ne.s32.totalorder %s33, %s36
    %p42 = scmp.eq.s32.totalorder %s9, 0
    %p43 = por %p41, %p42
    %p44 = scmp.ne.s32.totalorder %s33, %s36
    %p45 = scmp.eq.s32.totalorder %s14, 1
    %p46 = por %p44, %p45
    %p47 = scmp.ne.s32.totalorder %s36, %s37
    %p48 = scmp.eq.s32.totalorder %s14, 0
    %p49 = por %p47, %p48
    %p50 = scmp.ne.s32.totalorder %s36, %s37
    %p51 = scmp.eq.s32.totalorder %s15, 1
    %p52 = por %p50, %p51
    %p54 = scmp.ne.s32.totalorder %s37, %s53
    %p55 = scmp.eq.s32.totalorder %s15, 0
    %p56 = por %p54, %p55
    %s58 = sadd.s32 %s57, 1
    %p61 = scmp.eq.s32.totalorder %s9, 1
    %p62 = scmp.ne.s32.totalorder %s57, %s59
    %p63 = scmp.eq.s32.totalorder %s9, 0
    %p64 = por %p62, %p63
    %p65 = scmp.ne.s32.totalorder %s57, %s59
    %p66 = scmp.eq.s32.totalorder %s14, 1
    %p67 = por %p65, %p66
    %p68 = scmp.ne.s32.totalorder %s59, %s60
    %p69 = scmp.eq.s32.totalorder %s14, 0
    %p70 = por %p68, %p69
    %p71 = scmp.ne.s32.totalorder %s59, %s60
    %p72 = scmp.eq.s32.totalorder %s15, 1
    %p73 = por %p71, %p72
    %p75 = scmp.ne.s32.totalorder %s60, %s74
    %p76 = scmp.eq.s32.totalorder %s15, 0
    %p77 = por %p75, %p76
    %s79 = sadd.s32 %s78, 1
    %p82 = scmp.eq.s32.totalorder %s9, 1
    %p83 = scmp.ne.s32.totalorder %s78, %s80
    %p84 = scmp.eq.s32.totalorder %s9, 0
    %p85 = por %p83, %p84
    %p86 = scmp.ne.s32.totalorder %s78, %s80
    %p87 = scmp.eq.s32.totalorder %s14, 1
    %p88 = por %p86, %p87
    %p89 = scmp.ne.s32.totalorder %s80, %s81
    %p90 = scmp.eq.s32.totalorder %s14, 0
    %p91 = por %p89, %p90
    %p92 = scmp.ne.s32.totalorder %s80, %s81
    %p93 = scmp.eq.s32.totalorder %s15, 1
    %p94 = por %p92, %p93
    %p96 = scmp.ne.s32.totalorder %s81, %s95
    %p97 = scmp.eq.s32.totalorder %s15, 0
    %p98 = por %p96, %p97
    %s99 = ssub.s32 %s16, %s28
    %s100 = ssub.s32 %s17, %s24
    %s101 = sor.u32 %s99, %s100
    %p102 = scmp.eq.s32.totalorder %s101, 0
    %s104 = sadd.s32 %s103, 1
    %s105 = scalar_select %p102, %s103, %s104
    %p108 = pneg %p102
    %p109 = scmp.eq.s32.totalorder %s9, 1
    %p110 = por %p108, %p109
    %p111 = scmp.ne.s32.totalorder %s103, %s106
    %p112 = scmp.eq.s32.totalorder %s9, 0
    %p113 = por %p111, %p112
    %p114 = scmp.ne.s32.totalorder %s103, %s106
    %p115 = scmp.eq.s32.totalorder %s14, 1
    %p116 = por %p114, %p115
    %p117 = scmp.ne.s32.totalorder %s106, %s107
    %p118 = scmp.eq.s32.totalorder %s14, 0
    %p119 = por %p117, %p118
    %p120 = scmp.ne.s32.totalorder %s106, %s107
    %p121 = scmp.eq.s32.totalorder %s15, 1
    %p122 = por %p120, %p121
    %p124 = scmp.ne.s32.totalorder %s107, %s123
    %p125 = scmp.eq.s32.totalorder %s15, 0
    %p126 = por %p124, %p125
    %p127 = scmp.le.s32.totalorder 1, %s9
    %p128 = scmp.lt.s32.totalorder %s9, 3
    %p129 = pnand %p127, %p128
    %p130 = pneg %p129
    // Predicated region
    $region9: #{tpu_custom_call.1} parent=5 // pred_check
      _
    $region10: #{tpu_custom_call.1} parent=5 // pred_check_branch
      %132 = sbr.rel (%p129) target = $region12
    $region11: #{tpu_custom_call.1} parent=5 // pred_region
      %s133 = ssub.s32 %s9, 1
      // Predicated region
      $region13: #{tpu_custom_call.1} parent=11 // pred_check
        %p134 = pneg %p70
      $region14: #{tpu_custom_call.1} parent=11 // pred_check_branch
        %136 = sbr.rel (%p134) target = $region16
      $region15: #{tpu_custom_call.1} parent=11 // pred_region
        _
      $region16: #{tpu_custom_call.1} parent=11 // pred_fallthru
        _
      // Predicated region
      $region17: #{tpu_custom_call.1} parent=11 // pred_check
        %p137 = pneg %p91
      $region18: #{tpu_custom_call.1} parent=11 // pred_check_branch
        %139 = sbr.rel (%p137) target = $region20
      $region19: #{tpu_custom_call.1} parent=11 // pred_region
        _
      $region20: #{tpu_custom_call.1} parent=11 // pred_fallthru
        _
    $region12: #{tpu_custom_call.1} parent=5 // pred_fallthru
      _
    %p140 = scmp.lt.s32.totalorder %s9, 2
    // Predicated region
    $region21: #{tpu_custom_call.1} parent=5 // pred_check
      %p141 = pneg %p140
    $region22: #{tpu_custom_call.1} parent=5 // pred_check_branch
      %143 = sbr.rel (%p141) target = $region24
    $region23: #{tpu_custom_call.1} parent=5 // pred_region
      // Predicated region
      $region25: #{tpu_custom_call.1} parent=23 // pred_check
        %p144 = pneg %p43
      $region26: #{tpu_custom_call.1} parent=23 // pred_check_branch
        %146 = sbr.rel (%p144) target = $region28
      $region27: #{tpu_custom_call.1} parent=23 // pred_region
        %p147 = scmp.lt.s32.totalorder %s16, 1
        %s148 = scalar_select %p147, %s16, 1
        %p149 = scmp.lt.s32.totalorder %s17, 0
        %s150 = scalar_select %p149, %s17, 0
        %s151 = smul.addr %s150, 100
        %s152 = smul.addr %s148, 100
        %s153 = sadd.s32 %s151, %s152
        %s154 = smul.addr %s153, 8
        %s155 = scalar_lea.vmem %s0, %s154
      $region28: #{tpu_custom_call.1} parent=23 // pred_fallthru
        _
    $region24: #{tpu_custom_call.1} parent=5 // pred_fallthru
      _
    %p156 = scmp.le.s32.totalorder 1, %s9
    %p157 = scmp.lt.s32.totalorder %s9, 3
    %p158 = pnand %p156, %p157
    %p159 = pneg %p158
    // Predicated region
    $region29: #{tpu_custom_call.1} parent=5 // pred_check
      _
    $region30: #{tpu_custom_call.1} parent=5 // pred_check_branch
      %161 = sbr.rel (%p158) target = $region32
    $region31: #{tpu_custom_call.1} parent=5 // pred_region
      %s162 = ssub.s32 %s9, 1
      %p163 = scmp.lt.s32.totalorder %s18, 1
      %s164 = scalar_select %p163, %s18, 1
      %p165 = scmp.lt.s32.totalorder %s19, 0
      %s166 = scalar_select %p165, %s19, 0
      %s167 = smul.addr %s166, 100
      %s168 = smul.addr %s164, 100
      %s169 = sadd.s32 %s167, %s168
      %s170 = smul.addr %s169, 8
      %s171 = scalar_lea.vmem %s0, %s170
      %p172 = pneg %p49
      %p173 = pneg %p46
      %p174 = pneg %p70
      %p175 = pneg %p67
      %p176 = pneg %p91
      %p177 = pneg %p88
      %p178 = pneg %p119
      %p179 = pneg %p116
      %p180 = scmp.lt.s32.totalorder %s18, 1
      %s181 = scalar_select %p180, %s18, 1
      %p182 = scmp.lt.s32.totalorder %s19, 0
      %s183 = scalar_select %p182, %s19, 0
      %s184 = smul.addr %s183, 72
      %s185 = smul.addr %s181, 72
      %s186 = sadd.s32 %s184, %s185
      %s187 = smul.addr %s186, 8
      %s188 = scalar_lea.vmem %s3, %s187
      %p189 = scmp.lt.s32.totalorder %s18, 1
      %s190 = scalar_select %p189, %s18, 1
      %p191 = scmp.lt.s32.totalorder %s19, 0
      %s192 = scalar_select %p191, %s19, 0
      %s193 = smul.addr %s192, 100
      %s194 = smul.addr %s190, 100
      %s195 = sadd.s32 %s193, %s194
      %s196 = smul.addr %s195, 8
      %s197 = scalar_lea.vmem %s0, %s196
      %p198 = scmp.lt.s32.totalorder %s18, 1
      %s199 = scalar_select %p198, %s18, 1
      %p200 = scmp.lt.s32.totalorder %s19, 0
      %s201 = scalar_select %p200, %s19, 0
      %s202 = smul.addr %s201, 72
      %s203 = smul.addr %s199, 72
      %s204 = sadd.s32 %s202, %s203
      %s205 = smul.addr %s204, 8
      %s206 = scalar_lea.vmem %s3, %s205
      %v207 = vld [vmem:[%s197] sm:$0xff]
      %v208 = vld [vmem:[%s197 + $0x8] sm:$0xff]
      %v209 = vld [vmem:[%s197 + $0x10] sm:$0xff]
      %v210 = vld [vmem:[%s197 + $0x18] sm:$0x1]
      %v211 = vld [vmem:[%s197 + $0x20] sm:$0xff]
      %v212 = vld [vmem:[%s197 + $0x28] sm:$0xff]
      %v213 = vld [vmem:[%s197 + $0x30] sm:$0xff]
      %v214 = vld [vmem:[%s197 + $0x38] sm:$0x1]
      %v215 = vld [vmem:[%s197 + $0x40] sm:$0xff]
      %v216 = vld [vmem:[%s197 + $0x48] sm:$0xff]
      %v217 = vld [vmem:[%s197 + $0x50] sm:$0xff]
      %v218 = vld [vmem:[%s197 + $0x58] sm:$0x1]
      %v219 = vld [vmem:[%s197 + $0x60] sm:$0xff]
      %v220 = vld [vmem:[%s197 + $0x68] sm:$0xff]
      %v221 = vld [vmem:[%s197 + $0x70] sm:$0xff]
      %v222 = vld [vmem:[%s197 + $0x78] sm:$0x1]
      %v223 = vld [vmem:[%s197 + $0x80] sm:$0xff]
      %v224 = vld [vmem:[%s197 + $0x88] sm:$0xff]
      %v225 = vld [vmem:[%s197 + $0x90] sm:$0xff]
      %v226 = vld [vmem:[%s197 + $0x98] sm:$0x1]
      %v227 = vld [vmem:[%s197 + $0xa0] sm:$0xff]
      %v228 = vld [vmem:[%s197 + $0xa8] sm:$0xff]
      %v229 = vld [vmem:[%s197 + $0xb0] sm:$0xff]
      %v230 = vld [vmem:[%s197 + $0xb8] sm:$0x1]
      %v231 = vld [vmem:[%s197 + $0xc0] sm:$0xff]
      %v232 = vld [vmem:[%s197 + $0xc8] sm:$0xff]
      %v233 = vld [vmem:[%s197 + $0xd0] sm:$0xff]
      %v234 = vld [vmem:[%s197 + $0xd8] sm:$0x1]
      %v235 = vld [vmem:[%s197 + $0xe0] sm:$0xff]
      %v236 = vld [vmem:[%s197 + $0xe8] sm:$0xff]
      %v237 = vld [vmem:[%s197 + $0xf0] sm:$0xff]
      %v238 = vld [vmem:[%s197 + $0xf8] sm:$0x1]
      %v239 = vld [vmem:[%s197 + $0x100] sm:$0xff]
      %v240 = vld [vmem:[%s197 + $0x108] sm:$0xff]
      %v241 = vld [vmem:[%s197 + $0x110] sm:$0xff]
      %v242 = vld [vmem:[%s197 + $0x118] sm:$0x1]
      %v243 = vld [vmem:[%s197 + $0x120] sm:$0xff]
      %v244 = vld [vmem:[%s197 + $0x128] sm:$0xff]
      %v245 = vld [vmem:[%s197 + $0x130] sm:$0xff]
      %v246 = vld [vmem:[%s197 + $0x138] sm:$0x1]
      %v247 = vld [vmem:[%s197 + $0x140] sm:$0xff]
      %v248 = vld [vmem:[%s197 + $0x148] sm:$0xff]
      %v249 = vld [vmem:[%s197 + $0x150] sm:$0xff]
      %v250 = vld [vmem:[%s197 + $0x158] sm:$0x1]
      %v251 = vld [vmem:[%s197 + $0x160] sm:$0xff]
      %v252 = vld [vmem:[%s197 + $0x168] sm:$0xff]
      %v253 = vld [vmem:[%s197 + $0x170] sm:$0xff]
      %v254 = vld [vmem:[%s197 + $0x178] sm:$0x1]
      %v255 = vld [vmem:[%s197 + $0x180] sm:$0xff]
      %v256 = vld [vmem:[%s197 + $0x188] sm:$0xff]
      %v257 = vld [vmem:[%s197 + $0x190] sm:$0xff]
      %v258 = vld [vmem:[%s197 + $0x198] sm:$0x1]
      %v259 = vld [vmem:[%s197 + $0x1a0] sm:$0xff]
      %v260 = vld [vmem:[%s197 + $0x1a8] sm:$0xff]
      %v261 = vld [vmem:[%s197 + $0x1b0] sm:$0xff]
      %v262 = vld [vmem:[%s197 + $0x1b8] sm:$0x1]
      %v263 = vld [vmem:[%s197 + $0x1c0] sm:$0xff]
      %v264 = vld [vmem:[%s197 + $0x1c8] sm:$0xff]
      %v265 = vld [vmem:[%s197 + $0x1d0] sm:$0xff]
      %v266 = vld [vmem:[%s197 + $0x1d8] sm:$0x1]
      %v267 = vld [vmem:[%s197 + $0x1e0] sm:$0xff]
      %v268 = vld [vmem:[%s197 + $0x1e8] sm:$0xff]
      %v269 = vld [vmem:[%s197 + $0x1f0] sm:$0xff]
      %v270 = vld [vmem:[%s197 + $0x1f8] sm:$0x1]
      %v271 = vld [vmem:[%s197 + $0x200] sm:$0xff]
      %v272 = vld [vmem:[%s197 + $0x208] sm:$0xff]
      %v273 = vld [vmem:[%s197 + $0x210] sm:$0xff]
      %v274 = vld [vmem:[%s197 + $0x218] sm:$0x1]
      %v275 = vld [vmem:[%s197 + $0x220] sm:$0xff]
      %v276 = vld [vmem:[%s197 + $0x228] sm:$0xff]
      %v277 = vld [vmem:[%s197 + $0x230] sm:$0xff]
      %v278 = vld [vmem:[%s197 + $0x238] sm:$0x1]
      %v279 = vld [vmem:[%s197 + $0x240] sm:$0xff]
      %v280 = vld [vmem:[%s197 + $0x248] sm:$0xff]
      %v281 = vld [vmem:[%s197 + $0x250] sm:$0xff]
      %v282 = vld [vmem:[%s197 + $0x258] sm:$0x1]
      %v283 = vld [vmem:[%s197 + $0x260] sm:$0xff]
      %v284 = vld [vmem:[%s197 + $0x268] sm:$0xff]
      %v285 = vld [vmem:[%s197 + $0x270] sm:$0xff]
      %v286 = vld [vmem:[%s197 + $0x278] sm:$0x1]
      %v287 = vld [vmem:[%s197 + $0x280] sm:$0xff]
      %v288 = vld [vmem:[%s197 + $0x288] sm:$0xff]
      %v289 = vld [vmem:[%s197 + $0x290] sm:$0xff]
      %v290 = vld [vmem:[%s197 + $0x298] sm:$0x1]
      %v291 = vld [vmem:[%s197 + $0x2a0] sm:$0xff]
      %v292 = vld [vmem:[%s197 + $0x2a8] sm:$0xff]
      %v293 = vld [vmem:[%s197 + $0x2b0] sm:$0xff]
      %v294 = vld [vmem:[%s197 + $0x2b8] sm:$0x1]
      %v295 = vld [vmem:[%s197 + $0x2c0] sm:$0xff]
      %v296 = vld [vmem:[%s197 + $0x2c8] sm:$0xff]
      %v297 = vld [vmem:[%s197 + $0x2d0] sm:$0xff]
      %v298 = vld [vmem:[%s197 + $0x2d8] sm:$0x1]
      %v299 = vld [vmem:[%s197 + $0x2e0] sm:$0xff]
      %v300 = vld [vmem:[%s197 + $0x2e8] sm:$0xff]
      %v301 = vld [vmem:[%s197 + $0x2f0] sm:$0xff]
      %v302 = vld [vmem:[%s197 + $0x2f8] sm:$0x1]
      %v303 = vld [vmem:[%s197 + $0x300] sm:$0xff]
      %v304 = vld [vmem:[%s197 + $0x308] sm:$0xff]
      %v305 = vld [vmem:[%s197 + $0x310] sm:$0xff]
      %v306 = vld [vmem:[%s197 + $0x318] sm:$0x1]
      %vm403 = vcmask 1046528
      %v404 = vrot.slane %v207, 1
      %v405 = vrot.slane %v208, 1
      %v406 = vsel %vm403, %v404, %v405
      %v407 = vrot.slane %v209, 1
      %v408 = vsel %vm403, %v405, %v407
      %v409 = vrot.slane %v210, 1
      %v410 = vsel %vm403, %v407, %v409
      %v411 = vrot.slane %v211, 1
      %v412 = vrot.slane %v212, 1
      %v413 = vsel %vm403, %v411, %v412
      %v414 = vrot.slane %v213, 1
      %v415 = vsel %vm403, %v412, %v414
      %v416 = vrot.slane %v214, 1
      %v417 = vsel %vm403, %v414, %v416
      %v418 = vrot.slane %v215, 1
      %v419 = vrot.slane %v216, 1
      %v420 = vsel %vm403, %v418, %v419
      %v421 = vrot.slane %v217, 1
      %v422 = vsel %vm403, %v419, %v421
      %v423 = vrot.slane %v218, 1
      %v424 = vsel %vm403, %v421, %v423
      %v425 = vrot.slane %v219, 1
      %v426 = vrot.slane %v220, 1
      %v427 = vsel %vm403, %v425, %v426
      %v428 = vrot.slane %v221, 1
      %v429 = vsel %vm403, %v426, %v428
      %v430 = vrot.slane %v222, 1
      %v431 = vsel %vm403, %v428, %v430
      %v432 = vrot.slane %v223, 1
      %v433 = vrot.slane %v224, 1
      %v434 = vsel %vm403, %v432, %v433
      %v435 = vrot.slane %v225, 1
      %v436 = vsel %vm403, %v433, %v435
      %v437 = vrot.slane %v226, 1
      %v438 = vsel %vm403, %v435, %v437
      %v439 = vrot.slane %v227, 1
      %v440 = vrot.slane %v228, 1
      %v441 = vsel %vm403, %v439, %v440
      %v442 = vrot.slane %v229, 1
      %v443 = vsel %vm403, %v440, %v442
      %v444 = vrot.slane %v230, 1
      %v445 = vsel %vm403, %v442, %v444
      %v446 = vrot.slane %v231, 1
      %v447 = vrot.slane %v232, 1
      %v448 = vsel %vm403, %v446, %v447
      %v449 = vrot.slane %v233, 1
      %v450 = vsel %vm403, %v447, %v449
      %v451 = vrot.slane %v234, 1
      %v452 = vsel %vm403, %v449, %v451
      %v453 = vrot.slane %v235, 1
      %v454 = vrot.slane %v236, 1
      %v455 = vsel %vm403, %v453, %v454
      %v456 = vrot.slane %v237, 1
      %v457 = vsel %vm403, %v454, %v456
      %v458 = vrot.slane %v238, 1
      %v459 = vsel %vm403, %v456, %v458
      %v460 = vrot.slane %v239, 1
      %v461 = vrot.slane %v240, 1
      %v462 = vsel %vm403, %v460, %v461
      %v463 = vrot.slane %v241, 1
      %v464 = vsel %vm403, %v461, %v463
      %v465 = vrot.slane %v242, 1
      %v466 = vsel %vm403, %v463, %v465
      %v467 = vrot.slane %v243, 1
      %v468 = vrot.slane %v244, 1
      %v469 = vsel %vm403, %v467, %v468
      %v470 = vrot.slane %v245, 1
      %v471 = vsel %vm403, %v468, %v470
      %v472 = vrot.slane %v246, 1
      %v473 = vsel %vm403, %v470, %v472
      %v474 = vrot.slane %v247, 1
      %v475 = vrot.slane %v248, 1
      %v476 = vsel %vm403, %v474, %v475
      %v477 = vrot.slane %v249, 1
      %v478 = vsel %vm403, %v475, %v477
      %v479 = vrot.slane %v250, 1
      %v480 = vsel %vm403, %v477, %v479
      %v481 = vrot.slane %v251, 1
      %v482 = vrot.slane %v252, 1
      %v483 = vsel %vm403, %v481, %v482
      %v484 = vrot.slane %v253, 1
      %v485 = vsel %vm403, %v482, %v484
      %v486 = vrot.slane %v254, 1
      %v487 = vsel %vm403, %v484, %v486
      %v488 = vrot.slane %v255, 1
      %v489 = vrot.slane %v256, 1
      %v490 = vsel %vm403, %v488, %v489
      %v491 = vrot.slane %v257, 1
      %v492 = vsel %vm403, %v489, %v491
      %v493 = vrot.slane %v258, 1
      %v494 = vsel %vm403, %v491, %v493
      %v495 = vrot.slane %v259, 1
      %v496 = vrot.slane %v260, 1
      %v497 = vsel %vm403, %v495, %v496
      %v498 = vrot.slane %v261, 1
      %v499 = vsel %vm403, %v496, %v498
      %v500 = vrot.slane %v262, 1
      %v501 = vsel %vm403, %v498, %v500
      %v502 = vrot.slane %v263, 1
      %v503 = vrot.slane %v264, 1
      %v504 = vsel %vm403, %v502, %v503
      %v505 = vrot.slane %v265, 1
      %v506 = vsel %vm403, %v503, %v505
      %v507 = vrot.slane %v266, 1
      %v508 = vsel %vm403, %v505, %v507
      %v509 = vrot.slane %v267, 1
      %v510 = vrot.slane %v268, 1
      %v511 = vsel %vm403, %v509, %v510
      %v512 = vrot.slane %v269, 1
      %v513 = vsel %vm403, %v510, %v512
      %v514 = vrot.slane %v270, 1
      %v515 = vsel %vm403, %v512, %v514
      %v516 = vrot.slane %v271, 1
      %v517 = vrot.slane %v272, 1
      %v518 = vsel %vm403, %v516, %v517
      %v519 = vrot.slane %v273, 1
      %v520 = vsel %vm403, %v517, %v519
      %v521 = vrot.slane %v274, 1
      %v522 = vsel %vm403, %v519, %v521
      %v523 = vrot.slane %v275, 1
      %v524 = vrot.slane %v276, 1
      %v525 = vsel %vm403, %v523, %v524
      %v526 = vrot.slane %v277, 1
      %v527 = vsel %vm403, %v524, %v526
      %v528 = vrot.slane %v278, 1
      %v529 = vsel %vm403, %v526, %v528
      %v530 = vrot.slane %v279, 1
      %v531 = vrot.slane %v280, 1
      %v532 = vsel %vm403, %v530, %v531
      %v533 = vrot.slane %v281, 1
      %v534 = vsel %vm403, %v531, %v533
      %v535 = vrot.slane %v282, 1
      %v536 = vsel %vm403, %v533, %v535
      %v537 = vrot.slane %v283, 1
      %v538 = vrot.slane %v284, 1
      %v539 = vsel %vm403, %v537, %v538
      %v540 = vrot.slane %v285, 1
      %v541 = vsel %vm403, %v538, %v540
      %v542 = vrot.slane %v286, 1
      %v543 = vsel %vm403, %v540, %v542
      %v544 = vrot.slane %v287, 1
      %v545 = vrot.slane %v288, 1
      %v546 = vsel %vm403, %v544, %v545
      %v547 = vrot.slane %v289, 1
      %v548 = vsel %vm403, %v545, %v547
      %v549 = vrot.slane %v290, 1
      %v550 = vsel %vm403, %v547, %v549
      %v551 = vrot.slane %v291, 1
      %v552 = vrot.slane %v292, 1
      %v553 = vsel %vm403, %v551, %v552
      %v554 = vrot.slane %v293, 1
      %v555 = vsel %vm403, %v552, %v554
      %v556 = vrot.slane %v294, 1
      %v557 = vsel %vm403, %v554, %v556
      %v558 = vrot.slane %v295, 1
      %v559 = vrot.slane %v296, 1
      %v560 = vsel %vm403, %v558, %v559
      %v561 = vrot.slane %v297, 1
      %v562 = vsel %vm403, %v559, %v561
      %v563 = vrot.slane %v298, 1
      %v564 = vsel %vm403, %v561, %v563
      %v565 = vrot.slane %v299, 1
      %v566 = vrot.slane %v300, 1
      %v567 = vsel %vm403, %v565, %v566
      %v568 = vrot.slane %v301, 1
      %v569 = vsel %vm403, %v566, %v568
      %v570 = vrot.slane %v302, 1
      %v571 = vsel %vm403, %v568, %v570
      %572 = vrot.lane.b32.xlu0 %v406, 4
      %v573 = vpop.permute.xlu0 %572
      %574 = vrot.lane.b32.xlu0 %v408, 4
      %v575 = vpop.permute.xlu0 %574
      %576 = vrot.lane.b32.xlu0 %v410, 4
      %v577 = vpop.permute.xlu0 %576
      %578 = vrot.lane.b32.xlu0 %v413, 4
      %v579 = vpop.permute.xlu0 %578
      %580 = vrot.lane.b32.xlu0 %v415, 4
      %v581 = vpop.permute.xlu0 %580
      %582 = vrot.lane.b32.xlu0 %v417, 4
      %v583 = vpop.permute.xlu0 %582
      %584 = vrot.lane.b32.xlu0 %v420, 4
      %v585 = vpop.permute.xlu0 %584
      %586 = vrot.lane.b32.xlu0 %v422, 4
      %v587 = vpop.permute.xlu0 %586
      %588 = vrot.lane.b32.xlu0 %v424, 4
      %v589 = vpop.permute.xlu0 %588
      %590 = vrot.lane.b32.xlu0 %v427, 4
      %v591 = vpop.permute.xlu0 %590
      %592 = vrot.lane.b32.xlu0 %v429, 4
      %v593 = vpop.permute.xlu0 %592
      %594 = vrot.lane.b32.xlu0 %v431, 4
      %v595 = vpop.permute.xlu0 %594
      %596 = vrot.lane.b32.xlu0 %v434, 4
      %v597 = vpop.permute.xlu0 %596
      %598 = vrot.lane.b32.xlu0 %v436, 4
      %v599 = vpop.permute.xlu0 %598
      %600 = vrot.lane.b32.xlu0 %v438, 4
      %v601 = vpop.permute.xlu0 %600
      %602 = vrot.lane.b32.xlu0 %v441, 4
      %v603 = vpop.permute.xlu0 %602
      %604 = vrot.lane.b32.xlu0 %v443, 4
      %v605 = vpop.permute.xlu0 %604
      %606 = vrot.lane.b32.xlu0 %v445, 4
      %v607 = vpop.permute.xlu0 %606
      %608 = vrot.lane.b32.xlu0 %v448, 4
      %v609 = vpop.permute.xlu0 %608
      %610 = vrot.lane.b32.xlu0 %v450, 4
      %v611 = vpop.permute.xlu0 %610
      %612 = vrot.lane.b32.xlu0 %v452, 4
      %v613 = vpop.permute.xlu0 %612
      %614 = vrot.lane.b32.xlu0 %v455, 4
      %v615 = vpop.permute.xlu0 %614
      %616 = vrot.lane.b32.xlu0 %v457, 4
      %v617 = vpop.permute.xlu0 %616
      %618 = vrot.lane.b32.xlu0 %v459, 4
      %v619 = vpop.permute.xlu0 %618
      %620 = vrot.lane.b32.xlu0 %v462, 4
      %v621 = vpop.permute.xlu0 %620
      %622 = vrot.lane.b32.xlu0 %v464, 4
      %v623 = vpop.permute.xlu0 %622
      %624 = vrot.lane.b32.xlu0 %v466, 4
      %v625 = vpop.permute.xlu0 %624
      %626 = vrot.lane.b32.xlu0 %v469, 4
      %v627 = vpop.permute.xlu0 %626
      %628 = vrot.lane.b32.xlu0 %v471, 4
      %v629 = vpop.permute.xlu0 %628
      %630 = vrot.lane.b32.xlu0 %v473, 4
      %v631 = vpop.permute.xlu0 %630
      %632 = vrot.lane.b32.xlu0 %v476, 4
      %v633 = vpop.permute.xlu0 %632
      %634 = vrot.lane.b32.xlu0 %v478, 4
      %v635 = vpop.permute.xlu0 %634
      %636 = vrot.lane.b32.xlu0 %v480, 4
      %v637 = vpop.permute.xlu0 %636
      %638 = vrot.lane.b32.xlu0 %v483, 4
      %v639 = vpop.permute.xlu0 %638
      %640 = vrot.lane.b32.xlu0 %v485, 4
      %v641 = vpop.permute.xlu0 %640
      %642 = vrot.lane.b32.xlu0 %v487, 4
      %v643 = vpop.permute.xlu0 %642
      %644 = vrot.lane.b32.xlu0 %v490, 4
      %v645 = vpop.permute.xlu0 %644
      %646 = vrot.lane.b32.xlu0 %v492, 4
      %v647 = vpop.permute.xlu0 %646
      %648 = vrot.lane.b32.xlu0 %v494, 4
      %v649 = vpop.permute.xlu0 %648
      %650 = vrot.lane.b32.xlu0 %v497, 4
      %v651 = vpop.permute.xlu0 %650
      %652 = vrot.lane.b32.xlu0 %v499, 4
      %v653 = vpop.permute.xlu0 %652
      %654 = vrot.lane.b32.xlu0 %v501, 4
      %v655 = vpop.permute.xlu0 %654
      %656 = vrot.lane.b32.xlu0 %v504, 4
      %v657 = vpop.permute.xlu0 %656
      %658 = vrot.lane.b32.xlu0 %v506, 4
      %v659 = vpop.permute.xlu0 %658
      %660 = vrot.lane.b32.xlu0 %v508, 4
      %v661 = vpop.permute.xlu0 %660
      %662 = vrot.lane.b32.xlu0 %v511, 4
      %v663 = vpop.permute.xlu0 %662
      %664 = vrot.lane.b32.xlu0 %v513, 4
      %v665 = vpop.permute.xlu0 %664
      %666 = vrot.lane.b32.xlu0 %v515, 4
      %v667 = vpop.permute.xlu0 %666
      %668 = vrot.lane.b32.xlu0 %v518, 4
      %v669 = vpop.permute.xlu0 %668
      %670 = vrot.lane.b32.xlu0 %v520, 4
      %v671 = vpop.permute.xlu0 %670
      %672 = vrot.lane.b32.xlu0 %v522, 4
      %v673 = vpop.permute.xlu0 %672
      %674 = vrot.lane.b32.xlu0 %v525, 4
      %v675 = vpop.permute.xlu0 %674
      %676 = vrot.lane.b32.xlu0 %v527, 4
      %v677 = vpop.permute.xlu0 %676
      %678 = vrot.lane.b32.xlu0 %v529, 4
      %v679 = vpop.permute.xlu0 %678
      %680 = vrot.lane.b32.xlu0 %v532, 4
      %v681 = vpop.permute.xlu0 %680
      %682 = vrot.lane.b32.xlu0 %v534, 4
      %v683 = vpop.permute.xlu0 %682
      %684 = vrot.lane.b32.xlu0 %v536, 4
      %v685 = vpop.permute.xlu0 %684
      %686 = vrot.lane.b32.xlu0 %v539, 4
      %v687 = vpop.permute.xlu0 %686
      %688 = vrot.lane.b32.xlu0 %v541, 4
      %v689 = vpop.permute.xlu0 %688
      %690 = vrot.lane.b32.xlu0 %v543, 4
      %v691 = vpop.permute.xlu0 %690
      %692 = vrot.lane.b32.xlu0 %v546, 4
      %v693 = vpop.permute.xlu0 %692
      %694 = vrot.lane.b32.xlu0 %v548, 4
      %v695 = vpop.permute.xlu0 %694
      %696 = vrot.lane.b32.xlu0 %v550, 4
      %v697 = vpop.permute.xlu0 %696
      %698 = vrot.lane.b32.xlu0 %v553, 4
      %v699 = vpop.permute.xlu0 %698
      %700 = vrot.lane.b32.xlu0 %v555, 4
      %v701 = vpop.permute.xlu0 %700
      %702 = vrot.lane.b32.xlu0 %v557, 4
      %v703 = vpop.permute.xlu0 %702
      %704 = vrot.lane.b32.xlu0 %v560, 4
      %v705 = vpop.permute.xlu0 %704
      %706 = vrot.lane.b32.xlu0 %v562, 4
      %v707 = vpop.permute.xlu0 %706
      %708 = vrot.lane.b32.xlu0 %v564, 4
      %v709 = vpop.permute.xlu0 %708
      %710 = vrot.lane.b32.xlu0 %v567, 4
      %v711 = vpop.permute.xlu0 %710
      %712 = vrot.lane.b32.xlu0 %v569, 4
      %v713 = vpop.permute.xlu0 %712
      %714 = vrot.lane.b32.xlu0 %v571, 4
      %v715 = vpop.permute.xlu0 %714
      %791 = vrot.lane.b32.xlu0 %v211, 8
      %v792 = vpop.permute.xlu0 %791
      %793 = vrot.lane.b32.xlu0 %v212, 8
      %v794 = vpop.permute.xlu0 %793
      %795 = vrot.lane.b32.xlu0 %v213, 8
      %v796 = vpop.permute.xlu0 %795
      %797 = vrot.lane.b32.xlu0 %v215, 8
      %v798 = vpop.permute.xlu0 %797
      %799 = vrot.lane.b32.xlu0 %v216, 8
      %v800 = vpop.permute.xlu0 %799
      %801 = vrot.lane.b32.xlu0 %v217, 8
      %v802 = vpop.permute.xlu0 %801
      %803 = vrot.lane.b32.xlu0 %v219, 8
      %v804 = vpop.permute.xlu0 %803
      %805 = vrot.lane.b32.xlu0 %v220, 8
      %v806 = vpop.permute.xlu0 %805
      %807 = vrot.lane.b32.xlu0 %v221, 8
      %v808 = vpop.permute.xlu0 %807
      %809 = vrot.lane.b32.xlu0 %v223, 8
      %v810 = vpop.permute.xlu0 %809
      %811 = vrot.lane.b32.xlu0 %v224, 8
      %v812 = vpop.permute.xlu0 %811
      %813 = vrot.lane.b32.xlu0 %v225, 8
      %v814 = vpop.permute.xlu0 %813
      %815 = vrot.lane.b32.xlu0 %v227, 8
      %v816 = vpop.permute.xlu0 %815
      %817 = vrot.lane.b32.xlu0 %v228, 8
      %v818 = vpop.permute.xlu0 %817
      %819 = vrot.lane.b32.xlu0 %v229, 8
      %v820 = vpop.permute.xlu0 %819
      %821 = vrot.lane.b32.xlu0 %v231, 8
      %v822 = vpop.permute.xlu0 %821
      %823 = vrot.lane.b32.xlu0 %v232, 8
      %v824 = vpop.permute.xlu0 %823
      %825 = vrot.lane.b32.xlu0 %v233, 8
      %v826 = vpop.permute.xlu0 %825
      %827 = vrot.lane.b32.xlu0 %v235, 8
      %v828 = vpop.permute.xlu0 %827
      %829 = vrot.lane.b32.xlu0 %v236, 8
      %v830 = vpop.permute.xlu0 %829
      %831 = vrot.lane.b32.xlu0 %v237, 8
      %v832 = vpop.permute.xlu0 %831
      %833 = vrot.lane.b32.xlu0 %v239, 8
      %v834 = vpop.permute.xlu0 %833
      %835 = vrot.lane.b32.xlu0 %v240, 8
      %v836 = vpop.permute.xlu0 %835
      %837 = vrot.lane.b32.xlu0 %v241, 8
      %v838 = vpop.permute.xlu0 %837
      %839 = vrot.lane.b32.xlu0 %v243, 8
      %v840 = vpop.permute.xlu0 %839
      %841 = vrot.lane.b32.xlu0 %v244, 8
      %v842 = vpop.permute.xlu0 %841
      %843 = vrot.lane.b32.xlu0 %v245, 8
      %v844 = vpop.permute.xlu0 %843
      %845 = vrot.lane.b32.xlu0 %v247, 8
      %v846 = vpop.permute.xlu0 %845
      %847 = vrot.lane.b32.xlu0 %v248, 8
      %v848 = vpop.permute.xlu0 %847
      %849 = vrot.lane.b32.xlu0 %v249, 8
      %v850 = vpop.permute.xlu0 %849
      %851 = vrot.lane.b32.xlu0 %v251, 8
      %v852 = vpop.permute.xlu0 %851
      %853 = vrot.lane.b32.xlu0 %v252, 8
      %v854 = vpop.permute.xlu0 %853
      %855 = vrot.lane.b32.xlu0 %v253, 8
      %v856 = vpop.permute.xlu0 %855
      %857 = vrot.lane.b32.xlu0 %v255, 8
      %v858 = vpop.permute.xlu0 %857
      %859 = vrot.lane.b32.xlu0 %v256, 8
      %v860 = vpop.permute.xlu0 %859
      %861 = vrot.lane.b32.xlu0 %v257, 8
      %v862 = vpop.permute.xlu0 %861
      %863 = vrot.lane.b32.xlu0 %v259, 8
      %v864 = vpop.permute.xlu0 %863
      %865 = vrot.lane.b32.xlu0 %v260, 8
      %v866 = vpop.permute.xlu0 %865
      %867 = vrot.lane.b32.xlu0 %v261, 8
      %v868 = vpop.permute.xlu0 %867
      %869 = vrot.lane.b32.xlu0 %v263, 8
      %v870 = vpop.permute.xlu0 %869
      %871 = vrot.lane.b32.xlu0 %v264, 8
      %v872 = vpop.permute.xlu0 %871
      %873 = vrot.lane.b32.xlu0 %v265, 8
      %v874 = vpop.permute.xlu0 %873
      %875 = vrot.lane.b32.xlu0 %v267, 8
      %v876 = vpop.permute.xlu0 %875
      %877 = vrot.lane.b32.xlu0 %v268, 8
      %v878 = vpop.permute.xlu0 %877
      %879 = vrot.lane.b32.xlu0 %v269, 8
      %v880 = vpop.permute.xlu0 %879
      %881 = vrot.lane.b32.xlu0 %v271, 8
      %v882 = vpop.permute.xlu0 %881
      %883 = vrot.lane.b32.xlu0 %v272, 8
      %v884 = vpop.permute.xlu0 %883
      %885 = vrot.lane.b32.xlu0 %v273, 8
      %v886 = vpop.permute.xlu0 %885
      %887 = vrot.lane.b32.xlu0 %v275, 8
      %v888 = vpop.permute.xlu0 %887
      %889 = vrot.lane.b32.xlu0 %v276, 8
      %v890 = vpop.permute.xlu0 %889
      %891 = vrot.lane.b32.xlu0 %v277, 8
      %v892 = vpop.permute.xlu0 %891
      %893 = vrot.lane.b32.xlu0 %v279, 8
      %v894 = vpop.permute.xlu0 %893
      %895 = vrot.lane.b32.xlu0 %v280, 8
      %v896 = vpop.permute.xlu0 %895
      %897 = vrot.lane.b32.xlu0 %v281, 8
      %v898 = vpop.permute.xlu0 %897
      %899 = vrot.lane.b32.xlu0 %v283, 8
      %v900 = vpop.permute.xlu0 %899
      %901 = vrot.lane.b32.xlu0 %v284, 8
      %v902 = vpop.permute.xlu0 %901
      %903 = vrot.lane.b32.xlu0 %v285, 8
      %v904 = vpop.permute.xlu0 %903
      %905 = vrot.lane.b32.xlu0 %v287, 8
      %v906 = vpop.permute.xlu0 %905
      %907 = vrot.lane.b32.xlu0 %v288, 8
      %v908 = vpop.permute.xlu0 %907
      %909 = vrot.lane.b32.xlu0 %v289, 8
      %v910 = vpop.permute.xlu0 %909
      %911 = vrot.lane.b32.xlu0 %v291, 8
      %v912 = vpop.permute.xlu0 %911
      %913 = vrot.lane.b32.xlu0 %v292, 8
      %v914 = vpop.permute.xlu0 %913
      %915 = vrot.lane.b32.xlu0 %v293, 8
      %v916 = vpop.permute.xlu0 %915
      %917 = vrot.lane.b32.xlu0 %v295, 8
      %v918 = vpop.permute.xlu0 %917
      %919 = vrot.lane.b32.xlu0 %v296, 8
      %v920 = vpop.permute.xlu0 %919
      %921 = vrot.lane.b32.xlu0 %v297, 8
      %v922 = vpop.permute.xlu0 %921
      %923 = vrot.lane.b32.xlu0 %v299, 8
      %v924 = vpop.permute.xlu0 %923
      %925 = vrot.lane.b32.xlu0 %v300, 8
      %v926 = vpop.permute.xlu0 %925
      %927 = vrot.lane.b32.xlu0 %v301, 8
      %v928 = vpop.permute.xlu0 %927
      %929 = vrot.lane.b32.xlu0 %v303, 8
      %v930 = vpop.permute.xlu0 %929
      %931 = vrot.lane.b32.xlu0 %v304, 8
      %v932 = vpop.permute.xlu0 %931
      %933 = vrot.lane.b32.xlu0 %v305, 8
      %v934 = vpop.permute.xlu0 %933
      %v1008 = vrot.slane %v303, 1
      %v1009 = vrot.slane %v304, 1
      %v1010 = vsel %vm403, %v1008, %v1009
      %v1011 = vrot.slane %v305, 1
      %v1012 = vsel %vm403, %v1009, %v1011
      %v1013 = vrot.slane %v306, 1
      %v1014 = vsel %vm403, %v1011, %v1013
      %1015 = vrot.lane.b32.xlu0 %v413, 12
      %v1016 = vpop.permute.xlu0 %1015
      %1017 = vrot.lane.b32.xlu0 %v415, 12
      %v1018 = vpop.permute.xlu0 %1017
      %1019 = vrot.lane.b32.xlu0 %v417, 12
      %v1020 = vpop.permute.xlu0 %1019
      %1021 = vrot.lane.b32.xlu0 %v420, 12
      %v1022 = vpop.permute.xlu0 %1021
      %1023 = vrot.lane.b32.xlu0 %v422, 12
      %v1024 = vpop.permute.xlu0 %1023
      %1025 = vrot.lane.b32.xlu0 %v424, 12
      %v1026 = vpop.permute.xlu0 %1025
      %1027 = vrot.lane.b32.xlu0 %v427, 12
      %v1028 = vpop.permute.xlu0 %1027
      %1029 = vrot.lane.b32.xlu0 %v429, 12
      %v1030 = vpop.permute.xlu0 %1029
      %1031 = vrot.lane.b32.xlu0 %v431, 12
      %v1032 = vpop.permute.xlu0 %1031
      %1033 = vrot.lane.b32.xlu0 %v434, 12
      %v1034 = vpop.permute.xlu0 %1033
      %1035 = vrot.lane.b32.xlu0 %v436, 12
      %v1036 = vpop.permute.xlu0 %1035
      %1037 = vrot.lane.b32.xlu0 %v438, 12
      %v1038 = vpop.permute.xlu0 %1037
      %1039 = vrot.lane.b32.xlu0 %v441, 12
      %v1040 = vpop.permute.xlu0 %1039
      %1041 = vrot.lane.b32.xlu0 %v443, 12
      %v1042 = vpop.permute.xlu0 %1041
      %1043 = vrot.lane.b32.xlu0 %v445, 12
      %v1044 = vpop.permute.xlu0 %1043
      %1045 = vrot.lane.b32.xlu0 %v448, 12
      %v1046 = vpop.permute.xlu0 %1045
      %1047 = vrot.lane.b32.xlu0 %v450, 12
      %v1048 = vpop.permute.xlu0 %1047
      %1049 = vrot.lane.b32.xlu0 %v452, 12
      %v1050 = vpop.permute.xlu0 %1049
      %1051 = vrot.lane.b32.xlu0 %v455, 12
      %v1052 = vpop.permute.xlu0 %1051
      %1053 = vrot.lane.b32.xlu0 %v457, 12
      %v1054 = vpop.permute.xlu0 %1053
      %1055 = vrot.lane.b32.xlu0 %v459, 12
      %v1056 = vpop.permute.xlu0 %1055
      %1057 = vrot.lane.b32.xlu0 %v462, 12
      %v1058 = vpop.permute.xlu0 %1057
      %1059 = vrot.lane.b32.xlu0 %v464, 12
      %v1060 = vpop.permute.xlu0 %1059
      %1061 = vrot.lane.b32.xlu0 %v466, 12
      %v1062 = vpop.permute.xlu0 %1061
      %1063 = vrot.lane.b32.xlu0 %v469, 12
      %v1064 = vpop.permute.xlu0 %1063
      %1065 = vrot.lane.b32.xlu0 %v471, 12
      %v1066 = vpop.permute.xlu0 %1065
      %1067 = vrot.lane.b32.xlu0 %v473, 12
      %v1068 = vpop.permute.xlu0 %1067
      %1069 = vrot.lane.b32.xlu0 %v476, 12
      %v1070 = vpop.permute.xlu0 %1069
      %1071 = vrot.lane.b32.xlu0 %v478, 12
      %v1072 = vpop.permute.xlu0 %1071
      %1073 = vrot.lane.b32.xlu0 %v480, 12
      %v1074 = vpop.permute.xlu0 %1073
      %1075 = vrot.lane.b32.xlu0 %v483, 12
      %v1076 = vpop.permute.xlu0 %1075
      %1077 = vrot.lane.b32.xlu0 %v485, 12
      %v1078 = vpop.permute.xlu0 %1077
      %1079 = vrot.lane.b32.xlu0 %v487, 12
      %v1080 = vpop.permute.xlu0 %1079
      %1081 = vrot.lane.b32.xlu0 %v490, 12
      %v1082 = vpop.permute.xlu0 %1081
      %1083 = vrot.lane.b32.xlu0 %v492, 12
      %v1084 = vpop.permute.xlu0 %1083
      %1085 = vrot.lane.b32.xlu0 %v494, 12
      %v1086 = vpop.permute.xlu0 %1085
      %1087 = vrot.lane.b32.xlu0 %v497, 12
      %v1088 = vpop.permute.xlu0 %1087
      %1089 = vrot.lane.b32.xlu0 %v499, 12
      %v1090 = vpop.permute.xlu0 %1089
      %1091 = vrot.lane.b32.xlu0 %v501, 12
      %v1092 = vpop.permute.xlu0 %1091
      %1093 = vrot.lane.b32.xlu0 %v504, 12
      %v1094 = vpop.permute.xlu0 %1093
      %1095 = vrot.lane.b32.xlu0 %v506, 12
      %v1096 = vpop.permute.xlu0 %1095
      %1097 = vrot.lane.b32.xlu0 %v508, 12
      %v1098 = vpop.permute.xlu0 %1097
      %1099 = vrot.lane.b32.xlu0 %v511, 12
      %v1100 = vpop.permute.xlu0 %1099
      %1101 = vrot.lane.b32.xlu0 %v513, 12
      %v1102 = vpop.permute.xlu0 %1101
      %1103 = vrot.lane.b32.xlu0 %v515, 12
      %v1104 = vpop.permute.xlu0 %1103
      %1105 = vrot.lane.b32.xlu0 %v518, 12
      %v1106 = vpop.permute.xlu0 %1105
      %1107 = vrot.lane.b32.xlu0 %v520, 12
      %v1108 = vpop.permute.xlu0 %1107
      %1109 = vrot.lane.b32.xlu0 %v522, 12
      %v1110 = vpop.permute.xlu0 %1109
      %1111 = vrot.lane.b32.xlu0 %v525, 12
      %v1112 = vpop.permute.xlu0 %1111
      %1113 = vrot.lane.b32.xlu0 %v527, 12
      %v1114 = vpop.permute.xlu0 %1113
      %1115 = vrot.lane.b32.xlu0 %v529, 12
      %v1116 = vpop.permute.xlu0 %1115
      %1117 = vrot.lane.b32.xlu0 %v532, 12
      %v1118 = vpop.permute.xlu0 %1117
      %1119 = vrot.lane.b32.xlu0 %v534, 12
      %v1120 = vpop.permute.xlu0 %1119
      %1121 = vrot.lane.b32.xlu0 %v536, 12
      %v1122 = vpop.permute.xlu0 %1121
      %1123 = vrot.lane.b32.xlu0 %v539, 12
      %v1124 = vpop.permute.xlu0 %1123
      %1125 = vrot.lane.b32.xlu0 %v541, 12
      %v1126 = vpop.permute.xlu0 %1125
      %1127 = vrot.lane.b32.xlu0 %v543, 12
      %v1128 = vpop.permute.xlu0 %1127
      %1129 = vrot.lane.b32.xlu0 %v546, 12
      %v1130 = vpop.permute.xlu0 %1129
      %1131 = vrot.lane.b32.xlu0 %v548, 12
      %v1132 = vpop.permute.xlu0 %1131
      %1133 = vrot.lane.b32.xlu0 %v550, 12
      %v1134 = vpop.permute.xlu0 %1133
      %1135 = vrot.lane.b32.xlu0 %v553, 12
      %v1136 = vpop.permute.xlu0 %1135
      %1137 = vrot.lane.b32.xlu0 %v555, 12
      %v1138 = vpop.permute.xlu0 %1137
      %1139 = vrot.lane.b32.xlu0 %v557, 12
      %v1140 = vpop.permute.xlu0 %1139
      %1141 = vrot.lane.b32.xlu0 %v560, 12
      %v1142 = vpop.permute.xlu0 %1141
      %1143 = vrot.lane.b32.xlu0 %v562, 12
      %v1144 = vpop.permute.xlu0 %1143
      %1145 = vrot.lane.b32.xlu0 %v564, 12
      %v1146 = vpop.permute.xlu0 %1145
      %1147 = vrot.lane.b32.xlu0 %v567, 12
      %v1148 = vpop.permute.xlu0 %1147
      %1149 = vrot.lane.b32.xlu0 %v569, 12
      %v1150 = vpop.permute.xlu0 %1149
      %1151 = vrot.lane.b32.xlu0 %v571, 12
      %v1152 = vpop.permute.xlu0 %1151
      %1153 = vrot.lane.b32.xlu0 %v1010, 12
      %v1154 = vpop.permute.xlu0 %1153
      %1155 = vrot.lane.b32.xlu0 %v1012, 12
      %v1156 = vpop.permute.xlu0 %1155
      %1157 = vrot.lane.b32.xlu0 %v1014, 12
      %v1158 = vpop.permute.xlu0 %1157
      %vm1231 = vcmask 31744
      %v1232 = vsel %vm1231, %v207, %v573
      %v1233 = vsel %vm1231, %v208, %v575
      %v1234 = vsel %vm1231, %v209, %v577
      %v1235 = vsel %vm1231, %v211, %v579
      %v1236 = vsel %vm1231, %v212, %v581
      %v1237 = vsel %vm1231, %v213, %v583
      %v1238 = vsel %vm1231, %v215, %v585
      %v1239 = vsel %vm1231, %v216, %v587
      %v1240 = vsel %vm1231, %v217, %v589
      %v1241 = vsel %vm1231, %v219, %v591
      %v1242 = vsel %vm1231, %v220, %v593
      %v1243 = vsel %vm1231, %v221, %v595
      %v1244 = vsel %vm1231, %v223, %v597
      %v1245 = vsel %vm1231, %v224, %v599
      %v1246 = vsel %vm1231, %v225, %v601
      %v1247 = vsel %vm1231, %v227, %v603
      %v1248 = vsel %vm1231, %v228, %v605
      %v1249 = vsel %vm1231, %v229, %v607
      %v1250 = vsel %vm1231, %v231, %v609
      %v1251 = vsel %vm1231, %v232, %v611
      %v1252 = vsel %vm1231, %v233, %v613
      %v1253 = vsel %vm1231, %v235, %v615
      %v1254 = vsel %vm1231, %v236, %v617
      %v1255 = vsel %vm1231, %v237, %v619
      %v1256 = vsel %vm1231, %v239, %v621
      %v1257 = vsel %vm1231, %v240, %v623
      %v1258 = vsel %vm1231, %v241, %v625
      %v1259 = vsel %vm1231, %v243, %v627
      %v1260 = vsel %vm1231, %v244, %v629
      %v1261 = vsel %vm1231, %v245, %v631
      %v1262 = vsel %vm1231, %v247, %v633
      %v1263 = vsel %vm1231, %v248, %v635
      %v1264 = vsel %vm1231, %v249, %v637
      %v1265 = vsel %vm1231, %v251, %v639
      %v1266 = vsel %vm1231, %v252, %v641
      %v1267 = vsel %vm1231, %v253, %v643
      %v1268 = vsel %vm1231, %v255, %v645
      %v1269 = vsel %vm1231, %v256, %v647
      %v1270 = vsel %vm1231, %v257, %v649
      %v1271 = vsel %vm1231, %v259, %v651
      %v1272 = vsel %vm1231, %v260, %v653
      %v1273 = vsel %vm1231, %v261, %v655
      %v1274 = vsel %vm1231, %v263, %v657
      %v1275 = vsel %vm1231, %v264, %v659
      %v1276 = vsel %vm1231, %v265, %v661
      %v1277 = vsel %vm1231, %v267, %v663
      %v1278 = vsel %vm1231, %v268, %v665
      %v1279 = vsel %vm1231, %v269, %v667
      %v1280 = vsel %vm1231, %v271, %v669
      %v1281 = vsel %vm1231, %v272, %v671
      %v1282 = vsel %vm1231, %v273, %v673
      %v1283 = vsel %vm1231, %v275, %v675
      %v1284 = vsel %vm1231, %v276, %v677
      %v1285 = vsel %vm1231, %v277, %v679
      %v1286 = vsel %vm1231, %v279, %v681
      %v1287 = vsel %vm1231, %v280, %v683
      %v1288 = vsel %vm1231, %v281, %v685
      %v1289 = vsel %vm1231, %v283, %v687
      %v1290 = vsel %vm1231, %v284, %v689
      %v1291 = vsel %vm1231, %v285, %v691
      %v1292 = vsel %vm1231, %v287, %v693
      %v1293 = vsel %vm1231, %v288, %v695
      %v1294 = vsel %vm1231, %v289, %v697
      %v1295 = vsel %vm1231, %v291, %v699
      %v1296 = vsel %vm1231, %v292, %v701
      %v1297 = vsel %vm1231, %v293, %v703
      %v1298 = vsel %vm1231, %v295, %v705
      %v1299 = vsel %vm1231, %v296, %v707
      %v1300 = vsel %vm1231, %v297, %v709
      %v1301 = vsel %vm1231, %v299, %v711
      %v1302 = vsel %vm1231, %v300, %v713
      %v1303 = vsel %vm1231, %v301, %v715
      %vm1304 = vcmask 64512
      %v1305 = vsel %vm1304, %v1232, %v792
      %v1306 = vsel %vm1304, %v1233, %v794
      %v1307 = vsel %vm1304, %v1234, %v796
      %v1308 = vsel %vm1304, %v1235, %v798
      %v1309 = vsel %vm1304, %v1236, %v800
      %v1310 = vsel %vm1304, %v1237, %v802
      %v1311 = vsel %vm1304, %v1238, %v804
      %v1312 = vsel %vm1304, %v1239, %v806
      %v1313 = vsel %vm1304, %v1240, %v808
      %v1314 = vsel %vm1304, %v1241, %v810
      %v1315 = vsel %vm1304, %v1242, %v812
      %v1316 = vsel %vm1304, %v1243, %v814
      %v1317 = vsel %vm1304, %v1244, %v816
      %v1318 = vsel %vm1304, %v1245, %v818
      %v1319 = vsel %vm1304, %v1246, %v820
      %v1320 = vsel %vm1304, %v1247, %v822
      %v1321 = vsel %vm1304, %v1248, %v824
      %v1322 = vsel %vm1304, %v1249, %v826
      %v1323 = vsel %vm1304, %v1250, %v828
      %v1324 = vsel %vm1304, %v1251, %v830
      %v1325 = vsel %vm1304, %v1252, %v832
      %v1326 = vsel %vm1304, %v1253, %v834
      %v1327 = vsel %vm1304, %v1254, %v836
      %v1328 = vsel %vm1304, %v1255, %v838
      %v1329 = vsel %vm1304, %v1256, %v840
      %v1330 = vsel %vm1304, %v1257, %v842
      %v1331 = vsel %vm1304, %v1258, %v844
      %v1332 = vsel %vm1304, %v1259, %v846
      %v1333 = vsel %vm1304, %v1260, %v848
      %v1334 = vsel %vm1304, %v1261, %v850
      %v1335 = vsel %vm1304, %v1262, %v852
      %v1336 = vsel %vm1304, %v1263, %v854
      %v1337 = vsel %vm1304, %v1264, %v856
      %v1338 = vsel %vm1304, %v1265, %v858
      %v1339 = vsel %vm1304, %v1266, %v860
      %v1340 = vsel %vm1304, %v1267, %v862
      %v1341 = vsel %vm1304, %v1268, %v864
      %v1342 = vsel %vm1304, %v1269, %v866
      %v1343 = vsel %vm1304, %v1270, %v868
      %v1344 = vsel %vm1304, %v1271, %v870
      %v1345 = vsel %vm1304, %v1272, %v872
      %v1346 = vsel %vm1304, %v1273, %v874
      %v1347 = vsel %vm1304, %v1274, %v876
      %v1348 = vsel %vm1304, %v1275, %v878
      %v1349 = vsel %vm1304, %v1276, %v880
      %v1350 = vsel %vm1304, %v1277, %v882
      %v1351 = vsel %vm1304, %v1278, %v884
      %v1352 = vsel %vm1304, %v1279, %v886
      %v1353 = vsel %vm1304, %v1280, %v888
      %v1354 = vsel %vm1304, %v1281, %v890
      %v1355 = vsel %vm1304, %v1282, %v892
      %v1356 = vsel %vm1304, %v1283, %v894
      %v1357 = vsel %vm1304, %v1284, %v896
      %v1358 = vsel %vm1304, %v1285, %v898
      %v1359 = vsel %vm1304, %v1286, %v900
      %v1360 = vsel %vm1304, %v1287, %v902
      %v1361 = vsel %vm1304, %v1288, %v904
      %v1362 = vsel %vm1304, %v1289, %v906
      %v1363 = vsel %vm1304, %v1290, %v908
      %v1364 = vsel %vm1304, %v1291, %v910
      %v1365 = vsel %vm1304, %v1292, %v912
      %v1366 = vsel %vm1304, %v1293, %v914
      %v1367 = vsel %vm1304, %v1294, %v916
      %v1368 = vsel %vm1304, %v1295, %v918
      %v1369 = vsel %vm1304, %v1296, %v920
      %v1370 = vsel %vm1304, %v1297, %v922
      %v1371 = vsel %vm1304, %v1298, %v924
      %v1372 = vsel %vm1304, %v1299, %v926
      %v1373 = vsel %vm1304, %v1300, %v928
      %v1374 = vsel %vm1304, %v1301, %v930
      %v1375 = vsel %vm1304, %v1302, %v932
      %v1376 = vsel %vm1304, %v1303, %v934
      %vm1377 = vcmask 97280
      %v1378 = vsel %vm1377, %v1305, %v1016
      %v1379 = vsel %vm1377, %v1306, %v1018
      %v1380 = vsel %vm1377, %v1307, %v1020
      %v1381 = vsel %vm1377, %v1308, %v1022
      %v1382 = vsel %vm1377, %v1309, %v1024
      %v1383 = vsel %vm1377, %v1310, %v1026
      %v1384 = vsel %vm1377, %v1311, %v1028
      %v1385 = vsel %vm1377, %v1312, %v1030
      %v1386 = vsel %vm1377, %v1313, %v1032
      %v1387 = vsel %vm1377, %v1314, %v1034
      %v1388 = vsel %vm1377, %v1315, %v1036
      %v1389 = vsel %vm1377, %v1316, %v1038
      %v1390 = vsel %vm1377, %v1317, %v1040
      %v1391 = vsel %vm1377, %v1318, %v1042
      %v1392 = vsel %vm1377, %v1319, %v1044
      %v1393 = vsel %vm1377, %v1320, %v1046
      %v1394 = vsel %vm1377, %v1321, %v1048
      %v1395 = vsel %vm1377, %v1322, %v1050
      %v1396 = vsel %vm1377, %v1323, %v1052
      %v1397 = vsel %vm1377, %v1324, %v1054
      %v1398 = vsel %vm1377, %v1325, %v1056
      %v1399 = vsel %vm1377, %v1326, %v1058
      %v1400 = vsel %vm1377, %v1327, %v1060
      %v1401 = vsel %vm1377, %v1328, %v1062
      %v1402 = vsel %vm1377, %v1329, %v1064
      %v1403 = vsel %vm1377, %v1330, %v1066
      %v1404 = vsel %vm1377, %v1331, %v1068
      %v1405 = vsel %vm1377, %v1332, %v1070
      %v1406 = vsel %vm1377, %v1333, %v1072
      %v1407 = vsel %vm1377, %v1334, %v1074
      %v1408 = vsel %vm1377, %v1335, %v1076
      %v1409 = vsel %vm1377, %v1336, %v1078
      %v1410 = vsel %vm1377, %v1337, %v1080
      %v1411 = vsel %vm1377, %v1338, %v1082
      %v1412 = vsel %vm1377, %v1339, %v1084
      %v1413 = vsel %vm1377, %v1340, %v1086
      %v1414 = vsel %vm1377, %v1341, %v1088
      %v1415 = vsel %vm1377, %v1342, %v1090
      %v1416 = vsel %vm1377, %v1343, %v1092
      %v1417 = vsel %vm1377, %v1344, %v1094
      %v1418 = vsel %vm1377, %v1345, %v1096
      %v1419 = vsel %vm1377, %v1346, %v1098
      %v1420 = vsel %vm1377, %v1347, %v1100
      %v1421 = vsel %vm1377, %v1348, %v1102
      %v1422 = vsel %vm1377, %v1349, %v1104
      %v1423 = vsel %vm1377, %v1350, %v1106
      %v1424 = vsel %vm1377, %v1351, %v1108
      %v1425 = vsel %vm1377, %v1352, %v1110
      %v1426 = vsel %vm1377, %v1353, %v1112
      %v1427 = vsel %vm1377, %v1354, %v1114
      %v1428 = vsel %vm1377, %v1355, %v1116
      %v1429 = vsel %vm1377, %v1356, %v1118
      %v1430 = vsel %vm1377, %v1357, %v1120
      %v1431 = vsel %vm1377, %v1358, %v1122
      %v1432 = vsel %vm1377, %v1359, %v1124
      %v1433 = vsel %vm1377, %v1360, %v1126
      %v1434 = vsel %vm1377, %v1361, %v1128
      %v1435 = vsel %vm1377, %v1362, %v1130
      %v1436 = vsel %vm1377, %v1363, %v1132
      %v1437 = vsel %vm1377, %v1364, %v1134
      %v1438 = vsel %vm1377, %v1365, %v1136
      %v1439 = vsel %vm1377, %v1366, %v1138
      %v1440 = vsel %vm1377, %v1367, %v1140
      %v1441 = vsel %vm1377, %v1368, %v1142
      %v1442 = vsel %vm1377, %v1369, %v1144
      %v1443 = vsel %vm1377, %v1370, %v1146
      %v1444 = vsel %vm1377, %v1371, %v1148
      %v1445 = vsel %vm1377, %v1372, %v1150
      %v1446 = vsel %vm1377, %v1373, %v1152
      %v1447 = vsel %vm1377, %v1374, %v1154
      %v1448 = vsel %vm1377, %v1375, %v1156
      %v1449 = vsel %vm1377, %v1376, %v1158
      %v1450 = vld [vmem:[%s1] sm:$0xff]
      %v1451 = vld [vmem:[%s1 + $0x8] sm:$0xff]
      %v1452 = vld [vmem:[%s2] sm:$0x1]
      %v1454 = vlaneseq
      %v1455 = vshrl.u32 %v1454, 7
      %v1456 = vsub.s32 0, %v1455
      %v1457 = vrot.slane %v1452, %v1456
      %vm1459 = vcmask 130048
      %v1461 = vsel %vm1459, %v1378, 0
      %v1464 = vsel %vm1459, %v1379, 0
      %v1467 = vsel %vm1459, %v1380, 0
      %v1470 = vsel %vm1459, %v1381, 0
      %v1473 = vsel %vm1459, %v1382, 0
      %v1476 = vsel %vm1459, %v1383, 0
      %v1479 = vsel %vm1459, %v1384, 0
      %v1482 = vsel %vm1459, %v1385, 0
      %v1485 = vsel %vm1459, %v1386, 0
      %v1488 = vsel %vm1459, %v1387, 0
      %v1491 = vsel %vm1459, %v1388, 0
      %v1494 = vsel %vm1459, %v1389, 0
      %v1497 = vsel %vm1459, %v1390, 0
      %v1500 = vsel %vm1459, %v1391, 0
      %v1503 = vsel %vm1459, %v1392, 0
      %v1506 = vsel %vm1459, %v1393, 0
      %v1509 = vsel %vm1459, %v1394, 0
      %v1512 = vsel %vm1459, %v1395, 0
      %v1515 = vsel %vm1459, %v1396, 0
      %v1518 = vsel %vm1459, %v1397, 0
      %v1521 = vsel %vm1459, %v1398, 0
      %v1524 = vsel %vm1459, %v1399, 0
      %v1527 = vsel %vm1459, %v1400, 0
      %v1530 = vsel %vm1459, %v1401, 0
      %v1533 = vsel %vm1459, %v1402, 0
      %v1536 = vsel %vm1459, %v1403, 0
      %v1539 = vsel %vm1459, %v1404, 0
      %v1542 = vsel %vm1459, %v1405, 0
      %v1545 = vsel %vm1459, %v1406, 0
      %v1548 = vsel %vm1459, %v1407, 0
      %v1551 = vsel %vm1459, %v1408, 0
      %v1554 = vsel %vm1459, %v1409, 0
      %v1557 = vsel %vm1459, %v1410, 0
      %v1560 = vsel %vm1459, %v1411, 0
      %v1563 = vsel %vm1459, %v1412, 0
      %v1566 = vsel %vm1459, %v1413, 0
      %v1569 = vsel %vm1459, %v1414, 0
      %v1572 = vsel %vm1459, %v1415, 0
      %v1575 = vsel %vm1459, %v1416, 0
      %v1578 = vsel %vm1459, %v1417, 0
      %v1581 = vsel %vm1459, %v1418, 0
      %v1584 = vsel %vm1459, %v1419, 0
      %v1587 = vsel %vm1459, %v1420, 0
      %v1590 = vsel %vm1459, %v1421, 0
      %v1593 = vsel %vm1459, %v1422, 0
      %v1596 = vsel %vm1459, %v1423, 0
      %v1599 = vsel %vm1459, %v1424, 0
      %v1602 = vsel %vm1459, %v1425, 0
      %v1605 = vsel %vm1459, %v1426, 0
      %v1608 = vsel %vm1459, %v1427, 0
      %v1611 = vsel %vm1459, %v1428, 0
      %v1614 = vsel %vm1459, %v1429, 0
      %v1617 = vsel %vm1459, %v1430, 0
      %v1620 = vsel %vm1459, %v1431, 0
      %v1623 = vsel %vm1459, %v1432, 0
      %v1626 = vsel %vm1459, %v1433, 0
      %v1629 = vsel %vm1459, %v1434, 0
      %v1632 = vsel %vm1459, %v1435, 0
      %v1635 = vsel %vm1459, %v1436, 0
      %v1638 = vsel %vm1459, %v1437, 0
      %v1641 = vsel %vm1459, %v1438, 0
      %v1644 = vsel %vm1459, %v1439, 0
      %v1647 = vsel %vm1459, %v1440, 0
      %v1650 = vsel %vm1459, %v1441, 0
      %v1653 = vsel %vm1459, %v1442, 0
      %v1656 = vsel %vm1459, %v1443, 0
      %v1659 = vsel %vm1459, %v1444, 0
      %v1662 = vsel %vm1459, %v1445, 0
      %v1665 = vsel %vm1459, %v1446, 0
      %v1668 = vsel %vm1459, %v1447, 0
      %v1671 = vsel %vm1459, %v1448, 0
      %v1674 = vsel %vm1459, %v1449, 0
      %1676 = vmatprep.subr.mxu0 0.0
      %1677 = vmatpush1.msra.mxu0 %v1450
      %1678 = vmatprep.subr.mxu0 0.0
      %1679 = vmatpush1.msra.mxu0 %v1451
      %1680 = vmatprep.subr.mxu0 0.0
      %1681 = vmatpush1.msra.mxu0 0.0
      %1682 = vmatprep.subr.mxu0 0.0
      %1683 = vmatpush1.msra.mxu0 0.0
      %1684 = vmatprep.subr.mxu0 0.0
      %1685 = vmatpush1.msra.mxu0 0.0
      %1686 = vmatprep.subr.mxu0 0.0
      %1687 = vmatpush1.msra.mxu0 0.0
      %1688 = vmatprep.subr.mxu0 0.0
      %1689 = vmatpush1.msra.mxu0 0.0
      %1690 = vmatprep.subr.mxu0 0.0
      %1691 = vmatpush1.msra.mxu0 0.0
      %1692 = vmatprep.subr.mxu0 0.0
      %1693 = vmatpush1.msra.mxu0 0.0
      %1694 = vmatprep.subr.mxu0 0.0
      %1695 = vmatpush1.msra.mxu0 0.0
      %1696 = vmatprep.subr.mxu0 0.0
      %1697 = vmatpush1.msra.mxu0 0.0
      %1698 = vmatprep.subr.mxu0 0.0
      %1699 = vmatpush1.msra.mxu0 0.0
      %1700 = vmatprep.subr.mxu0 0.0
      %1701 = vmatpush1.msra.mxu0 0.0
      %1702 = vmatprep.subr.mxu0 0.0
      %1703 = vmatpush1.msra.mxu0 0.0
      %1704 = vmatprep.subr.mxu0 0.0
      %1705 = vmatpush1.msra.mxu0 0.0
      %1706 = vmatprep.subr.mxu0 0.0
      %1707 = vmatpush1.msra.mxu0 0.0
      %1708 = vmatprep.subr.mxu0 0.0
      %1709 = vmatpush1.msra.mxu0 0.0
      %1710 = vmatprep.subr.mxu0 0.0
      %1711 = vmatpush1.msra.mxu0 0.0
      %1712 = vmatprep.subr.mxu0 0.0
      %1713 = vmatpush1.msra.mxu0 0.0
      %1714 = vmatprep.subr.mxu0 0.0
      %1715 = vmatpush1.msra.mxu0 0.0
      %1716 = vmatprep.subr.mxu0 0.0
      %1717 = vmatpush1.msra.mxu0 0.0
      %1718 = vmatprep.subr.mxu0 0.0
      %1719 = vmatpush1.msra.mxu0 0.0
      %1720 = vmatprep.subr.mxu0 0.0
      %1721 = vmatpush1.msra.mxu0 0.0
      %1722 = vmatprep.subr.mxu0 0.0
      %1723 = vmatpush1.msra.mxu0 0.0
      %1724 = vmatprep.subr.mxu0 0.0
      %1725 = vmatpush1.msra.mxu0 0.0
      %1726 = vmatprep.subr.mxu0 0.0
      %1727 = vmatpush1.msra.mxu0 0.0
      %1728 = vmatprep.subr.mxu0 0.0
      %1729 = vmatpush1.msra.mxu0 0.0
      %1730 = vmatprep.subr.mxu0 0.0
      %1731 = vmatpush1.msra.mxu0 0.0
      %1732 = vmatprep.subr.mxu0 0.0
      %1733 = vmatpush1.msra.mxu0 0.0
      %1734 = vmatprep.subr.mxu0 0.0
      %1735 = vmatpush1.msra.mxu0 0.0
      %1736 = vmatprep.subr.mxu0 0.0
      %1737 = vmatpush1.msra.mxu0 0.0
      %1738 = vmatprep.subr.mxu0 0.0
      %1739 = vmatpush1.msra.mxu0 0.0
      %1740 = vmatprep.mubr.f32.mxu0 0.0
      %1741 = vmatmul.mubr.f32.gmra.mrb[0].mxu0 %v1461
      %v1742 = vpop.f32.mrb[0].mxu0
      %v1743 = vadd.f32 %v1457, %v1742
      %v1744 = vpop.f32.mrb[0].mxu0
      %1745 = vmatprep.mubr.f32.mxu0 0.0
      %1746 = vmatmul.mubr.f32.gmra.mrb[0].mxu0 %v1464
      %v1747 = vpop.f32.mrb[0].mxu0
      %v1748 = vadd.f32 %v1457, %v1747
      %v1749 = vpop.f32.mrb[0].mxu0
      %1750 = vmatprep.mubr.f32.mxu0 0.0
      %1751 = vmatmul.mubr.f32.gmra.mrb[0].mxu0 %v1467
      %v1752 = vpop.f32.mrb[0].mxu0
      %v1753 = vadd.f32 %v1457, %v1752
      %v1754 = vpop.f32.mrb[0].mxu0
      %1755 = vmatprep.mubr.f32.mxu0 0.0
      %1756 = vmatmul.mubr.f32.gmra.mrb[0].mxu0 %v1470
      %v1757 = vpop.f32.mrb[0].mxu0
      %v1758 = vadd.f32 %v1457, %v1757
      %v1759 = vpop.f32.mrb[0].mxu0
      %1760 = vmatprep.mubr.f32.mxu0 0.0
      %1761 = vmatmul.mubr.f32.gmra.mrb[0].mxu0 %v1473
      %v1762 = vpop.f32.mrb[0].mxu0
      %v1763 = vadd.f32 %v1457, %v1762
      %v1764 = vpop.f32.mrb[0].mxu0
      %1765 = vmatprep.mubr.f32.mxu0 0.0
      %1766 = vmatmul.mubr.f32.gmra.mrb[0].mxu0 %v1476
      %v1767 = vpop.f32.mrb[0].mxu0
      %v1768 = vadd.f32 %v1457, %v1767
      %v1769 = vpop.f32.mrb[0].mxu0
      %1770 = vmatprep.mubr.f32.mxu0 0.0
      %1771 = vmatmul.mubr.f32.gmra.mrb[0].mxu0 %v1479
      %v1772 = vpop.f32.mrb[0].mxu0
      %v1773 = vadd.f32 %v1457, %v1772
      %v1774 = vpop.f32.mrb[0].mxu0
      %1775 = vmatprep.mubr.f32.mxu0 0.0
      %1776 = vmatmul.mubr.f32.gmra.mrb[0].mxu0 %v1482
      %v1777 = vpop.f32.mrb[0].mxu0
      %v1778 = vadd.f32 %v1457, %v1777
      %v1779 = vpop.f32.mrb[0].mxu0
      %1780 = vmatprep.mubr.f32.mxu0 0.0
      %1781 = vmatmul.mubr.f32.gmra.mrb[0].mxu0 %v1485
      %v1782 = vpop.f32.mrb[0].mxu0
      %v1783 = vadd.f32 %v1457, %v1782
      %v1784 = vpop.f32.mrb[0].mxu0
      %1785 = vmatprep.mubr.f32.mxu0 0.0
      %1786 = vmatmul.mubr.f32.gmra.mrb[0].mxu0 %v1488
      %v1787 = vpop.f32.mrb[0].mxu0
      %v1788 = vadd.f32 %v1457, %v1787
      %v1789 = vpop.f32.mrb[0].mxu0
      %1790 = vmatprep.mubr.f32.mxu0 0.0
      %1791 = vmatmul.mubr.f32.gmra.mrb[0].mxu0 %v1491
      %v1792 = vpop.f32.mrb[0].mxu0
      %v1793 = vadd.f32 %v1457, %v1792
      %v1794 = vpop.f32.mrb[0].mxu0
      %1795 = vmatprep.mubr.f32.mxu0 0.0
      %1796 = vmatmul.mubr.f32.gmra.mrb[0].mxu0 %v1494
      %v1797 = vpop.f32.mrb[0].mxu0
      %v1798 = vadd.f32 %v1457, %v1797
      %v1799 = vpop.f32.mrb[0].mxu0
      %1800 = vmatprep.mubr.f32.mxu0 0.0
      %1801 = vmatmul.mubr.f32.gmra.mrb[0].mxu0 %v1497
      %v1802 = vpop.f32.mrb[0].mxu0
      %v1803 = vadd.f32 %v1457, %v1802
      %v1804 = vpop.f32.mrb[0].mxu0
      %1805 = vmatprep.mubr.f32.mxu0 0.0
      %1806 = vmatmul.mubr.f32.gmra.mrb[0].mxu0 %v1500
      %v1807 = vpop.f32.mrb[0].mxu0
      %v1808 = vadd.f32 %v1457, %v1807
      %v1809 = vpop.f32.mrb[0].mxu0
      %1810 = vmatprep.mubr.f32.mxu0 0.0
      %1811 = vmatmul.mubr.f32.gmra.mrb[0].mxu0 %v1503
      %v1812 = vpop.f32.mrb[0].mxu0
      %v1813 = vadd.f32 %v1457, %v1812
      %v1814 = vpop.f32.mrb[0].mxu0
      %1815 = vmatprep.mubr.f32.mxu0 0.0
      %1816 = vmatmul.mubr.f32.gmra.mrb[0].mxu0 %v1506
      %v1817 = vpop.f32.mrb[0].mxu0
      %v1818 = vadd.f32 %v1457, %v1817
      %v1819 = vpop.f32.mrb[0].mxu0
      %1820 = vmatprep.mubr.f32.mxu0 0.0
      %1821 = vmatmul.mubr.f32.gmra.mrb[0].mxu0 %v1509
      %v1822 = vpop.f32.mrb[0].mxu0
      %v1823 = vadd.f32 %v1457, %v1822
      %v1824 = vpop.f32.mrb[0].mxu0
      %1825 = vmatprep.mubr.f32.mxu0 0.0
      %1826 = vmatmul.mubr.f32.gmra.mrb[0].mxu0 %v1512
      %v1827 = vpop.f32.mrb[0].mxu0
      %v1828 = vadd.f32 %v1457, %v1827
      %v1829 = vpop.f32.mrb[0].mxu0
      %1830 = vmatprep.mubr.f32.mxu0 0.0
      %1831 = vmatmul.mubr.f32.gmra.mrb[0].mxu0 %v1515
      %v1832 = vpop.f32.mrb[0].mxu0
      %v1833 = vadd.f32 %v1457, %v1832
      %v1834 = vpop.f32.mrb[0].mxu0
      %1835 = vmatprep.mubr.f32.mxu0 0.0
      %1836 = vmatmul.mubr.f32.gmra.mrb[0].mxu0 %v1518
      %v1837 = vpop.f32.mrb[0].mxu0
      %v1838 = vadd.f32 %v1457, %v1837
      %v1839 = vpop.f32.mrb[0].mxu0
      %1840 = vmatprep.mubr.f32.mxu0 0.0
      %1841 = vmatmul.mubr.f32.gmra.mrb[0].mxu0 %v1521
      %v1842 = vpop.f32.mrb[0].mxu0
      %v1843 = vadd.f32 %v1457, %v1842
      %v1844 = vpop.f32.mrb[0].mxu0
      %1845 = vmatprep.mubr.f32.mxu0 0.0
      %1846 = vmatmul.mubr.f32.gmra.mrb[0].mxu0 %v1524
      %v1847 = vpop.f32.mrb[0].mxu0
      %v1848 = vadd.f32 %v1457, %v1847
      %v1849 = vpop.f32.mrb[0].mxu0
      %1850 = vmatprep.mubr.f32.mxu0 0.0
      %1851 = vmatmul.mubr.f32.gmra.mrb[0].mxu0 %v1527
      %v1852 = vpop.f32.mrb[0].mxu0
      %v1853 = vadd.f32 %v1457, %v1852
      %v1854 = vpop.f32.mrb[0].mxu0
      %1855 = vmatprep.mubr.f32.mxu0 0.0
      %1856 = vmatmul.mubr.f32.gmra.mrb[0].mxu0 %v1530
      %v1857 = vpop.f32.mrb[0].mxu0
      %v1858 = vadd.f32 %v1457, %v1857
      %v1859 = vpop.f32.mrb[0].mxu0
      %1860 = vmatprep.mubr.f32.mxu0 0.0
      %1861 = vmatmul.mubr.f32.gmra.mrb[0].mxu0 %v1533
      %v1862 = vpop.f32.mrb[0].mxu0
      %v1863 = vadd.f32 %v1457, %v1862
      %v1864 = vpop.f32.mrb[0].mxu0
      %1865 = vmatprep.mubr.f32.mxu0 0.0
      %1866 = vmatmul.mubr.f32.gmra.mrb[0].mxu0 %v1536
      %v1867 = vpop.f32.mrb[0].mxu0
      %v1868 = vadd.f32 %v1457, %v1867
      %v1869 = vpop.f32.mrb[0].mxu0
      %1870 = vmatprep.mubr.f32.mxu0 0.0
      %1871 = vmatmul.mubr.f32.gmra.mrb[0].mxu0 %v1539
      %v1872 = vpop.f32.mrb[0].mxu0
      %v1873 = vadd.f32 %v1457, %v1872
      %v1874 = vpop.f32.mrb[0].mxu0
      %1875 = vmatprep.mubr.f32.mxu0 0.0
      %1876 = vmatmul.mubr.f32.gmra.mrb[0].mxu0 %v1542
      %v1877 = vpop.f32.mrb[0].mxu0
      %v1878 = vadd.f32 %v1457, %v1877
      %v1879 = vpop.f32.mrb[0].mxu0
      %1880 = vmatprep.mubr.f32.mxu0 0.0
      %1881 = vmatmul.mubr.f32.gmra.mrb[0].mxu0 %v1545
      %v1882 = vpop.f32.mrb[0].mxu0
      %v1883 = vadd.f32 %v1457, %v1882
      %v1884 = vpop.f32.mrb[0].mxu0
      %1885 = vmatprep.mubr.f32.mxu0 0.0
      %1886 = vmatmul.mubr.f32.gmra.mrb[0].mxu0 %v1548
      %v1887 = vpop.f32.mrb[0].mxu0
      %v1888 = vadd.f32 %v1457, %v1887
      %v1889 = vpop.f32.mrb[0].mxu0
      %1890 = vmatprep.mubr.f32.mxu0 0.0
      %1891 = vmatmul.mubr.f32.gmra.mrb[0].mxu0 %v1551
      %v1892 = vpop.f32.mrb[0].mxu0
      %v1893 = vadd.f32 %v1457, %v1892
      %v1894 = vpop.f32.mrb[0].mxu0
      %1895 = vmatprep.mubr.f32.mxu0 0.0
      %1896 = vmatmul.mubr.f32.gmra.mrb[0].mxu0 %v1554
      %v1897 = vpop.f32.mrb[0].mxu0
      %v1898 = vadd.f32 %v1457, %v1897
      %v1899 = vpop.f32.mrb[0].mxu0
      %1900 = vmatprep.mubr.f32.mxu0 0.0
      %1901 = vmatmul.mubr.f32.gmra.mrb[0].mxu0 %v1557
      %v1902 = vpop.f32.mrb[0].mxu0
      %v1903 = vadd.f32 %v1457, %v1902
      %v1904 = vpop.f32.mrb[0].mxu0
      %1905 = vmatprep.mubr.f32.mxu0 0.0
      %1906 = vmatmul.mubr.f32.gmra.mrb[0].mxu0 %v1560
      %v1907 = vpop.f32.mrb[0].mxu0
      %v1908 = vadd.f32 %v1457, %v1907
      %v1909 = vpop.f32.mrb[0].mxu0
      %1910 = vmatprep.mubr.f32.mxu0 0.0
      %1911 = vmatmul.mubr.f32.gmra.mrb[0].mxu0 %v1563
      %v1912 = vpop.f32.mrb[0].mxu0
      %v1913 = vadd.f32 %v1457, %v1912
      %v1914 = vpop.f32.mrb[0].mxu0
      %1915 = vmatprep.mubr.f32.mxu0 0.0
      %1916 = vmatmul.mubr.f32.gmra.mrb[0].mxu0 %v1566
      %v1917 = vpop.f32.mrb[0].mxu0
      %v1918 = vadd.f32 %v1457, %v1917
      %v1919 = vpop.f32.mrb[0].mxu0
      %1920 = vmatprep.mubr.f32.mxu0 0.0
      %1921 = vmatmul.mubr.f32.gmra.mrb[0].mxu0 %v1569
      %v1922 = vpop.f32.mrb[0].mxu0
      %v1923 = vadd.f32 %v1457, %v1922
      %v1924 = vpop.f32.mrb[0].mxu0
      %1925 = vmatprep.mubr.f32.mxu0 0.0
      %1926 = vmatmul.mubr.f32.gmra.mrb[0].mxu0 %v1572
      %v1927 = vpop.f32.mrb[0].mxu0
      %v1928 = vadd.f32 %v1457, %v1927
      %v1929 = vpop.f32.mrb[0].mxu0
      %1930 = vmatprep.mubr.f32.mxu0 0.0
      %1931 = vmatmul.mubr.f32.gmra.mrb[0].mxu0 %v1575
      %v1932 = vpop.f32.mrb[0].mxu0
      %v1933 = vadd.f32 %v1457, %v1932
      %v1934 = vpop.f32.mrb[0].mxu0
      %1935 = vmatprep.mubr.f32.mxu0 0.0
      %1936 = vmatmul.mubr.f32.gmra.mrb[0].mxu0 %v1578
      %v1937 = vpop.f32.mrb[0].mxu0
      %v1938 = vadd.f32 %v1457, %v1937
      %v1939 = vpop.f32.mrb[0].mxu0
      %1940 = vmatprep.mubr.f32.mxu0 0.0
      %1941 = vmatmul.mubr.f32.gmra.mrb[0].mxu0 %v1581
      %v1942 = vpop.f32.mrb[0].mxu0
      %v1943 = vadd.f32 %v1457, %v1942
      %v1944 = vpop.f32.mrb[0].mxu0
      %1945 = vmatprep.mubr.f32.mxu0 0.0
      %1946 = vmatmul.mubr.f32.gmra.mrb[0].mxu0 %v1584
      %v1947 = vpop.f32.mrb[0].mxu0
      %v1948 = vadd.f32 %v1457, %v1947
      %v1949 = vpop.f32.mrb[0].mxu0
      %1950 = vmatprep.mubr.f32.mxu0 0.0
      %1951 = vmatmul.mubr.f32.gmra.mrb[0].mxu0 %v1587
      %v1952 = vpop.f32.mrb[0].mxu0
      %v1953 = vadd.f32 %v1457, %v1952
      %v1954 = vpop.f32.mrb[0].mxu0
      %1955 = vmatprep.mubr.f32.mxu0 0.0
      %1956 = vmatmul.mubr.f32.gmra.mrb[0].mxu0 %v1590
      %v1957 = vpop.f32.mrb[0].mxu0
      %v1958 = vadd.f32 %v1457, %v1957
      %v1959 = vpop.f32.mrb[0].mxu0
      %1960 = vmatprep.mubr.f32.mxu0 0.0
      %1961 = vmatmul.mubr.f32.gmra.mrb[0].mxu0 %v1593
      %v1962 = vpop.f32.mrb[0].mxu0
      %v1963 = vadd.f32 %v1457, %v1962
      %v1964 = vpop.f32.mrb[0].mxu0
      %1965 = vmatprep.mubr.f32.mxu0 0.0
      %1966 = vmatmul.mubr.f32.gmra.mrb[0].mxu0 %v1596
      %v1967 = vpop.f32.mrb[0].mxu0
      %v1968 = vadd.f32 %v1457, %v1967
      %v1969 = vpop.f32.mrb[0].mxu0
      %1970 = vmatprep.mubr.f32.mxu0 0.0
      %1971 = vmatmul.mubr.f32.gmra.mrb[0].mxu0 %v1599
      %v1972 = vpop.f32.mrb[0].mxu0
      %v1973 = vadd.f32 %v1457, %v1972
      %v1974 = vpop.f32.mrb[0].mxu0
      %1975 = vmatprep.mubr.f32.mxu0 0.0
      %1976 = vmatmul.mubr.f32.gmra.mrb[0].mxu0 %v1602
      %v1977 = vpop.f32.mrb[0].mxu0
      %v1978 = vadd.f32 %v1457, %v1977
      %v1979 = vpop.f32.mrb[0].mxu0
      %1980 = vmatprep.mubr.f32.mxu0 0.0
      %1981 = vmatmul.mubr.f32.gmra.mrb[0].mxu0 %v1605
      %v1982 = vpop.f32.mrb[0].mxu0
      %v1983 = vadd.f32 %v1457, %v1982
      %v1984 = vpop.f32.mrb[0].mxu0
      %1985 = vmatprep.mubr.f32.mxu0 0.0
      %1986 = vmatmul.mubr.f32.gmra.mrb[0].mxu0 %v1608
      %v1987 = vpop.f32.mrb[0].mxu0
      %v1988 = vadd.f32 %v1457, %v1987
      %v1989 = vpop.f32.mrb[0].mxu0
      %1990 = vmatprep.mubr.f32.mxu0 0.0
      %1991 = vmatmul.mubr.f32.gmra.mrb[0].mxu0 %v1611
      %v1992 = vpop.f32.mrb[0].mxu0
      %v1993 = vadd.f32 %v1457, %v1992
      %v1994 = vpop.f32.mrb[0].mxu0
      %1995 = vmatprep.mubr.f32.mxu0 0.0
      %1996 = vmatmul.mubr.f32.gmra.mrb[0].mxu0 %v1614
      %v1997 = vpop.f32.mrb[0].mxu0
      %v1998 = vadd.f32 %v1457, %v1997
      %v1999 = vpop.f32.mrb[0].mxu0
      %2000 = vmatprep.mubr.f32.mxu0 0.0
      %2001 = vmatmul.mubr.f32.gmra.mrb[0].mxu0 %v1617
      %v2002 = vpop.f32.mrb[0].mxu0
      %v2003 = vadd.f32 %v1457, %v2002
      %v2004 = vpop.f32.mrb[0].mxu0
      %2005 = vmatprep.mubr.f32.mxu0 0.0
      %2006 = vmatmul.mubr.f32.gmra.mrb[0].mxu0 %v1620
      %v2007 = vpop.f32.mrb[0].mxu0
      %v2008 = vadd.f32 %v1457, %v2007
      %v2009 = vpop.f32.mrb[0].mxu0
      %2010 = vmatprep.mubr.f32.mxu0 0.0
      %2011 = vmatmul.mubr.f32.gmra.mrb[0].mxu0 %v1623
      %v2012 = vpop.f32.mrb[0].mxu0
      %v2013 = vadd.f32 %v1457, %v2012
      %v2014 = vpop.f32.mrb[0].mxu0
      %2015 = vmatprep.mubr.f32.mxu0 0.0
      %2016 = vmatmul.mubr.f32.gmra.mrb[0].mxu0 %v1626
      %v2017 = vpop.f32.mrb[0].mxu0
      %v2018 = vadd.f32 %v1457, %v2017
      %v2019 = vpop.f32.mrb[0].mxu0
      %2020 = vmatprep.mubr.f32.mxu0 0.0
      %2021 = vmatmul.mubr.f32.gmra.mrb[0].mxu0 %v1629
      %v2022 = vpop.f32.mrb[0].mxu0
      %v2023 = vadd.f32 %v1457, %v2022
      %v2024 = vpop.f32.mrb[0].mxu0
      %2025 = vmatprep.mubr.f32.mxu0 0.0
      %2026 = vmatmul.mubr.f32.gmra.mrb[0].mxu0 %v1632
      %v2027 = vpop.f32.mrb[0].mxu0
      %v2028 = vadd.f32 %v1457, %v2027
      %v2029 = vpop.f32.mrb[0].mxu0
      %2030 = vmatprep.mubr.f32.mxu0 0.0
      %2031 = vmatmul.mubr.f32.gmra.mrb[0].mxu0 %v1635
      %v2032 = vpop.f32.mrb[0].mxu0
      %v2033 = vadd.f32 %v1457, %v2032
      %v2034 = vpop.f32.mrb[0].mxu0
      %2035 = vmatprep.mubr.f32.mxu0 0.0
      %2036 = vmatmul.mubr.f32.gmra.mrb[0].mxu0 %v1638
      %v2037 = vpop.f32.mrb[0].mxu0
      %v2038 = vadd.f32 %v1457, %v2037
      %v2039 = vpop.f32.mrb[0].mxu0
      %2040 = vmatprep.mubr.f32.mxu0 0.0
      %2041 = vmatmul.mubr.f32.gmra.mrb[0].mxu0 %v1641
      %v2042 = vpop.f32.mrb[0].mxu0
      %v2043 = vadd.f32 %v1457, %v2042
      %v2044 = vpop.f32.mrb[0].mxu0
      %2045 = vmatprep.mubr.f32.mxu0 0.0
      %2046 = vmatmul.mubr.f32.gmra.mrb[0].mxu0 %v1644
      %v2047 = vpop.f32.mrb[0].mxu0
      %v2048 = vadd.f32 %v1457, %v2047
      %v2049 = vpop.f32.mrb[0].mxu0
      %2050 = vmatprep.mubr.f32.mxu0 0.0
      %2051 = vmatmul.mubr.f32.gmra.mrb[0].mxu0 %v1647
      %v2052 = vpop.f32.mrb[0].mxu0
      %v2053 = vadd.f32 %v1457, %v2052
      %v2054 = vpop.f32.mrb[0].mxu0
      %2055 = vmatprep.mubr.f32.mxu0 0.0
      %2056 = vmatmul.mubr.f32.gmra.mrb[0].mxu0 %v1650
      %v2057 = vpop.f32.mrb[0].mxu0
      %v2058 = vadd.f32 %v1457, %v2057
      %v2059 = vpop.f32.mrb[0].mxu0
      %2060 = vmatprep.mubr.f32.mxu0 0.0
      %2061 = vmatmul.mubr.f32.gmra.mrb[0].mxu0 %v1653
      %v2062 = vpop.f32.mrb[0].mxu0
      %v2063 = vadd.f32 %v1457, %v2062
      %v2064 = vpop.f32.mrb[0].mxu0
      %2065 = vmatprep.mubr.f32.mxu0 0.0
      %2066 = vmatmul.mubr.f32.gmra.mrb[0].mxu0 %v1656
      %v2067 = vpop.f32.mrb[0].mxu0
      %v2068 = vadd.f32 %v1457, %v2067
      %v2069 = vpop.f32.mrb[0].mxu0
      %2070 = vmatprep.mubr.f32.mxu0 0.0
      %2071 = vmatmul.mubr.f32.gmra.mrb[0].mxu0 %v1659
      %v2072 = vpop.f32.mrb[0].mxu0
      %v2073 = vadd.f32 %v1457, %v2072
      %v2074 = vpop.f32.mrb[0].mxu0
      %2075 = vmatprep.mubr.f32.mxu0 0.0
      %2076 = vmatmul.mubr.f32.gmra.mrb[0].mxu0 %v1662
      %v2077 = vpop.f32.mrb[0].mxu0
      %v2078 = vadd.f32 %v1457, %v2077
      %v2079 = vpop.f32.mrb[0].mxu0
      %2080 = vmatprep.mubr.f32.mxu0 0.0
      %2081 = vmatmul.mubr.f32.gmra.mrb[0].mxu0 %v1665
      %v2082 = vpop.f32.mrb[0].mxu0
      %v2083 = vadd.f32 %v1457, %v2082
      %v2084 = vpop.f32.mrb[0].mxu0
      %2085 = vmatprep.mubr.f32.mxu0 0.0
      %2086 = vmatmul.mubr.f32.gmra.mrb[0].mxu0 %v1668
      %v2087 = vpop.f32.mrb[0].mxu0
      %v2088 = vadd.f32 %v1457, %v2087
      %v2089 = vpop.f32.mrb[0].mxu0
      %2090 = vmatprep.mubr.f32.mxu0 0.0
      %2091 = vmatmul.mubr.f32.gmra.mrb[0].mxu0 %v1671
      %v2092 = vpop.f32.mrb[0].mxu0
      %v2093 = vadd.f32 %v1457, %v2092
      %v2094 = vpop.f32.mrb[0].mxu0
      %2095 = vmatprep.mubr.f32.mxu0 0.0
      %2096 = vmatmul.mubr.f32.gmra.mrb[0].mxu0 %v1674
      %v2097 = vpop.f32.mrb[0].mxu0
      %v2098 = vadd.f32 %v1457, %v2097
      %v2099 = vpop.f32.mrb[0].mxu0
      %2100 = vdwg.mxu0
      %vm2101 = vcmask 261120
      %2102 = vst.msk [vmem:[%s206] sm:$0xff] %vm2101, %v1743
      %2103 = vst.msk [vmem:[%s206 + $0x8] sm:$0xff] %vm2101, %v1748
      %2104 = vst.msk [vmem:[%s206 + $0x10] sm:$0xff] %vm2101, %v1753
      %2105 = vst.msk [vmem:[%s206 + $0x18] sm:$0xff] %vm2101, %v1758
      %2106 = vst.msk [vmem:[%s206 + $0x20] sm:$0xff] %vm2101, %v1763
      %2107 = vst.msk [vmem:[%s206 + $0x28] sm:$0xff] %vm2101, %v1768
      %2108 = vst.msk [vmem:[%s206 + $0x30] sm:$0xff] %vm2101, %v1773
      %2109 = vst.msk [vmem:[%s206 + $0x38] sm:$0xff] %vm2101, %v1778
      %2110 = vst.msk [vmem:[%s206 + $0x40] sm:$0xff] %vm2101, %v1783
      %2111 = vst.msk [vmem:[%s206 + $0x48] sm:$0xff] %vm2101, %v1788
      %2112 = vst.msk [vmem:[%s206 + $0x50] sm:$0xff] %vm2101, %v1793
      %2113 = vst.msk [vmem:[%s206 + $0x58] sm:$0xff] %vm2101, %v1798
      %2114 = vst.msk [vmem:[%s206 + $0x60] sm:$0xff] %vm2101, %v1803
      %2115 = vst.msk [vmem:[%s206 + $0x68] sm:$0xff] %vm2101, %v1808
      %2116 = vst.msk [vmem:[%s206 + $0x70] sm:$0xff] %vm2101, %v1813
      %2117 = vst.msk [vmem:[%s206 + $0x78] sm:$0xff] %vm2101, %v1818
      %2118 = vst.msk [vmem:[%s206 + $0x80] sm:$0xff] %vm2101, %v1823
      %2119 = vst.msk [vmem:[%s206 + $0x88] sm:$0xff] %vm2101, %v1828
      %2120 = vst.msk [vmem:[%s206 + $0x90] sm:$0xff] %vm2101, %v1833
      %2121 = vst.msk [vmem:[%s206 + $0x98] sm:$0xff] %vm2101, %v1838
      %2122 = vst.msk [vmem:[%s206 + $0xa0] sm:$0xff] %vm2101, %v1843
      %2123 = vst.msk [vmem:[%s206 + $0xa8] sm:$0xff] %vm2101, %v1848
      %2124 = vst.msk [vmem:[%s206 + $0xb0] sm:$0xff] %vm2101, %v1853
      %2125 = vst.msk [vmem:[%s206 + $0xb8] sm:$0xff] %vm2101, %v1858
      %2126 = vst.msk [vmem:[%s206 + $0xc0] sm:$0xff] %vm2101, %v1863
      %2127 = vst.msk [vmem:[%s206 + $0xc8] sm:$0xff] %vm2101, %v1868
      %2128 = vst.msk [vmem:[%s206 + $0xd0] sm:$0xff] %vm2101, %v1873
      %2129 = vst.msk [vmem:[%s206 + $0xd8] sm:$0xff] %vm2101, %v1878
      %2130 = vst.msk [vmem:[%s206 + $0xe0] sm:$0xff] %vm2101, %v1883
      %2131 = vst.msk [vmem:[%s206 + $0xe8] sm:$0xff] %vm2101, %v1888
      %2132 = vst.msk [vmem:[%s206 + $0xf0] sm:$0xff] %vm2101, %v1893
      %2133 = vst.msk [vmem:[%s206 + $0xf8] sm:$0xff] %vm2101, %v1898
      %2134 = vst.msk [vmem:[%s206 + $0x100] sm:$0xff] %vm2101, %v1903
      %2135 = vst.msk [vmem:[%s206 + $0x108] sm:$0xff] %vm2101, %v1908
      %2136 = vst.msk [vmem:[%s206 + $0x110] sm:$0xff] %vm2101, %v1913
      %2137 = vst.msk [vmem:[%s206 + $0x118] sm:$0xff] %vm2101, %v1918
      %2138 = vst.msk [vmem:[%s206 + $0x120] sm:$0xff] %vm2101, %v1923
      %2139 = vst.msk [vmem:[%s206 + $0x128] sm:$0xff] %vm2101, %v1928
      %2140 = vst.msk [vmem:[%s206 + $0x130] sm:$0xff] %vm2101, %v1933
      %2141 = vst.msk [vmem:[%s206 + $0x138] sm:$0xff] %vm2101, %v1938
      %2142 = vst.msk [vmem:[%s206 + $0x140] sm:$0xff] %vm2101, %v1943
      %2143 = vst.msk [vmem:[%s206 + $0x148] sm:$0xff] %vm2101, %v1948
      %2144 = vst.msk [vmem:[%s206 + $0x150] sm:$0xff] %vm2101, %v1953
      %2145 = vst.msk [vmem:[%s206 + $0x158] sm:$0xff] %vm2101, %v1958
      %2146 = vst.msk [vmem:[%s206 + $0x160] sm:$0xff] %vm2101, %v1963
      %2147 = vst.msk [vmem:[%s206 + $0x168] sm:$0xff] %vm2101, %v1968
      %2148 = vst.msk [vmem:[%s206 + $0x170] sm:$0xff] %vm2101, %v1973
      %2149 = vst.msk [vmem:[%s206 + $0x178] sm:$0xff] %vm2101, %v1978
      %2150 = vst.msk [vmem:[%s206 + $0x180] sm:$0xff] %vm2101, %v1983
      %2151 = vst.msk [vmem:[%s206 + $0x188] sm:$0xff] %vm2101, %v1988
      %2152 = vst.msk [vmem:[%s206 + $0x190] sm:$0xff] %vm2101, %v1993
      %2153 = vst.msk [vmem:[%s206 + $0x198] sm:$0xff] %vm2101, %v1998
      %2154 = vst.msk [vmem:[%s206 + $0x1a0] sm:$0xff] %vm2101, %v2003
      %2155 = vst.msk [vmem:[%s206 + $0x1a8] sm:$0xff] %vm2101, %v2008
      %2156 = vst.msk [vmem:[%s206 + $0x1b0] sm:$0xff] %vm2101, %v2013
      %2157 = vst.msk [vmem:[%s206 + $0x1b8] sm:$0xff] %vm2101, %v2018
      %2158 = vst.msk [vmem:[%s206 + $0x1c0] sm:$0xff] %vm2101, %v2023
      %2159 = vst.msk [vmem:[%s206 + $0x1c8] sm:$0xff] %vm2101, %v2028
      %2160 = vst.msk [vmem:[%s206 + $0x1d0] sm:$0xff] %vm2101, %v2033
      %2161 = vst.msk [vmem:[%s206 + $0x1d8] sm:$0xff] %vm2101, %v2038
      %2162 = vst.msk [vmem:[%s206 + $0x1e0] sm:$0xff] %vm2101, %v2043
      %2163 = vst.msk [vmem:[%s206 + $0x1e8] sm:$0xff] %vm2101, %v2048
      %2164 = vst.msk [vmem:[%s206 + $0x1f0] sm:$0xff] %vm2101, %v2053
      %2165 = vst.msk [vmem:[%s206 + $0x1f8] sm:$0xff] %vm2101, %v2058
      %2166 = vst.msk [vmem:[%s206 + $0x200] sm:$0xff] %vm2101, %v2063
      %2167 = vst.msk [vmem:[%s206 + $0x208] sm:$0xff] %vm2101, %v2068
      %2168 = vst.msk [vmem:[%s206 + $0x210] sm:$0xff] %vm2101, %v2073
      %2169 = vst.msk [vmem:[%s206 + $0x218] sm:$0xff] %vm2101, %v2078
      %2170 = vst.msk [vmem:[%s206 + $0x220] sm:$0xff] %vm2101, %v2083
      %2171 = vst.msk [vmem:[%s206 + $0x228] sm:$0xff] %vm2101, %v2088
      %2172 = vst.msk [vmem:[%s206 + $0x230] sm:$0xff] %vm2101, %v2093
      %2173 = vst.msk [vmem:[%s206 + $0x238] sm:$0xff] %vm2101, %v2098
      %p2174 = scmp.lt.s32.totalorder %s18, 1
      %s2175 = scalar_select %p2174, %s18, 1
      %p2176 = scmp.lt.s32.totalorder %s19, 0
      %s2177 = scalar_select %p2176, %s19, 0
      %s2178 = smul.addr %s2177, 72
      %s2179 = smul.addr %s2175, 72
      %s2180 = sadd.s32 %s2178, %s2179
      %s2181 = smul.addr %s2180, 8
      %s2182 = scalar_lea.vmem %s3, %s2181
      // Predicated region
      $region33: #{tpu_custom_call.1} parent=31 // pred_check
        %p2183 = pneg %p116
      $region34: #{tpu_custom_call.1} parent=31 // pred_check_branch
        %2185 = sbr.rel (%p2183) target = $region36
      $region35: #{tpu_custom_call.1} parent=31 // pred_region
        _
      $region36: #{tpu_custom_call.1} parent=31 // pred_fallthru
        _
    $region32: #{tpu_custom_call.1} parent=5 // pred_fallthru
      _
    %p2186 = scmp.le.s32.totalorder 2, %s9
    // Predicated region
    $region37: #{tpu_custom_call.1} parent=5 // pred_check
      %p2187 = pneg %p2186
    $region38: #{tpu_custom_call.1} parent=5 // pred_check_branch
      %2189 = sbr.rel (%p2187) target = $region40
    $region39: #{tpu_custom_call.1} parent=5 // pred_region
      %s2190 = ssub.s32 %s9, 2
      // Predicated region
      $region41: #{tpu_custom_call.1} parent=39 // pred_check
        %p2191 = pneg %p122
      $region42: #{tpu_custom_call.1} parent=39 // pred_check_branch
        %2193 = sbr.rel (%p2191) target = $region44
      $region43: #{tpu_custom_call.1} parent=39 // pred_region
        %p2194 = scmp.lt.s32.totalorder %s20, 1
        %s2195 = scalar_select %p2194, %s20, 1
        %p2196 = scmp.lt.s32.totalorder %s21, 0
        %s2197 = scalar_select %p2196, %s21, 0
        %s2198 = smul.addr %s2197, 72
        %s2199 = smul.addr %s2195, 72
        %s2200 = sadd.s32 %s2198, %s2199
        %s2201 = smul.addr %s2200, 8
        %s2202 = scalar_lea.vmem %s3, %s2201
      $region44: #{tpu_custom_call.1} parent=39 // pred_fallthru
        _
    $region40: #{tpu_custom_call.1} parent=5 // pred_fallthru
      _
  $region6: #{tpu_custom_call.1} parent=0 // loop_footer
    %s13 = sadd.s32 1, %s9
  $region7: #{tpu_custom_call.1} parent=0 // loop_footer_branch
    %8 = sbr.rel target = $region3
  $region8: #{tpu_custom_call.1} parent=0 // loop_exit
    _

// kernel: tpu_custom_call.1
$region0: #{tpu_custom_call.1}
  #allocation0 [shape = 'u32[]', space=smem, size = 0x4, offset = 0x4, fixed_abs, tag = 'smem constant byte address 0x4 - core index']
  #allocation1 [shape = 'u32[144,128]{1,0:T(1,128)}', space=vmem, size = 0x12000, scoped, tag = 'internal scratch']
  %s0 = inlined_call_operand.vmem [shape: f32[2,1,25,25,4], index: 0, kind: input, shape index: {}]
  %s1 = inlined_call_operand.vmem [shape: f32[16,32], index: 1, kind: input, shape index: {}]
  %s2 = inlined_call_operand.vmem [shape: f32[1,32], index: 2, kind: input, shape index: {}]
  %s3 = inlined_call_operand.vmem [shape: f32[2,1,576,32], index: 3, kind: output, shape index: {}]
  %s4 = sld [smem:[#allocation0]]
  $region45: #{tpu_custom_call.1} parent=0
    _
  %s6 = ssub.s32 1, %s4
  %s7 = scalar_select 0, %s6, %s4
  loop: start=0, step=1, limit=4
  $region2: #{tpu_custom_call.1} parent=0 // loop_pre_header
    _
  $region3: #{tpu_custom_call.1} parent=0 // loop_header
    %s9 = sphi 0, %s13
    %p10 = scmp.ge.s32.totalorder %s9, 4
    %s16 = sphi 0, %s28
    %s17 = sphi 0, %s24
    %s18 = sphi 0, %s16
    %s19 = sphi 0, %s17
    %s20 = sphi 0, %s18
    %s21 = sphi 0, %s19
    %s33 = sphi 0, %s35
    %s36 = sphi 0, %s33
    %s37 = sphi 0, %s36
    %s53 = sphi 0, %s37
    %s57 = sphi 0, %s57
    %s59 = sphi 0, %s57
    %s60 = sphi 0, %s59
    %s74 = sphi 0, %s60
    %s78 = sphi 0, %s78
    %s80 = sphi 0, %s78
    %s81 = sphi 0, %s80
    %s95 = sphi 0, %s81
    %s103 = sphi 0, %s105
    %s106 = sphi 0, %s103
    %s107 = sphi 0, %s106
    %s123 = sphi 0, %s107
  $region4: #{tpu_custom_call.1} parent=0 // loop_header_branch
    %12 = sbr.rel (%p10) target = $region8
  $region5: #{tpu_custom_call.1} parent=0 // loop_body
    %s14 = ssub.s32 %s9, 1
    %s15 = ssub.s32 %s9, 2
    %s22 = sadd.s32 1, %s17
    %p23 = scmp.ge.s32.totalorder %s22, 1
    %s24 = scalar_select %p23, 0, %s22
    %s25 = sadd.s32 1, %s16
    %s26 = scalar_select %p23, %s25, %s16
    %p27 = scmp.ge.s32.totalorder %s26, 2
    %s28 = scalar_select %p27, 0, %s26
    %s29 = ssub.s32 %s16, %s28
    %s30 = ssub.s32 %s17, %s24
    %s31 = sor.u32 %s29, %s30
    %p32 = scmp.eq.s32.totalorder %s31, 0
    %s34 = sadd.s32 %s33, 1
    %s35 = scalar_select %p32, %s33, %s34
    %p38 = pneg %p32
    %p39 = scmp.eq.s32.totalorder %s9, 1
    %p40 = por %p38, %p39
    %p41 = scmp.ne.s32.totalorder %s33, %s36
    %p42 = scmp.eq.s32.totalorder %s9, 0
    %p43 = por %p41, %p42
    %p44 = scmp.ne.s32.totalorder %s33, %s36
    %p45 = scmp.eq.s32.totalorder %s14, 1
    %p46 = por %p44, %p45
    %p47 = scmp.ne.s32.totalorder %s36, %s37
    %p48 = scmp.eq.s32.totalorder %s14, 0
    %p49 = por %p47, %p48
    %p50 = scmp.ne.s32.totalorder %s36, %s37
    %p51 = scmp.eq.s32.totalorder %s15, 1
    %p52 = por %p50, %p51
    %p54 = scmp.ne.s32.totalorder %s37, %s53
    %p55 = scmp.eq.s32.totalorder %s15, 0
    %p56 = por %p54, %p55
    %s58 = sadd.s32 %s57, 1
    %p61 = scmp.eq.s32.totalorder %s9, 1
    %p62 = scmp.ne.s32.totalorder %s57, %s59
    %p63 = scmp.eq.s32.totalorder %s9, 0
    %p64 = por %p62, %p63
    %p65 = scmp.ne.s32.totalorder %s57, %s59
    %p66 = scmp.eq.s32.totalorder %s14, 1
    %p67 = por %p65, %p66
    %p68 = scmp.ne.s32.totalorder %s59, %s60
    %p69 = scmp.eq.s32.totalorder %s14, 0
    %p70 = por %p68, %p69
    %p71 = scmp.ne.s32.totalorder %s59, %s60
    %p72 = scmp.eq.s32.totalorder %s15, 1
    %p73 = por %p71, %p72
    %p75 = scmp.ne.s32.totalorder %s60, %s74
    %p76 = scmp.eq.s32.totalorder %s15, 0
    %p77 = por %p75, %p76
    %s79 = sadd.s32 %s78, 1
    %p82 = scmp.eq.s32.totalorder %s9, 1
    %p83 = scmp.ne.s32.totalorder %s78, %s80
    %p84 = scmp.eq.s32.totalorder %s9, 0
    %p85 = por %p83, %p84
    %p86 = scmp.ne.s32.totalorder %s78, %s80
    %p87 = scmp.eq.s32.totalorder %s14, 1
    %p88 = por %p86, %p87
    %p89 = scmp.ne.s32.totalorder %s80, %s81
    %p90 = scmp.eq.s32.totalorder %s14, 0
    %p91 = por %p89, %p90
    %p92 = scmp.ne.s32.totalorder %s80, %s81
    %p93 = scmp.eq.s32.totalorder %s15, 1
    %p94 = por %p92, %p93
    %p96 = scmp.ne.s32.totalorder %s81, %s95
    %p97 = scmp.eq.s32.totalorder %s15, 0
    %p98 = por %p96, %p97
    %s99 = ssub.s32 %s16, %s28
    %s100 = ssub.s32 %s17, %s24
    %s101 = sor.u32 %s99, %s100
    %p102 = scmp.eq.s32.totalorder %s101, 0
    %s104 = sadd.s32 %s103, 1
    %s105 = scalar_select %p102, %s103, %s104
    %p108 = pneg %p102
    %p109 = scmp.eq.s32.totalorder %s9, 1
    %p110 = por %p108, %p109
    %p111 = scmp.ne.s32.totalorder %s103, %s106
    %p112 = scmp.eq.s32.totalorder %s9, 0
    %p113 = por %p111, %p112
    %p114 = scmp.ne.s32.totalorder %s103, %s106
    %p115 = scmp.eq.s32.totalorder %s14, 1
    %p116 = por %p114, %p115
    %p117 = scmp.ne.s32.totalorder %s106, %s107
    %p118 = scmp.eq.s32.totalorder %s14, 0
    %p119 = por %p117, %p118
    %p120 = scmp.ne.s32.totalorder %s106, %s107
    %p121 = scmp.eq.s32.totalorder %s15, 1
    %p122 = por %p120, %p121
    %p124 = scmp.ne.s32.totalorder %s107, %s123
    %p125 = scmp.eq.s32.totalorder %s15, 0
    %p126 = por %p124, %p125
    %p127 = scmp.le.s32.totalorder 1, %s9
    %p128 = scmp.lt.s32.totalorder %s9, 3
    %p129 = pnand %p127, %p128
    %p130 = pneg %p129
    // Predicated region
    $region9: #{tpu_custom_call.1} parent=5 // pred_check
      _
    $region10: #{tpu_custom_call.1} parent=5 // pred_check_branch
      %132 = sbr.rel (%p129) target = $region12
    $region11: #{tpu_custom_call.1} parent=5 // pred_region
      %s133 = ssub.s32 %s9, 1
      // Predicated region
      $region13: #{tpu_custom_call.1} parent=11 // pred_check
        %p134 = pneg %p70
      $region14: #{tpu_custom_call.1} parent=11 // pred_check_branch
        %136 = sbr.rel (%p134) target = $region16
      $region15: #{tpu_custom_call.1} parent=11 // pred_region
        _
      $region16: #{tpu_custom_call.1} parent=11 // pred_fallthru
        _
      // Predicated region
      $region17: #{tpu_custom_call.1} parent=11 // pred_check
        %p137 = pneg %p91
      $region18: #{tpu_custom_call.1} parent=11 // pred_check_branch
        %139 = sbr.rel (%p137) target = $region20
      $region19: #{tpu_custom_call.1} parent=11 // pred_region
        _
      $region20: #{tpu_custom_call.1} parent=11 // pred_fallthru
        _
    $region12: #{tpu_custom_call.1} parent=5 // pred_fallthru
      _
    %p140 = scmp.lt.s32.totalorder %s9, 2
    // Predicated region
    $region21: #{tpu_custom_call.1} parent=5 // pred_check
      %p141 = pneg %p140
    $region22: #{tpu_custom_call.1} parent=5 // pred_check_branch
      %143 = sbr.rel (%p141) target = $region24
    $region23: #{tpu_custom_call.1} parent=5 // pred_region
      // Predicated region
      $region25: #{tpu_custom_call.1} parent=23 // pred_check
        %p144 = pneg %p43
      $region26: #{tpu_custom_call.1} parent=23 // pred_check_branch
        %146 = sbr.rel (%p144) target = $region28
      $region27: #{tpu_custom_call.1} parent=23 // pred_region
        %p147 = scmp.lt.s32.totalorder %s16, 1
        %s148 = scalar_select %p147, %s16, 1
        %p149 = scmp.lt.s32.totalorder %s17, 0
        %s150 = scalar_select %p149, %s17, 0
        %s151 = smul.addr %s150, 100
        %s152 = smul.addr %s148, 100
        %s153 = sadd.s32 %s151, %s152
        %s154 = smul.addr %s153, 8
        %s155 = scalar_lea.vmem %s0, %s154
      $region28: #{tpu_custom_call.1} parent=23 // pred_fallthru
        _
    $region24: #{tpu_custom_call.1} parent=5 // pred_fallthru
      _
    %p156 = scmp.le.s32.totalorder 1, %s9
    %p157 = scmp.lt.s32.totalorder %s9, 3
    %p158 = pnand %p156, %p157
    %p159 = pneg %p158
    // Predicated region
    $region29: #{tpu_custom_call.1} parent=5 // pred_check
      _
    $region30: #{tpu_custom_call.1} parent=5 // pred_check_branch
      %161 = sbr.rel (%p158) target = $region32
    $region31: #{tpu_custom_call.1} parent=5 // pred_region
      %s162 = ssub.s32 %s9, 1
      %p163 = scmp.lt.s32.totalorder %s18, 1
      %s164 = scalar_select %p163, %s18, 1
      %p165 = scmp.lt.s32.totalorder %s19, 0
      %s166 = scalar_select %p165, %s19, 0
      %s167 = smul.addr %s166, 100
      %s168 = smul.addr %s164, 100
      %s169 = sadd.s32 %s167, %s168
      %s170 = smul.addr %s169, 8
      %s171 = scalar_lea.vmem %s0, %s170
      %p172 = pneg %p49
      %p173 = pneg %p46
      %p174 = pneg %p70
      %p175 = pneg %p67
      %p176 = pneg %p91
      %p177 = pneg %p88
      %p178 = pneg %p119
      %p179 = pneg %p116
      %p180 = scmp.lt.s32.totalorder %s18, 1
      %s181 = scalar_select %p180, %s18, 1
      %p182 = scmp.lt.s32.totalorder %s19, 0
      %s183 = scalar_select %p182, %s19, 0
      %s184 = smul.addr %s183, 72
      %s185 = smul.addr %s181, 72
      %s186 = sadd.s32 %s184, %s185
      %s187 = smul.addr %s186, 8
      %s188 = scalar_lea.vmem %s3, %s187
      %p189 = scmp.lt.s32.totalorder %s18, 1
      %s190 = scalar_select %p189, %s18, 1
      %p191 = scmp.lt.s32.totalorder %s19, 0
      %s192 = scalar_select %p191, %s19, 0
      %s193 = smul.addr %s192, 100
      %s194 = smul.addr %s190, 100
      %s195 = sadd.s32 %s193, %s194
      %s196 = smul.addr %s195, 8
      %s197 = scalar_lea.vmem %s0, %s196
      %p198 = scmp.lt.s32.totalorder %s18, 1
      %s199 = scalar_select %p198, %s18, 1
      %p200 = scmp.lt.s32.totalorder %s19, 0
      %s201 = scalar_select %p200, %s19, 0
      %s202 = smul.addr %s201, 72
      %s203 = smul.addr %s199, 72
      %s204 = sadd.s32 %s202, %s203
      %s205 = smul.addr %s204, 8
      %s206 = scalar_lea.vmem %s3, %s205
      %v207 = vld [vmem:[%s197] sm:$0xff]
      %v208 = vld [vmem:[%s197 + $0x8] sm:$0xff]
      %v209 = vld [vmem:[%s197 + $0x10] sm:$0xff]
      %v210 = vld [vmem:[%s197 + $0x18] sm:$0x1]
      %v211 = vld [vmem:[%s197 + $0x20] sm:$0xff]
      %v212 = vld [vmem:[%s197 + $0x28] sm:$0xff]
      %v213 = vld [vmem:[%s197 + $0x30] sm:$0xff]
      %v214 = vld [vmem:[%s197 + $0x38] sm:$0x1]
      %v215 = vld [vmem:[%s197 + $0x40] sm:$0xff]
      %v216 = vld [vmem:[%s197 + $0x48] sm:$0xff]
      %v217 = vld [vmem:[%s197 + $0x50] sm:$0xff]
      %v218 = vld [vmem:[%s197 + $0x58] sm:$0x1]
      %v219 = vld [vmem:[%s197 + $0x60] sm:$0xff]
      %v220 = vld [vmem:[%s197 + $0x68] sm:$0xff]
      %v221 = vld [vmem:[%s197 + $0x70] sm:$0xff]
      %v222 = vld [vmem:[%s197 + $0x78] sm:$0x1]
      %v223 = vld [vmem:[%s197 + $0x80] sm:$0xff]
      %v224 = vld [vmem:[%s197 + $0x88] sm:$0xff]
      %v225 = vld [vmem:[%s197 + $0x90] sm:$0xff]
      %v226 = vld [vmem:[%s197 + $0x98] sm:$0x1]
      %v227 = vld [vmem:[%s197 + $0xa0] sm:$0xff]
      %v228 = vld [vmem:[%s197 + $0xa8] sm:$0xff]
      %v229 = vld [vmem:[%s197 + $0xb0] sm:$0xff]
      %v230 = vld [vmem:[%s197 + $0xb8] sm:$0x1]
      %v231 = vld [vmem:[%s197 + $0xc0] sm:$0xff]
      %v232 = vld [vmem:[%s197 + $0xc8] sm:$0xff]
      %v233 = vld [vmem:[%s197 + $0xd0] sm:$0xff]
      %v234 = vld [vmem:[%s197 + $0xd8] sm:$0x1]
      %v235 = vld [vmem:[%s197 + $0xe0] sm:$0xff]
      %v236 = vld [vmem:[%s197 + $0xe8] sm:$0xff]
      %v237 = vld [vmem:[%s197 + $0xf0] sm:$0xff]
      %v238 = vld [vmem:[%s197 + $0xf8] sm:$0x1]
      %v239 = vld [vmem:[%s197 + $0x100] sm:$0xff]
      %v240 = vld [vmem:[%s197 + $0x108] sm:$0xff]
      %v241 = vld [vmem:[%s197 + $0x110] sm:$0xff]
      %v242 = vld [vmem:[%s197 + $0x118] sm:$0x1]
      %v243 = vld [vmem:[%s197 + $0x120] sm:$0xff]
      %v244 = vld [vmem:[%s197 + $0x128] sm:$0xff]
      %v245 = vld [vmem:[%s197 + $0x130] sm:$0xff]
      %v246 = vld [vmem:[%s197 + $0x138] sm:$0x1]
      %v247 = vld [vmem:[%s197 + $0x140] sm:$0xff]
      %v248 = vld [vmem:[%s197 + $0x148] sm:$0xff]
      %v249 = vld [vmem:[%s197 + $0x150] sm:$0xff]
      %v250 = vld [vmem:[%s197 + $0x158] sm:$0x1]
      %v251 = vld [vmem:[%s197 + $0x160] sm:$0xff]
      %v252 = vld [vmem:[%s197 + $0x168] sm:$0xff]
      %v253 = vld [vmem:[%s197 + $0x170] sm:$0xff]
      %v254 = vld [vmem:[%s197 + $0x178] sm:$0x1]
      %v255 = vld [vmem:[%s197 + $0x180] sm:$0xff]
      %v256 = vld [vmem:[%s197 + $0x188] sm:$0xff]
      %v257 = vld [vmem:[%s197 + $0x190] sm:$0xff]
      %v258 = vld [vmem:[%s197 + $0x198] sm:$0x1]
      %v259 = vld [vmem:[%s197 + $0x1a0] sm:$0xff]
      %v260 = vld [vmem:[%s197 + $0x1a8] sm:$0xff]
      %v261 = vld [vmem:[%s197 + $0x1b0] sm:$0xff]
      %v262 = vld [vmem:[%s197 + $0x1b8] sm:$0x1]
      %v263 = vld [vmem:[%s197 + $0x1c0] sm:$0xff]
      %v264 = vld [vmem:[%s197 + $0x1c8] sm:$0xff]
      %v265 = vld [vmem:[%s197 + $0x1d0] sm:$0xff]
      %v266 = vld [vmem:[%s197 + $0x1d8] sm:$0x1]
      %v267 = vld [vmem:[%s197 + $0x1e0] sm:$0xff]
      %v268 = vld [vmem:[%s197 + $0x1e8] sm:$0xff]
      %v269 = vld [vmem:[%s197 + $0x1f0] sm:$0xff]
      %v270 = vld [vmem:[%s197 + $0x1f8] sm:$0x1]
      %v271 = vld [vmem:[%s197 + $0x200] sm:$0xff]
      %v272 = vld [vmem:[%s197 + $0x208] sm:$0xff]
      %v273 = vld [vmem:[%s197 + $0x210] sm:$0xff]
      %v274 = vld [vmem:[%s197 + $0x218] sm:$0x1]
      %v275 = vld [vmem:[%s197 + $0x220] sm:$0xff]
      %v276 = vld [vmem:[%s197 + $0x228] sm:$0xff]
      %v277 = vld [vmem:[%s197 + $0x230] sm:$0xff]
      %v278 = vld [vmem:[%s197 + $0x238] sm:$0x1]
      %v279 = vld [vmem:[%s197 + $0x240] sm:$0xff]
      %v280 = vld [vmem:[%s197 + $0x248] sm:$0xff]
      %v281 = vld [vmem:[%s197 + $0x250] sm:$0xff]
      %v282 = vld [vmem:[%s197 + $0x258] sm:$0x1]
      %v283 = vld [vmem:[%s197 + $0x260] sm:$0xff]
      %v284 = vld [vmem:[%s197 + $0x268] sm:$0xff]
      %v285 = vld [vmem:[%s197 + $0x270] sm:$0xff]
      %v286 = vld [vmem:[%s197 + $0x278] sm:$0x1]
      %v287 = vld [vmem:[%s197 + $0x280] sm:$0xff]
      %v288 = vld [vmem:[%s197 + $0x288] sm:$0xff]
      %v289 = vld [vmem:[%s197 + $0x290] sm:$0xff]
      %v290 = vld [vmem:[%s197 + $0x298] sm:$0x1]
      %v291 = vld [vmem:[%s197 + $0x2a0] sm:$0xff]
      %v292 = vld [vmem:[%s197 + $0x2a8] sm:$0xff]
      %v293 = vld [vmem:[%s197 + $0x2b0] sm:$0xff]
      %v294 = vld [vmem:[%s197 + $0x2b8] sm:$0x1]
      %v295 = vld [vmem:[%s197 + $0x2c0] sm:$0xff]
      %v296 = vld [vmem:[%s197 + $0x2c8] sm:$0xff]
      %v297 = vld [vmem:[%s197 + $0x2d0] sm:$0xff]
      %v298 = vld [vmem:[%s197 + $0x2d8] sm:$0x1]
      %v299 = vld [vmem:[%s197 + $0x2e0] sm:$0xff]
      %v300 = vld [vmem:[%s197 + $0x2e8] sm:$0xff]
      %v301 = vld [vmem:[%s197 + $0x2f0] sm:$0xff]
      %v302 = vld [vmem:[%s197 + $0x2f8] sm:$0x1]
      %v303 = vld [vmem:[%s197 + $0x300] sm:$0xff]
      %v304 = vld [vmem:[%s197 + $0x308] sm:$0xff]
      %v305 = vld [vmem:[%s197 + $0x310] sm:$0xff]
      %v306 = vld [vmem:[%s197 + $0x318] sm:$0x1]
      %vm403 = vcmask 1046528
      %v404 = vrot.slane %v207, 1
      %v405 = vrot.slane %v208, 1
      %v406 = vsel %vm403, %v404, %v405
      %v407 = vrot.slane %v209, 1
      %v408 = vsel %vm403, %v405, %v407
      %v409 = vrot.slane %v210, 1
      %v410 = vsel %vm403, %v407, %v409
      %v411 = vrot.slane %v211, 1
      %v412 = vrot.slane %v212, 1
      %v413 = vsel %vm403, %v411, %v412
      %v414 = vrot.slane %v213, 1
      %v415 = vsel %vm403, %v412, %v414
      %v416 = vrot.slane %v214, 1
      %v417 = vsel %vm403, %v414, %v416
      %v418 = vrot.slane %v215, 1
      %v419 = vrot.slane %v216, 1
      %v420 = vsel %vm403, %v418, %v419
      %v421 = vrot.slane %v217, 1
      %v422 = vsel %vm403, %v419, %v421
      %v423 = vrot.slane %v218, 1
      %v424 = vsel %vm403, %v421, %v423
      %v425 = vrot.slane %v219, 1
      %v426 = vrot.slane %v220, 1
      %v427 = vsel %vm403, %v425, %v426
      %v428 = vrot.slane %v221, 1
      %v429 = vsel %vm403, %v426, %v428
      %v430 = vrot.slane %v222, 1
      %v431 = vsel %vm403, %v428, %v430
      %v432 = vrot.slane %v223, 1
      %v433 = vrot.slane %v224, 1
      %v434 = vsel %vm403, %v432, %v433
      %v435 = vrot.slane %v225, 1
      %v436 = vsel %vm403, %v433, %v435
      %v437 = vrot.slane %v226, 1
      %v438 = vsel %vm403, %v435, %v437
      %v439 = vrot.slane %v227, 1
      %v440 = vrot.slane %v228, 1
      %v441 = vsel %vm403, %v439, %v440
      %v442 = vrot.slane %v229, 1
      %v443 = vsel %vm403, %v440, %v442
      %v444 = vrot.slane %v230, 1
      %v445 = vsel %vm403, %v442, %v444
      %v446 = vrot.slane %v231, 1
      %v447 = vrot.slane %v232, 1
      %v448 = vsel %vm403, %v446, %v447
      %v449 = vrot.slane %v233, 1
      %v450 = vsel %vm403, %v447, %v449
      %v451 = vrot.slane %v234, 1
      %v452 = vsel %vm403, %v449, %v451
      %v453 = vrot.slane %v235, 1
      %v454 = vrot.slane %v236, 1
      %v455 = vsel %vm403, %v453, %v454
      %v456 = vrot.slane %v237, 1
      %v457 = vsel %vm403, %v454, %v456
      %v458 = vrot.slane %v238, 1
      %v459 = vsel %vm403, %v456, %v458
      %v460 = vrot.slane %v239, 1
      %v461 = vrot.slane %v240, 1
      %v462 = vsel %vm403, %v460, %v461
      %v463 = vrot.slane %v241, 1
      %v464 = vsel %vm403, %v461, %v463
      %v465 = vrot.slane %v242, 1
      %v466 = vsel %vm403, %v463, %v465
      %v467 = vrot.slane %v243, 1
      %v468 = vrot.slane %v244, 1
      %v469 = vsel %vm403, %v467, %v468
      %v470 = vrot.slane %v245, 1
      %v471 = vsel %vm403, %v468, %v470
      %v472 = vrot.slane %v246, 1
      %v473 = vsel %vm403, %v470, %v472
      %v474 = vrot.slane %v247, 1
      %v475 = vrot.slane %v248, 1
      %v476 = vsel %vm403, %v474, %v475
      %v477 = vrot.slane %v249, 1
      %v478 = vsel %vm403, %v475, %v477
      %v479 = vrot.slane %v250, 1
      %v480 = vsel %vm403, %v477, %v479
      %v481 = vrot.slane %v251, 1
      %v482 = vrot.slane %v252, 1
      %v483 = vsel %vm403, %v481, %v482
      %v484 = vrot.slane %v253, 1
      %v485 = vsel %vm403, %v482, %v484
      %v486 = vrot.slane %v254, 1
      %v487 = vsel %vm403, %v484, %v486
      %v488 = vrot.slane %v255, 1
      %v489 = vrot.slane %v256, 1
      %v490 = vsel %vm403, %v488, %v489
      %v491 = vrot.slane %v257, 1
      %v492 = vsel %vm403, %v489, %v491
      %v493 = vrot.slane %v258, 1
      %v494 = vsel %vm403, %v491, %v493
      %v495 = vrot.slane %v259, 1
      %v496 = vrot.slane %v260, 1
      %v497 = vsel %vm403, %v495, %v496
      %v498 = vrot.slane %v261, 1
      %v499 = vsel %vm403, %v496, %v498
      %v500 = vrot.slane %v262, 1
      %v501 = vsel %vm403, %v498, %v500
      %v502 = vrot.slane %v263, 1
      %v503 = vrot.slane %v264, 1
      %v504 = vsel %vm403, %v502, %v503
      %v505 = vrot.slane %v265, 1
      %v506 = vsel %vm403, %v503, %v505
      %v507 = vrot.slane %v266, 1
      %v508 = vsel %vm403, %v505, %v507
      %v509 = vrot.slane %v267, 1
      %v510 = vrot.slane %v268, 1
      %v511 = vsel %vm403, %v509, %v510
      %v512 = vrot.slane %v269, 1
      %v513 = vsel %vm403, %v510, %v512
      %v514 = vrot.slane %v270, 1
      %v515 = vsel %vm403, %v512, %v514
      %v516 = vrot.slane %v271, 1
      %v517 = vrot.slane %v272, 1
      %v518 = vsel %vm403, %v516, %v517
      %v519 = vrot.slane %v273, 1
      %v520 = vsel %vm403, %v517, %v519
      %v521 = vrot.slane %v274, 1
      %v522 = vsel %vm403, %v519, %v521
      %v523 = vrot.slane %v275, 1
      %v524 = vrot.slane %v276, 1
      %v525 = vsel %vm403, %v523, %v524
      %v526 = vrot.slane %v277, 1
      %v527 = vsel %vm403, %v524, %v526
      %v528 = vrot.slane %v278, 1
      %v529 = vsel %vm403, %v526, %v528
      %v530 = vrot.slane %v279, 1
      %v531 = vrot.slane %v280, 1
      %v532 = vsel %vm403, %v530, %v531
      %v533 = vrot.slane %v281, 1
      %v534 = vsel %vm403, %v531, %v533
      %v535 = vrot.slane %v282, 1
      %v536 = vsel %vm403, %v533, %v535
      %v537 = vrot.slane %v283, 1
      %v538 = vrot.slane %v284, 1
      %v539 = vsel %vm403, %v537, %v538
      %v540 = vrot.slane %v285, 1
      %v541 = vsel %vm403, %v538, %v540
      %v542 = vrot.slane %v286, 1
      %v543 = vsel %vm403, %v540, %v542
      %v544 = vrot.slane %v287, 1
      %v545 = vrot.slane %v288, 1
      %v546 = vsel %vm403, %v544, %v545
      %v547 = vrot.slane %v289, 1
      %v548 = vsel %vm403, %v545, %v547
      %v549 = vrot.slane %v290, 1
      %v550 = vsel %vm403, %v547, %v549
      %v551 = vrot.slane %v291, 1
      %v552 = vrot.slane %v292, 1
      %v553 = vsel %vm403, %v551, %v552
      %v554 = vrot.slane %v293, 1
      %v555 = vsel %vm403, %v552, %v554
      %v556 = vrot.slane %v294, 1
      %v557 = vsel %vm403, %v554, %v556
      %v558 = vrot.slane %v295, 1
      %v559 = vrot.slane %v296, 1
      %v560 = vsel %vm403, %v558, %v559
      %v561 = vrot.slane %v297, 1
      %v562 = vsel %vm403, %v559, %v561
      %v563 = vrot.slane %v298, 1
      %v564 = vsel %vm403, %v561, %v563
      %v565 = vrot.slane %v299, 1
      %v566 = vrot.slane %v300, 1
      %v567 = vsel %vm403, %v565, %v566
      %v568 = vrot.slane %v301, 1
      %v569 = vsel %vm403, %v566, %v568
      %v570 = vrot.slane %v302, 1
      %v571 = vsel %vm403, %v568, %v570
      %572 = vrot.lane.b32.xlu0 %v406, 4
      %v573 = vpop.permute.xlu0 %572
      %574 = vrot.lane.b32.xlu0 %v408, 4
      %v575 = vpop.permute.xlu0 %574
      %576 = vrot.lane.b32.xlu0 %v410, 4
      %v577 = vpop.permute.xlu0 %576
      %578 = vrot.lane.b32.xlu0 %v413, 4
      %v579 = vpop.permute.xlu0 %578
      %580 = vrot.lane.b32.xlu0 %v415, 4
      %v581 = vpop.permute.xlu0 %580
      %582 = vrot.lane.b32.xlu0 %v417, 4
      %v583 = vpop.permute.xlu0 %582
      %584 = vrot.lane.b32.xlu0 %v420, 4
      %v585 = vpop.permute.xlu0 %584
      %586 = vrot.lane.b32.xlu0 %v422, 4
      %v587 = vpop.permute.xlu0 %586
      %588 = vrot.lane.b32.xlu0 %v424, 4
      %v589 = vpop.permute.xlu0 %588
      %590 = vrot.lane.b32.xlu0 %v427, 4
      %v591 = vpop.permute.xlu0 %590
      %592 = vrot.lane.b32.xlu0 %v429, 4
      %v593 = vpop.permute.xlu0 %592
      %594 = vrot.lane.b32.xlu0 %v431, 4
      %v595 = vpop.permute.xlu0 %594
      %596 = vrot.lane.b32.xlu0 %v434, 4
      %v597 = vpop.permute.xlu0 %596
      %598 = vrot.lane.b32.xlu0 %v436, 4
      %v599 = vpop.permute.xlu0 %598
      %600 = vrot.lane.b32.xlu0 %v438, 4
      %v601 = vpop.permute.xlu0 %600
      %602 = vrot.lane.b32.xlu0 %v441, 4
      %v603 = vpop.permute.xlu0 %602
      %604 = vrot.lane.b32.xlu0 %v443, 4
      %v605 = vpop.permute.xlu0 %604
      %606 = vrot.lane.b32.xlu0 %v445, 4
      %v607 = vpop.permute.xlu0 %606
      %608 = vrot.lane.b32.xlu0 %v448, 4
      %v609 = vpop.permute.xlu0 %608
      %610 = vrot.lane.b32.xlu0 %v450, 4
      %v611 = vpop.permute.xlu0 %610
      %612 = vrot.lane.b32.xlu0 %v452, 4
      %v613 = vpop.permute.xlu0 %612
      %614 = vrot.lane.b32.xlu0 %v455, 4
      %v615 = vpop.permute.xlu0 %614
      %616 = vrot.lane.b32.xlu0 %v457, 4
      %v617 = vpop.permute.xlu0 %616
      %618 = vrot.lane.b32.xlu0 %v459, 4
      %v619 = vpop.permute.xlu0 %618
      %620 = vrot.lane.b32.xlu0 %v462, 4
      %v621 = vpop.permute.xlu0 %620
      %622 = vrot.lane.b32.xlu0 %v464, 4
      %v623 = vpop.permute.xlu0 %622
      %624 = vrot.lane.b32.xlu0 %v466, 4
      %v625 = vpop.permute.xlu0 %624
      %626 = vrot.lane.b32.xlu0 %v469, 4
      %v627 = vpop.permute.xlu0 %626
      %628 = vrot.lane.b32.xlu0 %v471, 4
      %v629 = vpop.permute.xlu0 %628
      %630 = vrot.lane.b32.xlu0 %v473, 4
      %v631 = vpop.permute.xlu0 %630
      %632 = vrot.lane.b32.xlu0 %v476, 4
      %v633 = vpop.permute.xlu0 %632
      %634 = vrot.lane.b32.xlu0 %v478, 4
      %v635 = vpop.permute.xlu0 %634
      %636 = vrot.lane.b32.xlu0 %v480, 4
      %v637 = vpop.permute.xlu0 %636
      %638 = vrot.lane.b32.xlu0 %v483, 4
      %v639 = vpop.permute.xlu0 %638
      %640 = vrot.lane.b32.xlu0 %v485, 4
      %v641 = vpop.permute.xlu0 %640
      %642 = vrot.lane.b32.xlu0 %v487, 4
      %v643 = vpop.permute.xlu0 %642
      %644 = vrot.lane.b32.xlu0 %v490, 4
      %v645 = vpop.permute.xlu0 %644
      %646 = vrot.lane.b32.xlu0 %v492, 4
      %v647 = vpop.permute.xlu0 %646
      %648 = vrot.lane.b32.xlu0 %v494, 4
      %v649 = vpop.permute.xlu0 %648
      %650 = vrot.lane.b32.xlu0 %v497, 4
      %v651 = vpop.permute.xlu0 %650
      %652 = vrot.lane.b32.xlu0 %v499, 4
      %v653 = vpop.permute.xlu0 %652
      %654 = vrot.lane.b32.xlu0 %v501, 4
      %v655 = vpop.permute.xlu0 %654
      %656 = vrot.lane.b32.xlu0 %v504, 4
      %v657 = vpop.permute.xlu0 %656
      %658 = vrot.lane.b32.xlu0 %v506, 4
      %v659 = vpop.permute.xlu0 %658
      %660 = vrot.lane.b32.xlu0 %v508, 4
      %v661 = vpop.permute.xlu0 %660
      %662 = vrot.lane.b32.xlu0 %v511, 4
      %v663 = vpop.permute.xlu0 %662
      %664 = vrot.lane.b32.xlu0 %v513, 4
      %v665 = vpop.permute.xlu0 %664
      %666 = vrot.lane.b32.xlu0 %v515, 4
      %v667 = vpop.permute.xlu0 %666
      %668 = vrot.lane.b32.xlu0 %v518, 4
      %v669 = vpop.permute.xlu0 %668
      %670 = vrot.lane.b32.xlu0 %v520, 4
      %v671 = vpop.permute.xlu0 %670
      %672 = vrot.lane.b32.xlu0 %v522, 4
      %v673 = vpop.permute.xlu0 %672
      %674 = vrot.lane.b32.xlu0 %v525, 4
      %v675 = vpop.permute.xlu0 %674
      %676 = vrot.lane.b32.xlu0 %v527, 4
      %v677 = vpop.permute.xlu0 %676
      %678 = vrot.lane.b32.xlu0 %v529, 4
      %v679 = vpop.permute.xlu0 %678
      %680 = vrot.lane.b32.xlu0 %v532, 4
      %v681 = vpop.permute.xlu0 %680
      %682 = vrot.lane.b32.xlu0 %v534, 4
      %v683 = vpop.permute.xlu0 %682
      %684 = vrot.lane.b32.xlu0 %v536, 4
      %v685 = vpop.permute.xlu0 %684
      %686 = vrot.lane.b32.xlu0 %v539, 4
      %v687 = vpop.permute.xlu0 %686
      %688 = vrot.lane.b32.xlu0 %v541, 4
      %v689 = vpop.permute.xlu0 %688
      %690 = vrot.lane.b32.xlu0 %v543, 4
      %v691 = vpop.permute.xlu0 %690
      %692 = vrot.lane.b32.xlu0 %v546, 4
      %v693 = vpop.permute.xlu0 %692
      %694 = vrot.lane.b32.xlu0 %v548, 4
      %v695 = vpop.permute.xlu0 %694
      %696 = vrot.lane.b32.xlu0 %v550, 4
      %v697 = vpop.permute.xlu0 %696
      %698 = vrot.lane.b32.xlu0 %v553, 4
      %v699 = vpop.permute.xlu0 %698
      %700 = vrot.lane.b32.xlu0 %v555, 4
      %v701 = vpop.permute.xlu0 %700
      %702 = vrot.lane.b32.xlu0 %v557, 4
      %v703 = vpop.permute.xlu0 %702
      %704 = vrot.lane.b32.xlu0 %v560, 4
      %v705 = vpop.permute.xlu0 %704
      %706 = vrot.lane.b32.xlu0 %v562, 4
      %v707 = vpop.permute.xlu0 %706
      %708 = vrot.lane.b32.xlu0 %v564, 4
      %v709 = vpop.permute.xlu0 %708
      %710 = vrot.lane.b32.xlu0 %v567, 4
      %v711 = vpop.permute.xlu0 %710
      %712 = vrot.lane.b32.xlu0 %v569, 4
      %v713 = vpop.permute.xlu0 %712
      %714 = vrot.lane.b32.xlu0 %v571, 4
      %v715 = vpop.permute.xlu0 %714
      %791 = vrot.lane.b32.xlu0 %v211, 8
      %v792 = vpop.permute.xlu0 %791
      %793 = vrot.lane.b32.xlu0 %v212, 8
      %v794 = vpop.permute.xlu0 %793
      %795 = vrot.lane.b32.xlu0 %v213, 8
      %v796 = vpop.permute.xlu0 %795
      %797 = vrot.lane.b32.xlu0 %v215, 8
      %v798 = vpop.permute.xlu0 %797
      %799 = vrot.lane.b32.xlu0 %v216, 8
      %v800 = vpop.permute.xlu0 %799
      %801 = vrot.lane.b32.xlu0 %v217, 8
      %v802 = vpop.permute.xlu0 %801
      %803 = vrot.lane.b32.xlu0 %v219, 8
      %v804 = vpop.permute.xlu0 %803
      %805 = vrot.lane.b32.xlu0 %v220, 8
      %v806 = vpop.permute.xlu0 %805
      %807 = vrot.lane.b32.xlu0 %v221, 8
      %v808 = vpop.permute.xlu0 %807
      %809 = vrot.lane.b32.xlu0 %v223, 8
      %v810 = vpop.permute.xlu0 %809
      %811 = vrot.lane.b32.xlu0 %v224, 8
      %v812 = vpop.permute.xlu0 %811
      %813 = vrot.lane.b32.xlu0 %v225, 8
      %v814 = vpop.permute.xlu0 %813
      %815 = vrot.lane.b32.xlu0 %v227, 8
      %v816 = vpop.permute.xlu0 %815
      %817 = vrot.lane.b32.xlu0 %v228, 8
      %v818 = vpop.permute.xlu0 %817
      %819 = vrot.lane.b32.xlu0 %v229, 8
      %v820 = vpop.permute.xlu0 %819
      %821 = vrot.lane.b32.xlu0 %v231, 8
      %v822 = vpop.permute.xlu0 %821
      %823 = vrot.lane.b32.xlu0 %v232, 8
      %v824 = vpop.permute.xlu0 %823
      %825 = vrot.lane.b32.xlu0 %v233, 8
      %v826 = vpop.permute.xlu0 %825
      %827 = vrot.lane.b32.xlu0 %v235, 8
      %v828 = vpop.permute.xlu0 %827
      %829 = vrot.lane.b32.xlu0 %v236, 8
      %v830 = vpop.permute.xlu0 %829
      %831 = vrot.lane.b32.xlu0 %v237, 8
      %v832 = vpop.permute.xlu0 %831
      %833 = vrot.lane.b32.xlu0 %v239, 8
      %v834 = vpop.permute.xlu0 %833
      %835 = vrot.lane.b32.xlu0 %v240, 8
      %v836 = vpop.permute.xlu0 %835
      %837 = vrot.lane.b32.xlu0 %v241, 8
      %v838 = vpop.permute.xlu0 %837
      %839 = vrot.lane.b32.xlu0 %v243, 8
      %v840 = vpop.permute.xlu0 %839
      %841 = vrot.lane.b32.xlu0 %v244, 8
      %v842 = vpop.permute.xlu0 %841
      %843 = vrot.lane.b32.xlu0 %v245, 8
      %v844 = vpop.permute.xlu0 %843
      %845 = vrot.lane.b32.xlu0 %v247, 8
      %v846 = vpop.permute.xlu0 %845
      %847 = vrot.lane.b32.xlu0 %v248, 8
      %v848 = vpop.permute.xlu0 %847
      %849 = vrot.lane.b32.xlu0 %v249, 8
      %v850 = vpop.permute.xlu0 %849
      %851 = vrot.lane.b32.xlu0 %v251, 8
      %v852 = vpop.permute.xlu0 %851
      %853 = vrot.lane.b32.xlu0 %v252, 8
      %v854 = vpop.permute.xlu0 %853
      %855 = vrot.lane.b32.xlu0 %v253, 8
      %v856 = vpop.permute.xlu0 %855
      %857 = vrot.lane.b32.xlu0 %v255, 8
      %v858 = vpop.permute.xlu0 %857
      %859 = vrot.lane.b32.xlu0 %v256, 8
      %v860 = vpop.permute.xlu0 %859
      %861 = vrot.lane.b32.xlu0 %v257, 8
      %v862 = vpop.permute.xlu0 %861
      %863 = vrot.lane.b32.xlu0 %v259, 8
      %v864 = vpop.permute.xlu0 %863
      %865 = vrot.lane.b32.xlu0 %v260, 8
      %v866 = vpop.permute.xlu0 %865
      %867 = vrot.lane.b32.xlu0 %v261, 8
      %v868 = vpop.permute.xlu0 %867
      %869 = vrot.lane.b32.xlu0 %v263, 8
      %v870 = vpop.permute.xlu0 %869
      %871 = vrot.lane.b32.xlu0 %v264, 8
      %v872 = vpop.permute.xlu0 %871
      %873 = vrot.lane.b32.xlu0 %v265, 8
      %v874 = vpop.permute.xlu0 %873
      %875 = vrot.lane.b32.xlu0 %v267, 8
      %v876 = vpop.permute.xlu0 %875
      %877 = vrot.lane.b32.xlu0 %v268, 8
      %v878 = vpop.permute.xlu0 %877
      %879 = vrot.lane.b32.xlu0 %v269, 8
      %v880 = vpop.permute.xlu0 %879
      %881 = vrot.lane.b32.xlu0 %v271, 8
      %v882 = vpop.permute.xlu0 %881
      %883 = vrot.lane.b32.xlu0 %v272, 8
      %v884 = vpop.permute.xlu0 %883
      %885 = vrot.lane.b32.xlu0 %v273, 8
      %v886 = vpop.permute.xlu0 %885
      %887 = vrot.lane.b32.xlu0 %v275, 8
      %v888 = vpop.permute.xlu0 %887
      %889 = vrot.lane.b32.xlu0 %v276, 8
      %v890 = vpop.permute.xlu0 %889
      %891 = vrot.lane.b32.xlu0 %v277, 8
      %v892 = vpop.permute.xlu0 %891
      %893 = vrot.lane.b32.xlu0 %v279, 8
      %v894 = vpop.permute.xlu0 %893
      %895 = vrot.lane.b32.xlu0 %v280, 8
      %v896 = vpop.permute.xlu0 %895
      %897 = vrot.lane.b32.xlu0 %v281, 8
      %v898 = vpop.permute.xlu0 %897
      %899 = vrot.lane.b32.xlu0 %v283, 8
      %v900 = vpop.permute.xlu0 %899
      %901 = vrot.lane.b32.xlu0 %v284, 8
      %v902 = vpop.permute.xlu0 %901
      %903 = vrot.lane.b32.xlu0 %v285, 8
      %v904 = vpop.permute.xlu0 %903
      %905 = vrot.lane.b32.xlu0 %v287, 8
      %v906 = vpop.permute.xlu0 %905
      %907 = vrot.lane.b32.xlu0 %v288, 8
      %v908 = vpop.permute.xlu0 %907
      %909 = vrot.lane.b32.xlu0 %v289, 8
      %v910 = vpop.permute.xlu0 %909
      %911 = vrot.lane.b32.xlu0 %v291, 8
      %v912 = vpop.permute.xlu0 %911
      %913 = vrot.lane.b32.xlu0 %v292, 8
      %v914 = vpop.permute.xlu0 %913
      %915 = vrot.lane.b32.xlu0 %v293, 8
      %v916 = vpop.permute.xlu0 %915
      %917 = vrot.lane.b32.xlu0 %v295, 8
      %v918 = vpop.permute.xlu0 %917
      %919 = vrot.lane.b32.xlu0 %v296, 8
      %v920 = vpop.permute.xlu0 %919
      %921 = vrot.lane.b32.xlu0 %v297, 8
      %v922 = vpop.permute.xlu0 %921
      %923 = vrot.lane.b32.xlu0 %v299, 8
      %v924 = vpop.permute.xlu0 %923
      %925 = vrot.lane.b32.xlu0 %v300, 8
      %v926 = vpop.permute.xlu0 %925
      %927 = vrot.lane.b32.xlu0 %v301, 8
      %v928 = vpop.permute.xlu0 %927
      %929 = vrot.lane.b32.xlu0 %v303, 8
      %v930 = vpop.permute.xlu0 %929
      %931 = vrot.lane.b32.xlu0 %v304, 8
      %v932 = vpop.permute.xlu0 %931
      %933 = vrot.lane.b32.xlu0 %v305, 8
      %v934 = vpop.permute.xlu0 %933
      %v1008 = vrot.slane %v303, 1
      %v1009 = vrot.slane %v304, 1
      %v1010 = vsel %vm403, %v1008, %v1009
      %v1011 = vrot.slane %v305, 1
      %v1012 = vsel %vm403, %v1009, %v1011
      %v1013 = vrot.slane %v306, 1
      %v1014 = vsel %vm403, %v1011, %v1013
      %1015 = vrot.lane.b32.xlu0 %v413, 12
      %v1016 = vpop.permute.xlu0 %1015
      %1017 = vrot.lane.b32.xlu0 %v415, 12
      %v1018 = vpop.permute.xlu0 %1017
      %1019 = vrot.lane.b32.xlu0 %v417, 12
      %v1020 = vpop.permute.xlu0 %1019
      %1021 = vrot.lane.b32.xlu0 %v420, 12
      %v1022 = vpop.permute.xlu0 %1021
      %1023 = vrot.lane.b32.xlu0 %v422, 12
      %v1024 = vpop.permute.xlu0 %1023
      %1025 = vrot.lane.b32.xlu0 %v424, 12
      %v1026 = vpop.permute.xlu0 %1025
      %1027 = vrot.lane.b32.xlu0 %v427, 12
      %v1028 = vpop.permute.xlu0 %1027
      %1029 = vrot.lane.b32.xlu0 %v429, 12
      %v1030 = vpop.permute.xlu0 %1029
      %1031 = vrot.lane.b32.xlu0 %v431, 12
      %v1032 = vpop.permute.xlu0 %1031
      %1033 = vrot.lane.b32.xlu0 %v434, 12
      %v1034 = vpop.permute.xlu0 %1033
      %1035 = vrot.lane.b32.xlu0 %v436, 12
      %v1036 = vpop.permute.xlu0 %1035
      %1037 = vrot.lane.b32.xlu0 %v438, 12
      %v1038 = vpop.permute.xlu0 %1037
      %1039 = vrot.lane.b32.xlu0 %v441, 12
      %v1040 = vpop.permute.xlu0 %1039
      %1041 = vrot.lane.b32.xlu0 %v443, 12
      %v1042 = vpop.permute.xlu0 %1041
      %1043 = vrot.lane.b32.xlu0 %v445, 12
      %v1044 = vpop.permute.xlu0 %1043
      %1045 = vrot.lane.b32.xlu0 %v448, 12
      %v1046 = vpop.permute.xlu0 %1045
      %1047 = vrot.lane.b32.xlu0 %v450, 12
      %v1048 = vpop.permute.xlu0 %1047
      %1049 = vrot.lane.b32.xlu0 %v452, 12
      %v1050 = vpop.permute.xlu0 %1049
      %1051 = vrot.lane.b32.xlu0 %v455, 12
      %v1052 = vpop.permute.xlu0 %1051
      %1053 = vrot.lane.b32.xlu0 %v457, 12
      %v1054 = vpop.permute.xlu0 %1053
      %1055 = vrot.lane.b32.xlu0 %v459, 12
      %v1056 = vpop.permute.xlu0 %1055
      %1057 = vrot.lane.b32.xlu0 %v462, 12
      %v1058 = vpop.permute.xlu0 %1057
      %1059 = vrot.lane.b32.xlu0 %v464, 12
      %v1060 = vpop.permute.xlu0 %1059
      %1061 = vrot.lane.b32.xlu0 %v466, 12
      %v1062 = vpop.permute.xlu0 %1061
      %1063 = vrot.lane.b32.xlu0 %v469, 12
      %v1064 = vpop.permute.xlu0 %1063
      %1065 = vrot.lane.b32.xlu0 %v471, 12
      %v1066 = vpop.permute.xlu0 %1065
      %1067 = vrot.lane.b32.xlu0 %v473, 12
      %v1068 = vpop.permute.xlu0 %1067
      %1069 = vrot.lane.b32.xlu0 %v476, 12
      %v1070 = vpop.permute.xlu0 %1069
      %1071 = vrot.lane.b32.xlu0 %v478, 12
      %v1072 = vpop.permute.xlu0 %1071
      %1073 = vrot.lane.b32.xlu0 %v480, 12
      %v1074 = vpop.permute.xlu0 %1073
      %1075 = vrot.lane.b32.xlu0 %v483, 12
      %v1076 = vpop.permute.xlu0 %1075
      %1077 = vrot.lane.b32.xlu0 %v485, 12
      %v1078 = vpop.permute.xlu0 %1077
      %1079 = vrot.lane.b32.xlu0 %v487, 12
      %v1080 = vpop.permute.xlu0 %1079
      %1081 = vrot.lane.b32.xlu0 %v490, 12
      %v1082 = vpop.permute.xlu0 %1081
      %1083 = vrot.lane.b32.xlu0 %v492, 12
      %v1084 = vpop.permute.xlu0 %1083
      %1085 = vrot.lane.b32.xlu0 %v494, 12
      %v1086 = vpop.permute.xlu0 %1085
      %1087 = vrot.lane.b32.xlu0 %v497, 12
      %v1088 = vpop.permute.xlu0 %1087
      %1089 = vrot.lane.b32.xlu0 %v499, 12
      %v1090 = vpop.permute.xlu0 %1089
      %1091 = vrot.lane.b32.xlu0 %v501, 12
      %v1092 = vpop.permute.xlu0 %1091
      %1093 = vrot.lane.b32.xlu0 %v504, 12
      %v1094 = vpop.permute.xlu0 %1093
      %1095 = vrot.lane.b32.xlu0 %v506, 12
      %v1096 = vpop.permute.xlu0 %1095
      %1097 = vrot.lane.b32.xlu0 %v508, 12
      %v1098 = vpop.permute.xlu0 %1097
      %1099 = vrot.lane.b32.xlu0 %v511, 12
      %v1100 = vpop.permute.xlu0 %1099
      %1101 = vrot.lane.b32.xlu0 %v513, 12
      %v1102 = vpop.permute.xlu0 %1101
      %1103 = vrot.lane.b32.xlu0 %v515, 12
      %v1104 = vpop.permute.xlu0 %1103
      %1105 = vrot.lane.b32.xlu0 %v518, 12
      %v1106 = vpop.permute.xlu0 %1105
      %1107 = vrot.lane.b32.xlu0 %v520, 12
      %v1108 = vpop.permute.xlu0 %1107
      %1109 = vrot.lane.b32.xlu0 %v522, 12
      %v1110 = vpop.permute.xlu0 %1109
      %1111 = vrot.lane.b32.xlu0 %v525, 12
      %v1112 = vpop.permute.xlu0 %1111
      %1113 = vrot.lane.b32.xlu0 %v527, 12
      %v1114 = vpop.permute.xlu0 %1113
      %1115 = vrot.lane.b32.xlu0 %v529, 12
      %v1116 = vpop.permute.xlu0 %1115
      %1117 = vrot.lane.b32.xlu0 %v532, 12
      %v1118 = vpop.permute.xlu0 %1117
      %1119 = vrot.lane.b32.xlu0 %v534, 12
      %v1120 = vpop.permute.xlu0 %1119
      %1121 = vrot.lane.b32.xlu0 %v536, 12
      %v1122 = vpop.permute.xlu0 %1121
      %1123 = vrot.lane.b32.xlu0 %v539, 12
      %v1124 = vpop.permute.xlu0 %1123
      %1125 = vrot.lane.b32.xlu0 %v541, 12
      %v1126 = vpop.permute.xlu0 %1125
      %1127 = vrot.lane.b32.xlu0 %v543, 12
      %v1128 = vpop.permute.xlu0 %1127
      %1129 = vrot.lane.b32.xlu0 %v546, 12
      %v1130 = vpop.permute.xlu0 %1129
      %1131 = vrot.lane.b32.xlu0 %v548, 12
      %v1132 = vpop.permute.xlu0 %1131
      %1133 = vrot.lane.b32.xlu0 %v550, 12
      %v1134 = vpop.permute.xlu0 %1133
      %1135 = vrot.lane.b32.xlu0 %v553, 12
      %v1136 = vpop.permute.xlu0 %1135
      %1137 = vrot.lane.b32.xlu0 %v555, 12
      %v1138 = vpop.permute.xlu0 %1137
      %1139 = vrot.lane.b32.xlu0 %v557, 12
      %v1140 = vpop.permute.xlu0 %1139
      %1141 = vrot.lane.b32.xlu0 %v560, 12
      %v1142 = vpop.permute.xlu0 %1141
      %1143 = vrot.lane.b32.xlu0 %v562, 12
      %v1144 = vpop.permute.xlu0 %1143
      %1145 = vrot.lane.b32.xlu0 %v564, 12
      %v1146 = vpop.permute.xlu0 %1145
      %1147 = vrot.lane.b32.xlu0 %v567, 12
      %v1148 = vpop.permute.xlu0 %1147
      %1149 = vrot.lane.b32.xlu0 %v569, 12
      %v1150 = vpop.permute.xlu0 %1149
      %1151 = vrot.lane.b32.xlu0 %v571, 12
      %v1152 = vpop.permute.xlu0 %1151
      %1153 = vrot.lane.b32.xlu0 %v1010, 12
      %v1154 = vpop.permute.xlu0 %1153
      %1155 = vrot.lane.b32.xlu0 %v1012, 12
      %v1156 = vpop.permute.xlu0 %1155
      %1157 = vrot.lane.b32.xlu0 %v1014, 12
      %v1158 = vpop.permute.xlu0 %1157
      %vm1231 = vcmask 31744
      %v1232 = vsel %vm1231, %v207, %v573
      %v1233 = vsel %vm1231, %v208, %v575
      %v1234 = vsel %vm1231, %v209, %v577
      %v1235 = vsel %vm1231, %v211, %v579
      %v1236 = vsel %vm1231, %v212, %v581
      %v1237 = vsel %vm1231, %v213, %v583
      %v1238 = vsel %vm1231, %v215, %v585
      %v1239 = vsel %vm1231, %v216, %v587
      %v1240 = vsel %vm1231, %v217, %v589
      %v1241 = vsel %vm1231, %v219, %v591
      %v1242 = vsel %vm1231, %v220, %v593
      %v1243 = vsel %vm1231, %v221, %v595
      %v1244 = vsel %vm1231, %v223, %v597
      %v1245 = vsel %vm1231, %v224, %v599
      %v1246 = vsel %vm1231, %v225, %v601
      %v1247 = vsel %vm1231, %v227, %v603
      %v1248 = vsel %vm1231, %v228, %v605
      %v1249 = vsel %vm1231, %v229, %v607
      %v1250 = vsel %vm1231, %v231, %v609
      %v1251 = vsel %vm1231, %v232, %v611
      %v1252 = vsel %vm1231, %v233, %v613
      %v1253 = vsel %vm1231, %v235, %v615
      %v1254 = vsel %vm1231, %v236, %v617
      %v1255 = vsel %vm1231, %v237, %v619
      %v1256 = vsel %vm1231, %v239, %v621
      %v1257 = vsel %vm1231, %v240, %v623
      %v1258 = vsel %vm1231, %v241, %v625
      %v1259 = vsel %vm1231, %v243, %v627
      %v1260 = vsel %vm1231, %v244, %v629
      %v1261 = vsel %vm1231, %v245, %v631
      %v1262 = vsel %vm1231, %v247, %v633
      %v1263 = vsel %vm1231, %v248, %v635
      %v1264 = vsel %vm1231, %v249, %v637
      %v1265 = vsel %vm1231, %v251, %v639
      %v1266 = vsel %vm1231, %v252, %v641
      %v1267 = vsel %vm1231, %v253, %v643
      %v1268 = vsel %vm1231, %v255, %v645
      %v1269 = vsel %vm1231, %v256, %v647
      %v1270 = vsel %vm1231, %v257, %v649
      %v1271 = vsel %vm1231, %v259, %v651
      %v1272 = vsel %vm1231, %v260, %v653
      %v1273 = vsel %vm1231, %v261, %v655
      %v1274 = vsel %vm1231, %v263, %v657
      %v1275 = vsel %vm1231, %v264, %v659
      %v1276 = vsel %vm1231, %v265, %v661
      %v1277 = vsel %vm1231, %v267, %v663
      %v1278 = vsel %vm1231, %v268, %v665
      %v1279 = vsel %vm1231, %v269, %v667
      %v1280 = vsel %vm1231, %v271, %v669
      %v1281 = vsel %vm1231, %v272, %v671
      %v1282 = vsel %vm1231, %v273, %v673
      %v1283 = vsel %vm1231, %v275, %v675
      %v1284 = vsel %vm1231, %v276, %v677
      %v1285 = vsel %vm1231, %v277, %v679
      %v1286 = vsel %vm1231, %v279, %v681
      %v1287 = vsel %vm1231, %v280, %v683
      %v1288 = vsel %vm1231, %v281, %v685
      %v1289 = vsel %vm1231, %v283, %v687
      %v1290 = vsel %vm1231, %v284, %v689
      %v1291 = vsel %vm1231, %v285, %v691
      %v1292 = vsel %vm1231, %v287, %v693
      %v1293 = vsel %vm1231, %v288, %v695
      %v1294 = vsel %vm1231, %v289, %v697
      %v1295 = vsel %vm1231, %v291, %v699
      %v1296 = vsel %vm1231, %v292, %v701
      %v1297 = vsel %vm1231, %v293, %v703
      %v1298 = vsel %vm1231, %v295, %v705
      %v1299 = vsel %vm1231, %v296, %v707
      %v1300 = vsel %vm1231, %v297, %v709
      %v1301 = vsel %vm1231, %v299, %v711
      %v1302 = vsel %vm1231, %v300, %v713
      %v1303 = vsel %vm1231, %v301, %v715
      %vm1304 = vcmask 64512
      %v1305 = vsel %vm1304, %v1232, %v792
      %v1306 = vsel %vm1304, %v1233, %v794
      %v1307 = vsel %vm1304, %v1234, %v796
      %v1308 = vsel %vm1304, %v1235, %v798
      %v1309 = vsel %vm1304, %v1236, %v800
      %v1310 = vsel %vm1304, %v1237, %v802
      %v1311 = vsel %vm1304, %v1238, %v804
      %v1312 = vsel %vm1304, %v1239, %v806
      %v1313 = vsel %vm1304, %v1240, %v808
      %v1314 = vsel %vm1304, %v1241, %v810
      %v1315 = vsel %vm1304, %v1242, %v812
      %v1316 = vsel %vm1304, %v1243, %v814
      %v1317 = vsel %vm1304, %v1244, %v816
      %v1318 = vsel %vm1304, %v1245, %v818
      %v1319 = vsel %vm1304, %v1246, %v820
      %v1320 = vsel %vm1304, %v1247, %v822
      %v1321 = vsel %vm1304, %v1248, %v824
      %v1322 = vsel %vm1304, %v1249, %v826
      %v1323 = vsel %vm1304, %v1250, %v828
      %v1324 = vsel %vm1304, %v1251, %v830
      %v1325 = vsel %vm1304, %v1252, %v832
      %v1326 = vsel %vm1304, %v1253, %v834
      %v1327 = vsel %vm1304, %v1254, %v836
      %v1328 = vsel %vm1304, %v1255, %v838
      %v1329 = vsel %vm1304, %v1256, %v840
      %v1330 = vsel %vm1304, %v1257, %v842
      %v1331 = vsel %vm1304, %v1258, %v844
      %v1332 = vsel %vm1304, %v1259, %v846
      %v1333 = vsel %vm1304, %v1260, %v848
      %v1334 = vsel %vm1304, %v1261, %v850
      %v1335 = vsel %vm1304, %v1262, %v852
      %v1336 = vsel %vm1304, %v1263, %v854
      %v1337 = vsel %vm1304, %v1264, %v856
      %v1338 = vsel %vm1304, %v1265, %v858
      %v1339 = vsel %vm1304, %v1266, %v860
      %v1340 = vsel %vm1304, %v1267, %v862
      %v1341 = vsel %vm1304, %v1268, %v864
      %v1342 = vsel %vm1304, %v1269, %v866
      %v1343 = vsel %vm1304, %v1270, %v868
      %v1344 = vsel %vm1304, %v1271, %v870
      %v1345 = vsel %vm1304, %v1272, %v872
      %v1346 = vsel %vm1304, %v1273, %v874
      %v1347 = vsel %vm1304, %v1274, %v876
      %v1348 = vsel %vm1304, %v1275, %v878
      %v1349 = vsel %vm1304, %v1276, %v880
      %v1350 = vsel %vm1304, %v1277, %v882
      %v1351 = vsel %vm1304, %v1278, %v884
      %v1352 = vsel %vm1304, %v1279, %v886
      %v1353 = vsel %vm1304, %v1280, %v888
      %v1354 = vsel %vm1304, %v1281, %v890
      %v1355 = vsel %vm1304, %v1282, %v892
      %v1356 = vsel %vm1304, %v1283, %v894
      %v1357 = vsel %vm1304, %v1284, %v896
      %v1358 = vsel %vm1304, %v1285, %v898
      %v1359 = vsel %vm1304, %v1286, %v900
      %v1360 = vsel %vm1304, %v1287, %v902
      %v1361 = vsel %vm1304, %v1288, %v904
      %v1362 = vsel %vm1304, %v1289, %v906
      %v1363 = vsel %vm1304, %v1290, %v908
      %v1364 = vsel %vm1304, %v1291, %v910
      %v1365 = vsel %vm1304, %v1292, %v912
      %v1366 = vsel %vm1304, %v1293, %v914
      %v1367 = vsel %vm1304, %v1294, %v916
      %v1368 = vsel %vm1304, %v1295, %v918
      %v1369 = vsel %vm1304, %v1296, %v920
      %v1370 = vsel %vm1304, %v1297, %v922
      %v1371 = vsel %vm1304, %v1298, %v924
      %v1372 = vsel %vm1304, %v1299, %v926
      %v1373 = vsel %vm1304, %v1300, %v928
      %v1374 = vsel %vm1304, %v1301, %v930
      %v1375 = vsel %vm1304, %v1302, %v932
      %v1376 = vsel %vm1304, %v1303, %v934
      %vm1377 = vcmask 97280
      %v1378 = vsel %vm1377, %v1305, %v1016
      %v1379 = vsel %vm1377, %v1306, %v1018
      %v1380 = vsel %vm1377, %v1307, %v1020
      %v1381 = vsel %vm1377, %v1308, %v1022
      %v1382 = vsel %vm1377, %v1309, %v1024
      %v1383 = vsel %vm1377, %v1310, %v1026
      %v1384 = vsel %vm1377, %v1311, %v1028
      %v1385 = vsel %vm1377, %v1312, %v1030
      %v1386 = vsel %vm1377, %v1313, %v1032
      %v1387 = vsel %vm1377, %v1314, %v1034
      %v1388 = vsel %vm1377, %v1315, %v1036
      %v1389 = vsel %vm1377, %v1316, %v1038
      %v1390 = vsel %vm1377, %v1317, %v1040
      %v1391 = vsel %vm1377, %v1318, %v1042
      %v1392 = vsel %vm1377, %v1319, %v1044
      %v1393 = vsel %vm1377, %v1320, %v1046
      %v1394 = vsel %vm1377, %v1321, %v1048
      %v1395 = vsel %vm1377, %v1322, %v1050
      %v1396 = vsel %vm1377, %v1323, %v1052
      %v1397 = vsel %vm1377, %v1324, %v1054
      %v1398 = vsel %vm1377, %v1325, %v1056
      %v1399 = vsel %vm1377, %v1326, %v1058
      %v1400 = vsel %vm1377, %v1327, %v1060
      %v1401 = vsel %vm1377, %v1328, %v1062
      %v1402 = vsel %vm1377, %v1329, %v1064
      %v1403 = vsel %vm1377, %v1330, %v1066
      %v1404 = vsel %vm1377, %v1331, %v1068
      %v1405 = vsel %vm1377, %v1332, %v1070
      %v1406 = vsel %vm1377, %v1333, %v1072
      %v1407 = vsel %vm1377, %v1334, %v1074
      %v1408 = vsel %vm1377, %v1335, %v1076
      %v1409 = vsel %vm1377, %v1336, %v1078
      %v1410 = vsel %vm1377, %v1337, %v1080
      %v1411 = vsel %vm1377, %v1338, %v1082
      %v1412 = vsel %vm1377, %v1339, %v1084
      %v1413 = vsel %vm1377, %v1340, %v1086
      %v1414 = vsel %vm1377, %v1341, %v1088
      %v1415 = vsel %vm1377, %v1342, %v1090
      %v1416 = vsel %vm1377, %v1343, %v1092
      %v1417 = vsel %vm1377, %v1344, %v1094
      %v1418 = vsel %vm1377, %v1345, %v1096
      %v1419 = vsel %vm1377, %v1346, %v1098
      %v1420 = vsel %vm1377, %v1347, %v1100
      %v1421 = vsel %vm1377, %v1348, %v1102
      %v1422 = vsel %vm1377, %v1349, %v1104
      %v1423 = vsel %vm1377, %v1350, %v1106
      %v1424 = vsel %vm1377, %v1351, %v1108
      %v1425 = vsel %vm1377, %v1352, %v1110
      %v1426 = vsel %vm1377, %v1353, %v1112
      %v1427 = vsel %vm1377, %v1354, %v1114
      %v1428 = vsel %vm1377, %v1355, %v1116
      %v1429 = vsel %vm1377, %v1356, %v1118
      %v1430 = vsel %vm1377, %v1357, %v1120
      %v1431 = vsel %vm1377, %v1358, %v1122
      %v1432 = vsel %vm1377, %v1359, %v1124
      %v1433 = vsel %vm1377, %v1360, %v1126
      %v1434 = vsel %vm1377, %v1361, %v1128
      %v1435 = vsel %vm1377, %v1362, %v1130
      %v1436 = vsel %vm1377, %v1363, %v1132
      %v1437 = vsel %vm1377, %v1364, %v1134
      %v1438 = vsel %vm1377, %v1365, %v1136
      %v1439 = vsel %vm1377, %v1366, %v1138
      %v1440 = vsel %vm1377, %v1367, %v1140
      %v1441 = vsel %vm1377, %v1368, %v1142
      %v1442 = vsel %vm1377, %v1369, %v1144
      %v1443 = vsel %vm1377, %v1370, %v1146
      %v1444 = vsel %vm1377, %v1371, %v1148
      %v1445 = vsel %vm1377, %v1372, %v1150
      %v1446 = vsel %vm1377, %v1373, %v1152
      %v1447 = vsel %vm1377, %v1374, %v1154
      %v1448 = vsel %vm1377, %v1375, %v1156
      %v1449 = vsel %vm1377, %v1376, %v1158
      %v1450 = vld [vmem:[%s1] sm:$0xff]
      %v1451 = vld [vmem:[%s1 + $0x8] sm:$0xff]
      %v1452 = vld [vmem:[%s2] sm:$0x1]
      %v1454 = vlaneseq
      %v1455 = vshrl.u32 %v1454, 7
      %v1456 = vsub.s32 0, %v1455
      %v1457 = vrot.slane %v1452, %v1456
      %vm1459 = vcmask 130048
      %v1461 = vsel %vm1459, %v1378, 0
      %v1464 = vsel %vm1459, %v1379, 0
      %v1467 = vsel %vm1459, %v1380, 0
      %v1470 = vsel %vm1459, %v1381, 0
      %v1473 = vsel %vm1459, %v1382, 0
      %v1476 = vsel %vm1459, %v1383, 0
      %v1479 = vsel %vm1459, %v1384, 0
      %v1482 = vsel %vm1459, %v1385, 0
      %v1485 = vsel %vm1459, %v1386, 0
      %v1488 = vsel %vm1459, %v1387, 0
      %v1491 = vsel %vm1459, %v1388, 0
      %v1494 = vsel %vm1459, %v1389, 0
      %v1497 = vsel %vm1459, %v1390, 0
      %v1500 = vsel %vm1459, %v1391, 0
      %v1503 = vsel %vm1459, %v1392, 0
      %v1506 = vsel %vm1459, %v1393, 0
      %v1509 = vsel %vm1459, %v1394, 0
      %v1512 = vsel %vm1459, %v1395, 0
      %v1515 = vsel %vm1459, %v1396, 0
      %v1518 = vsel %vm1459, %v1397, 0
      %v1521 = vsel %vm1459, %v1398, 0
      %v1524 = vsel %vm1459, %v1399, 0
      %v1527 = vsel %vm1459, %v1400, 0
      %v1530 = vsel %vm1459, %v1401, 0
      %v1533 = vsel %vm1459, %v1402, 0
      %v1536 = vsel %vm1459, %v1403, 0
      %v1539 = vsel %vm1459, %v1404, 0
      %v1542 = vsel %vm1459, %v1405, 0
      %v1545 = vsel %vm1459, %v1406, 0
      %v1548 = vsel %vm1459, %v1407, 0
      %v1551 = vsel %vm1459, %v1408, 0
      %v1554 = vsel %vm1459, %v1409, 0
      %v1557 = vsel %vm1459, %v1410, 0
      %v1560 = vsel %vm1459, %v1411, 0
      %v1563 = vsel %vm1459, %v1412, 0
      %v1566 = vsel %vm1459, %v1413, 0
      %v1569 = vsel %vm1459, %v1414, 0
      %v1572 = vsel %vm1459, %v1415, 0
      %v1575 = vsel %vm1459, %v1416, 0
      %v1578 = vsel %vm1459, %v1417, 0
      %v1581 = vsel %vm1459, %v1418, 0
      %v1584 = vsel %vm1459, %v1419, 0
      %v1587 = vsel %vm1459, %v1420, 0
      %v1590 = vsel %vm1459, %v1421, 0
      %v1593 = vsel %vm1459, %v1422, 0
      %v1596 = vsel %vm1459, %v1423, 0
      %v1599 = vsel %vm1459, %v1424, 0
      %v1602 = vsel %vm1459, %v1425, 0
      %v1605 = vsel %vm1459, %v1426, 0
      %v1608 = vsel %vm1459, %v1427, 0
      %v1611 = vsel %vm1459, %v1428, 0
      %v1614 = vsel %vm1459, %v1429, 0
      %v1617 = vsel %vm1459, %v1430, 0
      %v1620 = vsel %vm1459, %v1431, 0
      %v1623 = vsel %vm1459, %v1432, 0
      %v1626 = vsel %vm1459, %v1433, 0
      %v1629 = vsel %vm1459, %v1434, 0
      %v1632 = vsel %vm1459, %v1435, 0
      %v1635 = vsel %vm1459, %v1436, 0
      %v1638 = vsel %vm1459, %v1437, 0
      %v1641 = vsel %vm1459, %v1438, 0
      %v1644 = vsel %vm1459, %v1439, 0
      %v1647 = vsel %vm1459, %v1440, 0
      %v1650 = vsel %vm1459, %v1441, 0
      %v1653 = vsel %vm1459, %v1442, 0
      %v1656 = vsel %vm1459, %v1443, 0
      %v1659 = vsel %vm1459, %v1444, 0
      %v1662 = vsel %vm1459, %v1445, 0
      %v1665 = vsel %vm1459, %v1446, 0
      %v1668 = vsel %vm1459, %v1447, 0
      %v1671 = vsel %vm1459, %v1448, 0
      %v1674 = vsel %vm1459, %v1449, 0
      %1676 = vmatprep.subr.mxu0 0.0
      %1677 = vmatpush1.msra.mxu0 %v1450
      %1678 = vmatprep.subr.mxu0 0.0
      %1679 = vmatpush1.msra.mxu0 %v1451
      %1680 = vmatprep.subr.mxu0 0.0
      %1681 = vmatpush1.msra.mxu0 0.0
      %1682 = vmatprep.subr.mxu0 0.0
      %1683 = vmatpush1.msra.mxu0 0.0
      %1684 = vmatprep.subr.mxu0 0.0
      %1685 = vmatpush1.msra.mxu0 0.0
      %1686 = vmatprep.subr.mxu0 0.0
      %1687 = vmatpush1.msra.mxu0 0.0
      %1688 = vmatprep.subr.mxu0 0.0
      %1689 = vmatpush1.msra.mxu0 0.0
      %1690 = vmatprep.subr.mxu0 0.0
      %1691 = vmatpush1.msra.mxu0 0.0
      %1692 = vmatprep.subr.mxu0 0.0
      %1693 = vmatpush1.msra.mxu0 0.0
      %1694 = vmatprep.subr.mxu0 0.0
      %1695 = vmatpush1.msra.mxu0 0.0
      %1696 = vmatprep.subr.mxu0 0.0
      %1697 = vmatpush1.msra.mxu0 0.0
      %1698 = vmatprep.subr.mxu0 0.0
      %1699 = vmatpush1.msra.mxu0 0.0
      %1700 = vmatprep.subr.mxu0 0.0
      %1701 = vmatpush1.msra.mxu0 0.0
      %1702 = vmatprep.subr.mxu0 0.0
      %1703 = vmatpush1.msra.mxu0 0.0
      %1704 = vmatprep.subr.mxu0 0.0
      %1705 = vmatpush1.msra.mxu0 0.0
      %1706 = vmatprep.subr.mxu0 0.0
      %1707 = vmatpush1.msra.mxu0 0.0
      %1708 = vmatprep.subr.mxu0 0.0
      %1709 = vmatpush1.msra.mxu0 0.0
      %1710 = vmatprep.subr.mxu0 0.0
      %1711 = vmatpush1.msra.mxu0 0.0
      %1712 = vmatprep.subr.mxu0 0.0
      %1713 = vmatpush1.msra.mxu0 0.0
      %1714 = vmatprep.subr.mxu0 0.0
      %1715 = vmatpush1.msra.mxu0 0.0
      %1716 = vmatprep.subr.mxu0 0.0
      %1717 = vmatpush1.msra.mxu0 0.0
      %1718 = vmatprep.subr.mxu0 0.0
      %1719 = vmatpush1.msra.mxu0 0.0
      %1720 = vmatprep.subr.mxu0 0.0
      %1721 = vmatpush1.msra.mxu0 0.0
      %1722 = vmatprep.subr.mxu0 0.0
      %1723 = vmatpush1.msra.mxu0 0.0
      %1724 = vmatprep.subr.mxu0 0.0
      %1725 = vmatpush1.msra.mxu0 0.0
      %1726 = vmatprep.subr.mxu0 0.0
      %1727 = vmatpush1.msra.mxu0 0.0
      %1728 = vmatprep.subr.mxu0 0.0
      %1729 = vmatpush1.msra.mxu0 0.0
      %1730 = vmatprep.subr.mxu0 0.0
      %1731 = vmatpush1.msra.mxu0 0.0
      %1732 = vmatprep.subr.mxu0 0.0
      %1733 = vmatpush1.msra.mxu0 0.0
      %1734 = vmatprep.subr.mxu0 0.0
      %1735 = vmatpush1.msra.mxu0 0.0
      %1736 = vmatprep.subr.mxu0 0.0
      %1737 = vmatpush1.msra.mxu0 0.0
      %1738 = vmatprep.subr.mxu0 0.0
      %1739 = vmatpush1.msra.mxu0 0.0
      %1740 = vmatprep.mubr.f32.mxu0 0.0
      %1741 = vmatmul.mubr.f32.gmra.mrb[0].mxu0 %v1461
      %v1742 = vpop.f32.mrb[0].mxu0
      %v1743 = vadd.f32 %v1457, %v1742
      %v1744 = vpop.f32.mrb[0].mxu0
      %1745 = vmatprep.mubr.f32.mxu0 0.0
      %1746 = vmatmul.mubr.f32.gmra.mrb[0].mxu0 %v1464
      %v1747 = vpop.f32.mrb[0].mxu0
      %v1748 = vadd.f32 %v1457, %v1747
      %v1749 = vpop.f32.mrb[0].mxu0
      %1750 = vmatprep.mubr.f32.mxu0 0.0
      %1751 = vmatmul.mubr.f32.gmra.mrb[0].mxu0 %v1467
      %v1752 = vpop.f32.mrb[0].mxu0
      %v1753 = vadd.f32 %v1457, %v1752
      %v1754 = vpop.f32.mrb[0].mxu0
      %1755 = vmatprep.mubr.f32.mxu0 0.0
      %1756 = vmatmul.mubr.f32.gmra.mrb[0].mxu0 %v1470
      %v1757 = vpop.f32.mrb[0].mxu0
      %v1758 = vadd.f32 %v1457, %v1757
      %v1759 = vpop.f32.mrb[0].mxu0
      %1760 = vmatprep.mubr.f32.mxu0 0.0
      %1761 = vmatmul.mubr.f32.gmra.mrb[0].mxu0 %v1473
      %v1762 = vpop.f32.mrb[0].mxu0
      %v1763 = vadd.f32 %v1457, %v1762
      %v1764 = vpop.f32.mrb[0].mxu0
      %1765 = vmatprep.mubr.f32.mxu0 0.0
      %1766 = vmatmul.mubr.f32.gmra.mrb[0].mxu0 %v1476
      %v1767 = vpop.f32.mrb[0].mxu0
      %v1768 = vadd.f32 %v1457, %v1767
      %v1769 = vpop.f32.mrb[0].mxu0
      %1770 = vmatprep.mubr.f32.mxu0 0.0
      %1771 = vmatmul.mubr.f32.gmra.mrb[0].mxu0 %v1479
      %v1772 = vpop.f32.mrb[0].mxu0
      %v1773 = vadd.f32 %v1457, %v1772
      %v1774 = vpop.f32.mrb[0].mxu0
      %1775 = vmatprep.mubr.f32.mxu0 0.0
      %1776 = vmatmul.mubr.f32.gmra.mrb[0].mxu0 %v1482
      %v1777 = vpop.f32.mrb[0].mxu0
      %v1778 = vadd.f32 %v1457, %v1777
      %v1779 = vpop.f32.mrb[0].mxu0
      %1780 = vmatprep.mubr.f32.mxu0 0.0
      %1781 = vmatmul.mubr.f32.gmra.mrb[0].mxu0 %v1485
      %v1782 = vpop.f32.mrb[0].mxu0
      %v1783 = vadd.f32 %v1457, %v1782
      %v1784 = vpop.f32.mrb[0].mxu0
      %1785 = vmatprep.mubr.f32.mxu0 0.0
      %1786 = vmatmul.mubr.f32.gmra.mrb[0].mxu0 %v1488
      %v1787 = vpop.f32.mrb[0].mxu0
      %v1788 = vadd.f32 %v1457, %v1787
      %v1789 = vpop.f32.mrb[0].mxu0
      %1790 = vmatprep.mubr.f32.mxu0 0.0
      %1791 = vmatmul.mubr.f32.gmra.mrb[0].mxu0 %v1491
      %v1792 = vpop.f32.mrb[0].mxu0
      %v1793 = vadd.f32 %v1457, %v1792
      %v1794 = vpop.f32.mrb[0].mxu0
      %1795 = vmatprep.mubr.f32.mxu0 0.0
      %1796 = vmatmul.mubr.f32.gmra.mrb[0].mxu0 %v1494
      %v1797 = vpop.f32.mrb[0].mxu0
      %v1798 = vadd.f32 %v1457, %v1797
      %v1799 = vpop.f32.mrb[0].mxu0
      %1800 = vmatprep.mubr.f32.mxu0 0.0
      %1801 = vmatmul.mubr.f32.gmra.mrb[0].mxu0 %v1497
      %v1802 = vpop.f32.mrb[0].mxu0
      %v1803 = vadd.f32 %v1457, %v1802
      %v1804 = vpop.f32.mrb[0].mxu0
      %1805 = vmatprep.mubr.f32.mxu0 0.0
      %1806 = vmatmul.mubr.f32.gmra.mrb[0].mxu0 %v1500
      %v1807 = vpop.f32.mrb[0].mxu0
      %v1808 = vadd.f32 %v1457, %v1807
      %v1809 = vpop.f32.mrb[0].mxu0
      %1810 = vmatprep.mubr.f32.mxu0 0.0
      %1811 = vmatmul.mubr.f32.gmra.mrb[0].mxu0 %v1503
      %v1812 = vpop.f32.mrb[0].mxu0
      %v1813 = vadd.f32 %v1457, %v1812
      %v1814 = vpop.f32.mrb[0].mxu0
      %1815 = vmatprep.mubr.f32.mxu0 0.0
      %1816 = vmatmul.mubr.f32.gmra.mrb[0].mxu0 %v1506
      %v1817 = vpop.f32.mrb[0].mxu0
      %v1818 = vadd.f32 %v1457, %v1817
      %v1819 = vpop.f32.mrb[0].mxu0
      %1820 = vmatprep.mubr.f32.mxu0 0.0
      %1821 = vmatmul.mubr.f32.gmra.mrb[0].mxu0 %v1509
      %v1822 = vpop.f32.mrb[0].mxu0
      %v1823 = vadd.f32 %v1457, %v1822
      %v1824 = vpop.f32.mrb[0].mxu0
      %1825 = vmatprep.mubr.f32.mxu0 0.0
      %1826 = vmatmul.mubr.f32.gmra.mrb[0].mxu0 %v1512
      %v1827 = vpop.f32.mrb[0].mxu0
      %v1828 = vadd.f32 %v1457, %v1827
      %v1829 = vpop.f32.mrb[0].mxu0
      %1830 = vmatprep.mubr.f32.mxu0 0.0
      %1831 = vmatmul.mubr.f32.gmra.mrb[0].mxu0 %v1515
      %v1832 = vpop.f32.mrb[0].mxu0
      %v1833 = vadd.f32 %v1457, %v1832
      %v1834 = vpop.f32.mrb[0].mxu0
      %1835 = vmatprep.mubr.f32.mxu0 0.0
      %1836 = vmatmul.mubr.f32.gmra.mrb[0].mxu0 %v1518
      %v1837 = vpop.f32.mrb[0].mxu0
      %v1838 = vadd.f32 %v1457, %v1837
      %v1839 = vpop.f32.mrb[0].mxu0
      %1840 = vmatprep.mubr.f32.mxu0 0.0
      %1841 = vmatmul.mubr.f32.gmra.mrb[0].mxu0 %v1521
      %v1842 = vpop.f32.mrb[0].mxu0
      %v1843 = vadd.f32 %v1457, %v1842
      %v1844 = vpop.f32.mrb[0].mxu0
      %1845 = vmatprep.mubr.f32.mxu0 0.0
      %1846 = vmatmul.mubr.f32.gmra.mrb[0].mxu0 %v1524
      %v1847 = vpop.f32.mrb[0].mxu0
      %v1848 = vadd.f32 %v1457, %v1847
      %v1849 = vpop.f32.mrb[0].mxu0
      %1850 = vmatprep.mubr.f32.mxu0 0.0
      %1851 = vmatmul.mubr.f32.gmra.mrb[0].mxu0 %v1527
      %v1852 = vpop.f32.mrb[0].mxu0
      %v1853 = vadd.f32 %v1457, %v1852
      %v1854 = vpop.f32.mrb[0].mxu0
      %1855 = vmatprep.mubr.f32.mxu0 0.0
      %1856 = vmatmul.mubr.f32.gmra.mrb[0].mxu0 %v1530
      %v1857 = vpop.f32.mrb[0].mxu0
      %v1858 = vadd.f32 %v1457, %v1857
      %v1859 = vpop.f32.mrb[0].mxu0
      %1860 = vmatprep.mubr.f32.mxu0 0.0
      %1861 = vmatmul.mubr.f32.gmra.mrb[0].mxu0 %v1533
      %v1862 = vpop.f32.mrb[0].mxu0
      %v1863 = vadd.f32 %v1457, %v1862
      %v1864 = vpop.f32.mrb[0].mxu0
      %1865 = vmatprep.mubr.f32.mxu0 0.0
      %1866 = vmatmul.mubr.f32.gmra.mrb[0].mxu0 %v1536
      %v1867 = vpop.f32.mrb[0].mxu0
      %v1868 = vadd.f32 %v1457, %v1867
      %v1869 = vpop.f32.mrb[0].mxu0
      %1870 = vmatprep.mubr.f32.mxu0 0.0
      %1871 = vmatmul.mubr.f32.gmra.mrb[0].mxu0 %v1539
      %v1872 = vpop.f32.mrb[0].mxu0
      %v1873 = vadd.f32 %v1457, %v1872
      %v1874 = vpop.f32.mrb[0].mxu0
      %1875 = vmatprep.mubr.f32.mxu0 0.0
      %1876 = vmatmul.mubr.f32.gmra.mrb[0].mxu0 %v1542
      %v1877 = vpop.f32.mrb[0].mxu0
      %v1878 = vadd.f32 %v1457, %v1877
      %v1879 = vpop.f32.mrb[0].mxu0
      %1880 = vmatprep.mubr.f32.mxu0 0.0
      %1881 = vmatmul.mubr.f32.gmra.mrb[0].mxu0 %v1545
      %v1882 = vpop.f32.mrb[0].mxu0
      %v1883 = vadd.f32 %v1457, %v1882
      %v1884 = vpop.f32.mrb[0].mxu0
      %1885 = vmatprep.mubr.f32.mxu0 0.0
      %1886 = vmatmul.mubr.f32.gmra.mrb[0].mxu0 %v1548
      %v1887 = vpop.f32.mrb[0].mxu0
      %v1888 = vadd.f32 %v1457, %v1887
      %v1889 = vpop.f32.mrb[0].mxu0
      %1890 = vmatprep.mubr.f32.mxu0 0.0
      %1891 = vmatmul.mubr.f32.gmra.mrb[0].mxu0 %v1551
      %v1892 = vpop.f32.mrb[0].mxu0
      %v1893 = vadd.f32 %v1457, %v1892
      %v1894 = vpop.f32.mrb[0].mxu0
      %1895 = vmatprep.mubr.f32.mxu0 0.0
      %1896 = vmatmul.mubr.f32.gmra.mrb[0].mxu0 %v1554
      %v1897 = vpop.f32.mrb[0].mxu0
      %v1898 = vadd.f32 %v1457, %v1897
      %v1899 = vpop.f32.mrb[0].mxu0
      %1900 = vmatprep.mubr.f32.mxu0 0.0
      %1901 = vmatmul.mubr.f32.gmra.mrb[0].mxu0 %v1557
      %v1902 = vpop.f32.mrb[0].mxu0
      %v1903 = vadd.f32 %v1457, %v1902
      %v1904 = vpop.f32.mrb[0].mxu0
      %1905 = vmatprep.mubr.f32.mxu0 0.0
      %1906 = vmatmul.mubr.f32.gmra.mrb[0].mxu0 %v1560
      %v1907 = vpop.f32.mrb[0].mxu0
      %v1908 = vadd.f32 %v1457, %v1907
      %v1909 = vpop.f32.mrb[0].mxu0
      %1910 = vmatprep.mubr.f32.mxu0 0.0
      %1911 = vmatmul.mubr.f32.gmra.mrb[0].mxu0 %v1563
      %v1912 = vpop.f32.mrb[0].mxu0
      %v1913 = vadd.f32 %v1457, %v1912
      %v1914 = vpop.f32.mrb[0].mxu0
      %1915 = vmatprep.mubr.f32.mxu0 0.0
      %1916 = vmatmul.mubr.f32.gmra.mrb[0].mxu0 %v1566
      %v1917 = vpop.f32.mrb[0].mxu0
      %v1918 = vadd.f32 %v1457, %v1917
      %v1919 = vpop.f32.mrb[0].mxu0
      %1920 = vmatprep.mubr.f32.mxu0 0.0
      %1921 = vmatmul.mubr.f32.gmra.mrb[0].mxu0 %v1569
      %v1922 = vpop.f32.mrb[0].mxu0
      %v1923 = vadd.f32 %v1457, %v1922
      %v1924 = vpop.f32.mrb[0].mxu0
      %1925 = vmatprep.mubr.f32.mxu0 0.0
      %1926 = vmatmul.mubr.f32.gmra.mrb[0].mxu0 %v1572
      %v1927 = vpop.f32.mrb[0].mxu0
      %v1928 = vadd.f32 %v1457, %v1927
      %v1929 = vpop.f32.mrb[0].mxu0
      %1930 = vmatprep.mubr.f32.mxu0 0.0
      %1931 = vmatmul.mubr.f32.gmra.mrb[0].mxu0 %v1575
      %v1932 = vpop.f32.mrb[0].mxu0
      %v1933 = vadd.f32 %v1457, %v1932
      %v1934 = vpop.f32.mrb[0].mxu0
      %1935 = vmatprep.mubr.f32.mxu0 0.0
      %1936 = vmatmul.mubr.f32.gmra.mrb[0].mxu0 %v1578
      %v1937 = vpop.f32.mrb[0].mxu0
      %v1938 = vadd.f32 %v1457, %v1937
      %v1939 = vpop.f32.mrb[0].mxu0
      %1940 = vmatprep.mubr.f32.mxu0 0.0
      %1941 = vmatmul.mubr.f32.gmra.mrb[0].mxu0 %v1581
      %v1942 = vpop.f32.mrb[0].mxu0
      %v1943 = vadd.f32 %v1457, %v1942
      %v1944 = vpop.f32.mrb[0].mxu0
      %1945 = vmatprep.mubr.f32.mxu0 0.0
      %1946 = vmatmul.mubr.f32.gmra.mrb[0].mxu0 %v1584
      %v1947 = vpop.f32.mrb[0].mxu0
      %v1948 = vadd.f32 %v1457, %v1947
      %v1949 = vpop.f32.mrb[0].mxu0
      %1950 = vmatprep.mubr.f32.mxu0 0.0
      %1951 = vmatmul.mubr.f32.gmra.mrb[0].mxu0 %v1587
      %v1952 = vpop.f32.mrb[0].mxu0
      %v1953 = vadd.f32 %v1457, %v1952
      %v1954 = vpop.f32.mrb[0].mxu0
      %1955 = vmatprep.mubr.f32.mxu0 0.0
      %1956 = vmatmul.mubr.f32.gmra.mrb[0].mxu0 %v1590
      %v1957 = vpop.f32.mrb[0].mxu0
      %v1958 = vadd.f32 %v1457, %v1957
      %v1959 = vpop.f32.mrb[0].mxu0
      %1960 = vmatprep.mubr.f32.mxu0 0.0
      %1961 = vmatmul.mubr.f32.gmra.mrb[0].mxu0 %v1593
      %v1962 = vpop.f32.mrb[0].mxu0
      %v1963 = vadd.f32 %v1457, %v1962
      %v1964 = vpop.f32.mrb[0].mxu0
      %1965 = vmatprep.mubr.f32.mxu0 0.0
      %1966 = vmatmul.mubr.f32.gmra.mrb[0].mxu0 %v1596
      %v1967 = vpop.f32.mrb[0].mxu0
      %v1968 = vadd.f32 %v1457, %v1967
      %v1969 = vpop.f32.mrb[0].mxu0
      %1970 = vmatprep.mubr.f32.mxu0 0.0
      %1971 = vmatmul.mubr.f32.gmra.mrb[0].mxu0 %v1599
      %v1972 = vpop.f32.mrb[0].mxu0
      %v1973 = vadd.f32 %v1457, %v1972
      %v1974 = vpop.f32.mrb[0].mxu0
      %1975 = vmatprep.mubr.f32.mxu0 0.0
      %1976 = vmatmul.mubr.f32.gmra.mrb[0].mxu0 %v1602
      %v1977 = vpop.f32.mrb[0].mxu0
      %v1978 = vadd.f32 %v1457, %v1977
      %v1979 = vpop.f32.mrb[0].mxu0
      %1980 = vmatprep.mubr.f32.mxu0 0.0
      %1981 = vmatmul.mubr.f32.gmra.mrb[0].mxu0 %v1605
      %v1982 = vpop.f32.mrb[0].mxu0
      %v1983 = vadd.f32 %v1457, %v1982
      %v1984 = vpop.f32.mrb[0].mxu0
      %1985 = vmatprep.mubr.f32.mxu0 0.0
      %1986 = vmatmul.mubr.f32.gmra.mrb[0].mxu0 %v1608
      %v1987 = vpop.f32.mrb[0].mxu0
      %v1988 = vadd.f32 %v1457, %v1987
      %v1989 = vpop.f32.mrb[0].mxu0
      %1990 = vmatprep.mubr.f32.mxu0 0.0
      %1991 = vmatmul.mubr.f32.gmra.mrb[0].mxu0 %v1611
      %v1992 = vpop.f32.mrb[0].mxu0
      %v1993 = vadd.f32 %v1457, %v1992
      %v1994 = vpop.f32.mrb[0].mxu0
      %1995 = vmatprep.mubr.f32.mxu0 0.0
      %1996 = vmatmul.mubr.f32.gmra.mrb[0].mxu0 %v1614
      %v1997 = vpop.f32.mrb[0].mxu0
      %v1998 = vadd.f32 %v1457, %v1997
      %v1999 = vpop.f32.mrb[0].mxu0
      %2000 = vmatprep.mubr.f32.mxu0 0.0
      %2001 = vmatmul.mubr.f32.gmra.mrb[0].mxu0 %v1617
      %v2002 = vpop.f32.mrb[0].mxu0
      %v2003 = vadd.f32 %v1457, %v2002
      %v2004 = vpop.f32.mrb[0].mxu0
      %2005 = vmatprep.mubr.f32.mxu0 0.0
      %2006 = vmatmul.mubr.f32.gmra.mrb[0].mxu0 %v1620
      %v2007 = vpop.f32.mrb[0].mxu0
      %v2008 = vadd.f32 %v1457, %v2007
      %v2009 = vpop.f32.mrb[0].mxu0
      %2010 = vmatprep.mubr.f32.mxu0 0.0
      %2011 = vmatmul.mubr.f32.gmra.mrb[0].mxu0 %v1623
      %v2012 = vpop.f32.mrb[0].mxu0
      %v2013 = vadd.f32 %v1457, %v2012
      %v2014 = vpop.f32.mrb[0].mxu0
      %2015 = vmatprep.mubr.f32.mxu0 0.0
      %2016 = vmatmul.mubr.f32.gmra.mrb[0].mxu0 %v1626
      %v2017 = vpop.f32.mrb[0].mxu0
      %v2018 = vadd.f32 %v1457, %v2017
      %v2019 = vpop.f32.mrb[0].mxu0
      %2020 = vmatprep.mubr.f32.mxu0 0.0
      %2021 = vmatmul.mubr.f32.gmra.mrb[0].mxu0 %v1629
      %v2022 = vpop.f32.mrb[0].mxu0
      %v2023 = vadd.f32 %v1457, %v2022
      %v2024 = vpop.f32.mrb[0].mxu0
      %2025 = vmatprep.mubr.f32.mxu0 0.0
      %2026 = vmatmul.mubr.f32.gmra.mrb[0].mxu0 %v1632
      %v2027 = vpop.f32.mrb[0].mxu0
      %v2028 = vadd.f32 %v1457, %v2027
      %v2029 = vpop.f32.mrb[0].mxu0
      %2030 = vmatprep.mubr.f32.mxu0 0.0
      %2031 = vmatmul.mubr.f32.gmra.mrb[0].mxu0 %v1635
      %v2032 = vpop.f32.mrb[0].mxu0
      %v2033 = vadd.f32 %v1457, %v2032
      %v2034 = vpop.f32.mrb[0].mxu0
      %2035 = vmatprep.mubr.f32.mxu0 0.0
      %2036 = vmatmul.mubr.f32.gmra.mrb[0].mxu0 %v1638
      %v2037 = vpop.f32.mrb[0].mxu0
      %v2038 = vadd.f32 %v1457, %v2037
      %v2039 = vpop.f32.mrb[0].mxu0
      %2040 = vmatprep.mubr.f32.mxu0 0.0
      %2041 = vmatmul.mubr.f32.gmra.mrb[0].mxu0 %v1641
      %v2042 = vpop.f32.mrb[0].mxu0
      %v2043 = vadd.f32 %v1457, %v2042
      %v2044 = vpop.f32.mrb[0].mxu0
      %2045 = vmatprep.mubr.f32.mxu0 0.0
      %2046 = vmatmul.mubr.f32.gmra.mrb[0].mxu0 %v1644
      %v2047 = vpop.f32.mrb[0].mxu0
      %v2048 = vadd.f32 %v1457, %v2047
      %v2049 = vpop.f32.mrb[0].mxu0
      %2050 = vmatprep.mubr.f32.mxu0 0.0
      %2051 = vmatmul.mubr.f32.gmra.mrb[0].mxu0 %v1647
      %v2052 = vpop.f32.mrb[0].mxu0
      %v2053 = vadd.f32 %v1457, %v2052
      %v2054 = vpop.f32.mrb[0].mxu0
      %2055 = vmatprep.mubr.f32.mxu0 0.0
      %2056 = vmatmul.mubr.f32.gmra.mrb[0].mxu0 %v1650
      %v2057 = vpop.f32.mrb[0].mxu0
      %v2058 = vadd.f32 %v1457, %v2057
      %v2059 = vpop.f32.mrb[0].mxu0
      %2060 = vmatprep.mubr.f32.mxu0 0.0
      %2061 = vmatmul.mubr.f32.gmra.mrb[0].mxu0 %v1653
      %v2062 = vpop.f32.mrb[0].mxu0
      %v2063 = vadd.f32 %v1457, %v2062
      %v2064 = vpop.f32.mrb[0].mxu0
      %2065 = vmatprep.mubr.f32.mxu0 0.0
      %2066 = vmatmul.mubr.f32.gmra.mrb[0].mxu0 %v1656
      %v2067 = vpop.f32.mrb[0].mxu0
      %v2068 = vadd.f32 %v1457, %v2067
      %v2069 = vpop.f32.mrb[0].mxu0
      %2070 = vmatprep.mubr.f32.mxu0 0.0
      %2071 = vmatmul.mubr.f32.gmra.mrb[0].mxu0 %v1659
      %v2072 = vpop.f32.mrb[0].mxu0
      %v2073 = vadd.f32 %v1457, %v2072
      %v2074 = vpop.f32.mrb[0].mxu0
      %2075 = vmatprep.mubr.f32.mxu0 0.0
      %2076 = vmatmul.mubr.f32.gmra.mrb[0].mxu0 %v1662
      %v2077 = vpop.f32.mrb[0].mxu0
      %v2078 = vadd.f32 %v1457, %v2077
      %v2079 = vpop.f32.mrb[0].mxu0
      %2080 = vmatprep.mubr.f32.mxu0 0.0
      %2081 = vmatmul.mubr.f32.gmra.mrb[0].mxu0 %v1665
      %v2082 = vpop.f32.mrb[0].mxu0
      %v2083 = vadd.f32 %v1457, %v2082
      %v2084 = vpop.f32.mrb[0].mxu0
      %2085 = vmatprep.mubr.f32.mxu0 0.0
      %2086 = vmatmul.mubr.f32.gmra.mrb[0].mxu0 %v1668
      %v2087 = vpop.f32.mrb[0].mxu0
      %v2088 = vadd.f32 %v1457, %v2087
      %v2089 = vpop.f32.mrb[0].mxu0
      %2090 = vmatprep.mubr.f32.mxu0 0.0
      %2091 = vmatmul.mubr.f32.gmra.mrb[0].mxu0 %v1671
      %v2092 = vpop.f32.mrb[0].mxu0
      %v2093 = vadd.f32 %v1457, %v2092
      %v2094 = vpop.f32.mrb[0].mxu0
      %2095 = vmatprep.mubr.f32.mxu0 0.0
      %2096 = vmatmul.mubr.f32.gmra.mrb[0].mxu0 %v1674
      %v2097 = vpop.f32.mrb[0].mxu0
      %v2098 = vadd.f32 %v1457, %v2097
      %v2099 = vpop.f32.mrb[0].mxu0
      %2100 = vdwg.mxu0
      %vm2101 = vcmask 261120
      %2102 = vst.msk [vmem:[%s206] sm:$0xff] %vm2101, %v1743
      %2103 = vst.msk [vmem:[%s206 + $0x8] sm:$0xff] %vm2101, %v1748
      %2104 = vst.msk [vmem:[%s206 + $0x10] sm:$0xff] %vm2101, %v1753
      %2105 = vst.msk [vmem:[%s206 + $0x18] sm:$0xff] %vm2101, %v1758
      %2106 = vst.msk [vmem:[%s206 + $0x20] sm:$0xff] %vm2101, %v1763
      %2107 = vst.msk [vmem:[%s206 + $0x28] sm:$0xff] %vm2101, %v1768
      %2108 = vst.msk [vmem:[%s206 + $0x30] sm:$0xff] %vm2101, %v1773
      %2109 = vst.msk [vmem:[%s206 + $0x38] sm:$0xff] %vm2101, %v1778
      %2110 = vst.msk [vmem:[%s206 + $0x40] sm:$0xff] %vm2101, %v1783
      %2111 = vst.msk [vmem:[%s206 + $0x48] sm:$0xff] %vm2101, %v1788
      %2112 = vst.msk [vmem:[%s206 + $0x50] sm:$0xff] %vm2101, %v1793
      %2113 = vst.msk [vmem:[%s206 + $0x58] sm:$0xff] %vm2101, %v1798
      %2114 = vst.msk [vmem:[%s206 + $0x60] sm:$0xff] %vm2101, %v1803
      %2115 = vst.msk [vmem:[%s206 + $0x68] sm:$0xff] %vm2101, %v1808
      %2116 = vst.msk [vmem:[%s206 + $0x70] sm:$0xff] %vm2101, %v1813
      %2117 = vst.msk [vmem:[%s206 + $0x78] sm:$0xff] %vm2101, %v1818
      %2118 = vst.msk [vmem:[%s206 + $0x80] sm:$0xff] %vm2101, %v1823
      %2119 = vst.msk [vmem:[%s206 + $0x88] sm:$0xff] %vm2101, %v1828
      %2120 = vst.msk [vmem:[%s206 + $0x90] sm:$0xff] %vm2101, %v1833
      %2121 = vst.msk [vmem:[%s206 + $0x98] sm:$0xff] %vm2101, %v1838
      %2122 = vst.msk [vmem:[%s206 + $0xa0] sm:$0xff] %vm2101, %v1843
      %2123 = vst.msk [vmem:[%s206 + $0xa8] sm:$0xff] %vm2101, %v1848
      %2124 = vst.msk [vmem:[%s206 + $0xb0] sm:$0xff] %vm2101, %v1853
      %2125 = vst.msk [vmem:[%s206 + $0xb8] sm:$0xff] %vm2101, %v1858
      %2126 = vst.msk [vmem:[%s206 + $0xc0] sm:$0xff] %vm2101, %v1863
      %2127 = vst.msk [vmem:[%s206 + $0xc8] sm:$0xff] %vm2101, %v1868
      %2128 = vst.msk [vmem:[%s206 + $0xd0] sm:$0xff] %vm2101, %v1873
      %2129 = vst.msk [vmem:[%s206 + $0xd8] sm:$0xff] %vm2101, %v1878
      %2130 = vst.msk [vmem:[%s206 + $0xe0] sm:$0xff] %vm2101, %v1883
      %2131 = vst.msk [vmem:[%s206 + $0xe8] sm:$0xff] %vm2101, %v1888
      %2132 = vst.msk [vmem:[%s206 + $0xf0] sm:$0xff] %vm2101, %v1893
      %2133 = vst.msk [vmem:[%s206 + $0xf8] sm:$0xff] %vm2101, %v1898
      %2134 = vst.msk [vmem:[%s206 + $0x100] sm:$0xff] %vm2101, %v1903
      %2135 = vst.msk [vmem:[%s206 + $0x108] sm:$0xff] %vm2101, %v1908
      %2136 = vst.msk [vmem:[%s206 + $0x110] sm:$0xff] %vm2101, %v1913
      %2137 = vst.msk [vmem:[%s206 + $0x118] sm:$0xff] %vm2101, %v1918
      %2138 = vst.msk [vmem:[%s206 + $0x120] sm:$0xff] %vm2101, %v1923
      %2139 = vst.msk [vmem:[%s206 + $0x128] sm:$0xff] %vm2101, %v1928
      %2140 = vst.msk [vmem:[%s206 + $0x130] sm:$0xff] %vm2101, %v1933
      %2141 = vst.msk [vmem:[%s206 + $0x138] sm:$0xff] %vm2101, %v1938
      %2142 = vst.msk [vmem:[%s206 + $0x140] sm:$0xff] %vm2101, %v1943
      %2143 = vst.msk [vmem:[%s206 + $0x148] sm:$0xff] %vm2101, %v1948
      %2144 = vst.msk [vmem:[%s206 + $0x150] sm:$0xff] %vm2101, %v1953
      %2145 = vst.msk [vmem:[%s206 + $0x158] sm:$0xff] %vm2101, %v1958
      %2146 = vst.msk [vmem:[%s206 + $0x160] sm:$0xff] %vm2101, %v1963
      %2147 = vst.msk [vmem:[%s206 + $0x168] sm:$0xff] %vm2101, %v1968
      %2148 = vst.msk [vmem:[%s206 + $0x170] sm:$0xff] %vm2101, %v1973
      %2149 = vst.msk [vmem:[%s206 + $0x178] sm:$0xff] %vm2101, %v1978
      %2150 = vst.msk [vmem:[%s206 + $0x180] sm:$0xff] %vm2101, %v1983
      %2151 = vst.msk [vmem:[%s206 + $0x188] sm:$0xff] %vm2101, %v1988
      %2152 = vst.msk [vmem:[%s206 + $0x190] sm:$0xff] %vm2101, %v1993
      %2153 = vst.msk [vmem:[%s206 + $0x198] sm:$0xff] %vm2101, %v1998
      %2154 = vst.msk [vmem:[%s206 + $0x1a0] sm:$0xff] %vm2101, %v2003
      %2155 = vst.msk [vmem:[%s206 + $0x1a8] sm:$0xff] %vm2101, %v2008
      %2156 = vst.msk [vmem:[%s206 + $0x1b0] sm:$0xff] %vm2101, %v2013
      %2157 = vst.msk [vmem:[%s206 + $0x1b8] sm:$0xff] %vm2101, %v2018
      %2158 = vst.msk [vmem:[%s206 + $0x1c0] sm:$0xff] %vm2101, %v2023
      %2159 = vst.msk [vmem:[%s206 + $0x1c8] sm:$0xff] %vm2101, %v2028
      %2160 = vst.msk [vmem:[%s206 + $0x1d0] sm:$0xff] %vm2101, %v2033
      %2161 = vst.msk [vmem:[%s206 + $0x1d8] sm:$0xff] %vm2101, %v2038
      %2162 = vst.msk [vmem:[%s206 + $0x1e0] sm:$0xff] %vm2101, %v2043
      %2163 = vst.msk [vmem:[%s206 + $0x1e8] sm:$0xff] %vm2101, %v2048
      %2164 = vst.msk [vmem:[%s206 + $0x1f0] sm:$0xff] %vm2101, %v2053
      %2165 = vst.msk [vmem:[%s206 + $0x1f8] sm:$0xff] %vm2101, %v2058
      %2166 = vst.msk [vmem:[%s206 + $0x200] sm:$0xff] %vm2101, %v2063
      %2167 = vst.msk [vmem:[%s206 + $0x208] sm:$0xff] %vm2101, %v2068
      %2168 = vst.msk [vmem:[%s206 + $0x210] sm:$0xff] %vm2101, %v2073
      %2169 = vst.msk [vmem:[%s206 + $0x218] sm:$0xff] %vm2101, %v2078
      %2170 = vst.msk [vmem:[%s206 + $0x220] sm:$0xff] %vm2101, %v2083
      %2171 = vst.msk [vmem:[%s206 + $0x228] sm:$0xff] %vm2101, %v2088
      %2172 = vst.msk [vmem:[%s206 + $0x230] sm:$0xff] %vm2101, %v2093
      %2173 = vst.msk [vmem:[%s206 + $0x238] sm:$0xff] %vm2101, %v2098
      %p2174 = scmp.lt.s32.totalorder %s18, 1
      %s2175 = scalar_select %p2174, %s18, 1
      %p2176 = scmp.lt.s32.totalorder %s19, 0
      %s2177 = scalar_select %p2176, %s19, 0
      %s2178 = smul.addr %s2177, 72
      %s2179 = smul.addr %s2175, 72
      %s2180 = sadd.s32 %s2178, %s2179
      %s2181 = smul.addr %s2180, 8
      %s2182 = scalar_lea.vmem %s3, %s2181
      // Predicated region
      $region33: #{tpu_custom_call.1} parent=31 // pred_check
        %p2183 = pneg %p116
      $region34: #{tpu_custom_call.1} parent=31 // pred_check_branch
        %2185 = sbr.rel (%p2183) target = $region36
      $region35: #{tpu_custom_call.1} parent=31 // pred_region
        _
      $region36: #{tpu_custom_call.1} parent=31 // pred_fallthru
        _
    $region32: #{tpu_custom_call.1} parent=5 // pred_fallthru
      _
    %p2186 = scmp.le.s32.totalorder 2, %s9
    // Predicated region
    $region37: #{tpu_custom_call.1} parent=5 // pred_check
      %p2187 = pneg %p2186
    $region38: #{tpu_custom_call.1} parent=5 // pred_check_branch
      %2189 = sbr.rel (%p2187) target = $region40
    $region39: #{tpu_custom_call.1} parent=5 // pred_region
      %s2190 = ssub.s32 %s9, 2
      // Predicated region
      $region41: #{tpu_custom_call.1} parent=39 // pred_check
        %p2191 = pneg %p122
      $region42: #{tpu_custom_call.1} parent=39 // pred_check_branch
        %2193 = sbr.rel (%p2191) target = $region44
      $region43: #{tpu_custom_call.1} parent=39 // pred_region
        %p2194 = scmp.lt.s32.totalorder %s20, 1
        %s2195 = scalar_select %p2194, %s20, 1
        %p2196 = scmp.lt.s32.totalorder %s21, 0
        %s2197 = scalar_select %p2196, %s21, 0
        %s2198 = smul.addr %s2197, 72
        %s2199 = smul.addr %s2195, 72
        %s2200 = sadd.s32 %s2198, %s2199
        %s2201 = smul.addr %s2200, 8
        %s2202 = scalar_lea.vmem %s3, %s2201
      $region44: #{tpu_custom_call.1} parent=39 // pred_fallthru
        _
    $region40: #{tpu_custom_call.1} parent=5 // pred_fallthru
      _
  $region6: #{tpu_custom_call.1} parent=0 // loop_footer
    %s13 = sadd.s32 1, %s9
  $region7: #{tpu_custom_call.1} parent=0 // loop_footer_branch
    %8 = sbr.rel target = $region3
  $region8: #{tpu_custom_call.1} parent=0 // loop_exit
    _

</llo_original>
